<compile_context>
chip_gen: v7x
topology: tpu7x:2x2x1
jax: 0.10.0
libtpu: 0.0.40
codegen_flags: <defaults>
</compile_context>

<pallas_src>
import math
import functools

import jax
import jax.numpy as jnp
from jax import lax
from jax.experimental import pallas as pl
from jax.experimental.pallas import tpu as pltpu


def _round_up(x, m):
    return ((x + m - 1) // m) * m


def _lcm(a, b):
    return a * b // math.gcd(a, b)


def _pick_tile(n):
    """Largest of 512/256/128 that divides n (n is always a multiple of 128 here)."""
    for c in (512, 256, 128):
        if n >= c and n % c == 0:
            return c
    return n


# ----------------------------------------------------------------------------
# Tiled linear (final vocab projection): bf16 MXU inputs, f32 accumulator
# ----------------------------------------------------------------------------

def _linear_kernel(x_ref, w_ref, b_ref, o_ref, acc_ref):
    k = pl.program_id(2)

    @pl.when(k == 0)
    def _():
        acc_ref[...] = jnp.zeros_like(acc_ref)

    acc_ref[...] += jnp.dot(x_ref[...], w_ref[...],
                            preferred_element_type=jnp.float32)

    @pl.when(k == pl.num_programs(2) - 1)
    def _():
        o_ref[...] = (acc_ref[...] + b_ref[...]).astype(o_ref.dtype)


def linear(x, w_p, b_p, n_real):
    """x: (M, K) bf16, w_p: (K, N_pad) bf16 pre-padded, b_p: (1, N_pad) f32."""
    M, K = x.shape
    N_pad = w_p.shape[1]

    tm = 256 if M >= 256 else _round_up(M, 8)
    tn = _pick_tile(N_pad)          # prefers 512/256 (v6e/v7x MXU width), falls to 128
    tk = _pick_tile(K)

    m_p = _round_up(M, tm)
    x_p = jnp.pad(x, ((0, m_p - M), (0, 0))) if m_p != M else x

    grid = (m_p // tm, N_pad // tn, K // tk)

    out = pl.pallas_call(
        _linear_kernel,
        out_shape=jax.ShapeDtypeStruct((m_p, N_pad), jnp.float32),
        grid=grid,
        in_specs=[
            pl.BlockSpec((tm, tk), lambda i, j, k: (i, k)),
            pl.BlockSpec((tk, tn), lambda i, j, k: (k, j)),
            pl.BlockSpec((1, tn), lambda i, j, k: (0, j)),
        ],
        out_specs=pl.BlockSpec((tm, tn), lambda i, j, k: (i, j)),
        scratch_shapes=[pltpu.VMEM((tm, tn), jnp.float32)],
        compiler_params=pltpu.CompilerParams(
            dimension_semantics=("parallel", "parallel", "arbitrary")),
    )(x_p, w_p, b_p)
    return out[:M, :n_real]


# ----------------------------------------------------------------------------
# Fused attention block:  LayerNorm(x + SelfAttention(x))   [+ optional emb*scale+PE]
# ----------------------------------------------------------------------------

def _attn_block_kernel(x_ref, *refs, nhead, hd_pad, d_real, eps, add_pe, embed_scale):
    if add_pe:
        (pe_ref, wqkv_ref, bqkv_ref, wo_ref, bo_ref,
         g_ref, beta_ref, o_ref, ctx_ref) = refs
    else:
        (wqkv_ref, bqkv_ref, wo_ref, bo_ref,
         g_ref, beta_ref, o_ref, ctx_ref) = refs

    x = x_ref[0].astype(jnp.float32)                       # (L, Dp)
    if add_pe:
        x = x * embed_scale + pe_ref[...]                  # fused emb-scale + pos-enc
    Dp = x.shape[-1]
    x_bf = x.astype(jnp.bfloat16)

    # One wide fused QKV projection (bias added once; softmax scale folded into Wq).
    qkv = jnp.dot(x_bf, wqkv_ref[...],
                  preferred_element_type=jnp.float32) + bqkv_ref[...]   # (L, 3*Dp) f32
    qkv_bf = qkv.astype(jnp.bfloat16)

    for h in range(nhead):                                 # small static unroll
        off = h * hd_pad
        q = qkv_bf[:, off:off + hd_pad]                    # (L, hd_pad)
        k = qkv_bf[:, Dp + off:Dp + off + hd_pad]
        v = qkv_bf[:, 2 * Dp + off:2 * Dp + off + hd_pad]
        s = lax.dot_general(q, k, (((1,), (1,)), ((), ())),
                            preferred_element_type=jnp.float32)         # (L, L)
        s = s - jnp.max(s, axis=-1, keepdims=True)
        p = jnp.exp(s)
        p = p * pl.reciprocal(jnp.sum(p, axis=-1, keepdims=True), approx=True)
        ctx_h = jnp.dot(p.astype(jnp.bfloat16), v,
                        preferred_element_type=jnp.float32)              # (L, hd_pad)
        ctx_ref[:, off:off + hd_pad] = ctx_h               # head slab at column offset

    # Single wide out-projection over the full packed head dim (K = Dp, not hd).
    attn = jnp.dot(ctx_ref[...].astype(jnp.bfloat16), wo_ref[...],
                   preferred_element_type=jnp.float32) + bo_ref[...]
    y = attn + x                                           # residual

    # LayerNorm over the REAL d_model lanes (padded lanes are exactly zero).
    inv_d = 1.0 / d_real
    mean = jnp.sum(y, axis=-1, keepdims=True) * inv_d
    m2 = jnp.sum(y * y, axis=-1, keepdims=True) * inv_d
    var = jnp.maximum(m2 - mean * mean, 0.0)
    y = (y - mean) * lax.rsqrt(var + eps)
    y = y * g_ref[...] + beta_ref[...]                     # padded gamma/beta are zero
    o_ref[0] = y.astype(o_ref.dtype)


def attention_block(x, layer, *, nhead, hd_pad, d_model, eps=1e-5,
                    pe=None, embed_scale=1.0):
    """x: (B, L, Dp) bf16 -> LayerNorm(x + SelfAttn(x)), one fused kernel per batch."""
    B, L, Dp = x.shape
    add_pe = pe is not None

    def const_spec(shape):
        nd = len(shape)
        return pl.BlockSpec(shape, lambda b, _nd=nd: (0,) * _nd)

    xspec = pl.BlockSpec((1, L, Dp), lambda b: (b, 0, 0))
    in_specs = [xspec]
    operands = [x]
    if add_pe:
        in_specs.append(const_spec((L, Dp)))
        operands.append(pe)
    # TODO(synk): mark these constant weight blocks pipeline_mode=pl.Buffered(1) once
    # single-buffering of constant-index blocks is needed for VMEM headroom (v7x).
    in_specs += [const_spec(layer["wqkv"].shape), const_spec(layer["bqkv"].shape),
                 const_spec(layer["wo"].shape), const_spec(layer["bo"].shape),
                 const_spec(layer["ln1_g"].shape), const_spec(layer["ln1_b"].shape)]
    operands += [layer["wqkv"], layer["bqkv"], layer["wo"], layer["bo"],
                 layer["ln1_g"], layer["ln1_b"]]

    return pl.pallas_call(
        functools.partial(_attn_block_kernel, nhead=nhead, hd_pad=hd_pad,
                          d_real=d_model, eps=eps, add_pe=add_pe,
                          embed_scale=embed_scale),
        out_shape=jax.ShapeDtypeStruct((B, L, Dp), x.dtype),
        grid=(B,),
        in_specs=in_specs,
        out_specs=xspec,
        scratch_shapes=[pltpu.VMEM((L, Dp), jnp.float32)],   # per-head context slab
        compiler_params=pltpu.CompilerParams(dimension_semantics=("parallel",)),
    )(*operands)


# ----------------------------------------------------------------------------
# Fused feed-forward block:  LayerNorm(x + relu(xW1+b1)W2 + b2)
# ----------------------------------------------------------------------------

def _ffn_block_kernel(x_ref, w1_ref, b1_ref, w2_ref, b2_ref, g_ref, beta_ref, o_ref,
                      *, d_real, eps):
    x_bf = x_ref[...]                                       # (tm, Dp) bf16
    x = x_bf.astype(jnp.float32)
    h = jnp.dot(x_bf, w1_ref[...], preferred_element_type=jnp.float32) + b1_ref[...]
    h = jnp.maximum(h, 0.0)                                 # d_hid intermediate in VMEM
    y = jnp.dot(h.astype(jnp.bfloat16), w2_ref[...],
                preferred_element_type=jnp.float32) + b2_ref[...]
    y = y + x                                               # residual
    inv_d = 1.0 / d_real
    mean = jnp.sum(y, axis=-1, keepdims=True) * inv_d
    m2 = jnp.sum(y * y, axis=-1, keepdims=True) * inv_d
    var = jnp.maximum(m2 - mean * mean, 0.0)
    y = (y - mean) * lax.rsqrt(var + eps)
    o_ref[...] = (y * g_ref[...] + beta_ref[...]).astype(o_ref.dtype)


def ffn_block(x2d, layer, *, d_model, eps=1e-5):
    """x2d: (N, Dp) bf16 -> fused FFN + residual + LayerNorm, gridded over row tiles."""
    N, Dp = x2d.shape
    Hp = layer["ffn1_w"].shape[1]
    tm = 256 if N >= 256 else _round_up(N, 8)
    n_p = _round_up(N, tm)
    x_p = jnp.pad(x2d, ((0, n_p - N), (0, 0))) if n_p != N else x2d

    out = pl.pallas_call(
        functools.partial(_ffn_block_kernel, d_real=d_model, eps=eps),
        out_shape=jax.ShapeDtypeStruct((n_p, Dp), x2d.dtype),
        grid=(n_p // tm,),
        in_specs=[
            pl.BlockSpec((tm, Dp), lambda i: (i, 0)),
            pl.BlockSpec((Dp, Hp), lambda i: (0, 0)),
            pl.BlockSpec((1, Hp), lambda i: (0, 0)),
            pl.BlockSpec((Hp, Dp), lambda i: (0, 0)),
            pl.BlockSpec((1, Dp), lambda i: (0, 0)),
            pl.BlockSpec((1, Dp), lambda i: (0, 0)),
            pl.BlockSpec((1, Dp), lambda i: (0, 0)),
        ],
        out_specs=pl.BlockSpec((tm, Dp), lambda i: (i, 0)),
        compiler_params=pltpu.CompilerParams(dimension_semantics=("parallel",)),
    )(x_p, layer["ffn1_w"], layer["ffn1_b"], layer["ffn2_w"], layer["ffn2_b"],
      layer["ln2_g"], layer["ln2_b"])
    return out[:N]


# ----------------------------------------------------------------------------
# Parameters: PyTorch-style init, then one-time padding / bf16 prep
# ----------------------------------------------------------------------------

def make_positional_encoding(d_model, max_len=5000):
    position = jnp.arange(max_len, dtype=jnp.float32)[:, None]
    div_term = jnp.exp(jnp.arange(0, d_model, 2, dtype=jnp.float32)
                       * (-math.log(10000.0) / d_model))
    pe = jnp.zeros((max_len, d_model), dtype=jnp.float32)
    pe = pe.at[:, 0::2].set(jnp.sin(position * div_term))
    pe = pe.at[:, 1::2].set(jnp.cos(position * div_term))
    return pe


def init_params(key, ntoken, d_model, nhead, d_hid, nlayers):
    initrange = 0.1
    keys = jax.random.split(key, 2 + 4 * nlayers)
    ki = iter(keys)
    params = {
        "embedding": jax.random.uniform(next(ki), (ntoken, d_model),
                                        minval=-initrange, maxval=initrange,
                                        dtype=jnp.float32),
        "out_w": jax.random.uniform(next(ki), (d_model, ntoken),
                                    minval=-initrange, maxval=initrange,
                                    dtype=jnp.float32),
        "out_b": jnp.zeros((ntoken,), jnp.float32),
        "layers": [],
    }
    xavier = lambda k, shape: (jax.random.uniform(k, shape, minval=-1.0, maxval=1.0,
                                                  dtype=jnp.float32)
                               * math.sqrt(6.0 / (shape[0] + shape[1])))
    for _ in range(nlayers):
        params["layers"].append({
            # stored already transposed as (d_in, d_out) for x @ W
            "in_proj_w": xavier(next(ki), (d_model, 3 * d_model)),
            "in_proj_b": jnp.zeros((3 * d_model,), jnp.float32),
            "out_proj_w": xavier(next(ki), (d_model, d_model)),
            "out_proj_b": jnp.zeros((d_model,), jnp.float32),
            "ffn1_w": xavier(next(ki), (d_model, d_hid)),
            "ffn1_b": jnp.zeros((d_hid,), jnp.float32),
            "ffn2_w": xavier(next(ki), (d_hid, d_model)),
            "ffn2_b": jnp.zeros((d_model,), jnp.float32),
            "norm1_w": jnp.ones((d_model,), jnp.float32),
            "norm1_b": jnp.zeros((d_model,), jnp.float32),
            "norm2_w": jnp.ones((d_model,), jnp.float32),
            "norm2_b": jnp.zeros((d_model,), jnp.float32),
        })
    return params


def _slot_head_cols(w, b, hd, hd_pad, nhead, D_pad, d_model, scale):
    """(d_model, nhead*hd) cols -> (D_pad, nhead*hd_pad) with each head in its slot."""
    w_p = jnp.zeros((D_pad, nhead * hd_pad), jnp.float32)
    b_p = jnp.zeros((nhead * hd_pad,), jnp.float32)
    for h in range(nhead):
        w_p = w_p.at[:d_model, h * hd_pad:h * hd_pad + hd].set(
            w[:, h * hd:(h + 1) * hd] * scale)
        b_p = b_p.at[h * hd_pad:h * hd_pad + hd].set(b[h * hd:(h + 1) * hd] * scale)
    return w_p, b_p


def _slot_head_rows(w, hd, hd_pad, nhead, D_pad, d_model):
    """(nhead*hd, d_model) rows -> (D_pad, D_pad) with each head's rows in its slot."""
    w_p = jnp.zeros((D_pad, D_pad), jnp.float32)
    for h in range(nhead):
        w_p = w_p.at[h * hd_pad:h * hd_pad + hd, :d_model].set(w[h * hd:(h + 1) * hd, :])
    return w_p


def prepare_params(params, nhead, max_len=64):
    """One-time: pad feature dims to 128-lane multiples, fuse QKV, fold softmax scale,
    cast matmul weights to bf16.  Keeps all per-forward padding out of the hot path."""
    emb = params["embedding"]
    ntoken, d_model = emb.shape
    hd = d_model // nhead
    D_pad = _round_up(d_model, _lcm(128, nhead))
    hd_pad = D_pad // nhead
    N_pad = _round_up(ntoken, 128)
    wdt = jnp.bfloat16

    def pad2(a, rows, cols):
        return jnp.pad(a, ((0, rows - a.shape[0]), (0, cols - a.shape[1])))

    def pad1_row(a, cols):
        return jnp.pad(a, (0, cols - a.shape[0])).reshape(1, cols).astype(jnp.float32)

    prepared = {
        "embedding": pad2(emb, ntoken, D_pad).astype(wdt),
        "pe": pad2(make_positional_encoding(d_model, max_len), max_len, D_pad),  # f32
        "out_w": pad2(params["out_w"], D_pad, N_pad).astype(wdt),
        "out_b": pad1_row(params["out_b"], N_pad),
        "layers": [],
    }

    q_scale = 1.0 / math.sqrt(hd)
    for layer in params["layers"]:
        wi, bi = layer["in_proj_w"], layer["in_proj_b"]
        wq, bq = _slot_head_cols(wi[:, :d_model], bi[:d_model],
                                 hd, hd_pad, nhead, D_pad, d_model, q_scale)
        wk, bk = _slot_head_cols(wi[:, d_model:2 * d_model], bi[d_model:2 * d_model],
                                 hd, hd_pad, nhead, D_pad, d_model, 1.0)
        wv, bv = _slot_head_cols(wi[:, 2 * d_model:], bi[2 * d_model:],
                                 hd, hd_pad, nhead, D_pad, d_model, 1.0)
        d_hid = layer["ffn1_w"].shape[1]
        H_pad = _round_up(d_hid, 128)
        prepared["layers"].append({
            "wqkv": jnp.concatenate([wq, wk, wv], axis=1).astype(wdt),     # (Dp, 3Dp)
            "bqkv": jnp.concatenate([bq, bk, bv]).reshape(1, 3 * D_pad),   # f32
            "wo": _slot_head_rows(layer["out_proj_w"], hd, hd_pad, nhead,
                                  D_pad, d_model).astype(wdt),             # (Dp, Dp)
            "bo": pad1_row(layer["out_proj_b"], D_pad),
            "ln1_g": pad1_row(layer["norm1_w"], D_pad),
            "ln1_b": pad1_row(layer["norm1_b"], D_pad),
            "ffn1_w": pad2(layer["ffn1_w"], D_pad, H_pad).astype(wdt),
            "ffn1_b": pad1_row(layer["ffn1_b"], H_pad),
            "ffn2_w": pad2(layer["ffn2_w"], H_pad, D_pad).astype(wdt),
            "ffn2_b": pad1_row(layer["ffn2_b"], D_pad),
            "ln2_g": pad1_row(layer["norm2_w"], D_pad),
            "ln2_b": pad1_row(layer["norm2_b"], D_pad),
        })
    cfg = dict(nhead=nhead, d_model=d_model, ntoken=ntoken, D_pad=D_pad, hd_pad=hd_pad)
    return prepared, cfg


# ----------------------------------------------------------------------------
# Forward
# ----------------------------------------------------------------------------

def transformer_forward(prepared, src, *, nhead, d_model, ntoken, D_pad, hd_pad):
    """src: (L, B) int32 tokens -> logits (L, B, ntoken)."""
    L, B = src.shape
    # batch-first internal layout; single glue gather produces (B, L, D_pad) bf16
    x = prepared["embedding"][src.T]
    pe = prepared["pe"][:L]
    # TODO(synk): dropout (p=0.5) is treated as identity (inference mode).
    for i, layer in enumerate(prepared["layers"]):
        x = attention_block(x, layer, nhead=nhead, hd_pad=hd_pad, d_model=d_model,
                            pe=pe if i == 0 else None,
                            embed_scale=math.sqrt(d_model) if i == 0 else 1.0)
        x = ffn_block(x.reshape(B * L, D_pad), layer,
                      d_model=d_model).reshape(B, L, D_pad)
    # back to seq-first (L, B, D) before the vocab projection (single glue transpose)
    x = x.transpose(1, 0, 2).reshape(L * B, D_pad)
    logits = linear(x, prepared["out_w"], prepared["out_b"], n_real=ntoken)
    return logits.reshape(L, B, ntoken)


# ----------------------------------------------------------------------------
# Main
# ----------------------------------------------------------------------------

if __name__ == "__main__":
    ntoken, d_model, nhead, d_hid, nlayers = 40, 32, 4, 64, 2
    seq_len, batch = 8, 2

    key = jax.random.PRNGKey(0)
    pkey, dkey = jax.random.split(key)

    params = init_params(pkey, ntoken, d_model, nhead, d_hid, nlayers)
    prepared, cfg = prepare_params(params, nhead, max_len=64)

    src = jax.random.randint(dkey, (seq_len, batch), 0, ntoken, dtype=jnp.int32)

    fwd = jax.jit(functools.partial(transformer_forward, **cfg))
    out = fwd(prepared, src)
    out = jax.block_until_ready(out)
    assert out.shape == (seq_len, batch, ntoken), out.shape
    assert bool(jnp.all(jnp.isfinite(out)))
    print("KERNEL_OK")
</pallas_src>

<mosaic_0001>
module attributes {stable_mosaic.version = 11 : i64} {
  func.func @_ffn_block_kernel(%arg0: i32, %arg1: memref<16x128xbf16, #tpu.memory_space<vmem>>, %arg2: memref<128x128xbf16, #tpu.memory_space<vmem>>, %arg3: memref<1x128xf32, #tpu.memory_space<vmem>>, %arg4: memref<128x128xbf16, #tpu.memory_space<vmem>>, %arg5: memref<1x128xf32, #tpu.memory_space<vmem>>, %arg6: memref<1x128xf32, #tpu.memory_space<vmem>>, %arg7: memref<1x128xf32, #tpu.memory_space<vmem>>, %arg8: memref<16x128xbf16, #tpu.memory_space<vmem>>) attributes {dimension_semantics = [#tpu.dimension_semantics<parallel>], iteration_bounds = array<i64: 1>, scalar_prefetch = 0 : i64, scratch_operands = 0 : i64, tpu.core_type = #tpu.core_type<tc>, window_params = [{transform_indices = @transform_0, window_bounds = array<i64: 16, 128>}, {pipeline_mode = #tpu.pipeline_mode<synchronous>, transform_indices = @transform_1, window_bounds = array<i64: 128, 128>}, {pipeline_mode = #tpu.pipeline_mode<synchronous>, transform_indices = @transform_2, window_bounds = array<i64: 1, 128>}, {pipeline_mode = #tpu.pipeline_mode<synchronous>, transform_indices = @transform_3, window_bounds = array<i64: 128, 128>}, {pipeline_mode = #tpu.pipeline_mode<synchronous>, transform_indices = @transform_4, window_bounds = array<i64: 1, 128>}, {pipeline_mode = #tpu.pipeline_mode<synchronous>, transform_indices = @transform_5, window_bounds = array<i64: 1, 128>}, {pipeline_mode = #tpu.pipeline_mode<synchronous>, transform_indices = @transform_6, window_bounds = array<i64: 1, 128>}, {transform_indices = @transform_7, window_bounds = array<i64: 16, 128>}]} {
    %c0 = arith.constant 0 : index
    %c0_0 = arith.constant 0 : index
    %0 = vector.load %arg1[%c0, %c0_0] : memref<16x128xbf16, #tpu.memory_space<vmem>>, vector<16x128xbf16>
    %1 = arith.extf %0 : vector<16x128xbf16> to vector<16x128xf32>
    %c0_1 = arith.constant 0 : index
    %c0_2 = arith.constant 0 : index
    %2 = vector.load %arg2[%c0_1, %c0_2] : memref<128x128xbf16, #tpu.memory_space<vmem>>, vector<128x128xbf16>
    %cst = arith.constant dense<0.000000e+00> : vector<16x128xf32>
    %3 = tpu.matmul %0, %2, %cst {dimension_numbers = #tpu.dot_dimension_numbers<[1], [0], [0], [1], [0, 0, 1, 1], [], []>} : vector<16x128xbf16>, vector<128x128xbf16>, vector<16x128xf32> -> vector<16x128xf32>
    %c0_3 = arith.constant 0 : index
    %c0_4 = arith.constant 0 : index
    %4 = vector.load %arg3[%c0_3, %c0_4] : memref<1x128xf32, #tpu.memory_space<vmem>>, vector<1x128xf32>
    %5 = vector.broadcast %4 : vector<1x128xf32> to vector<16x128xf32>
    %6 = arith.addf %3, %5 : vector<16x128xf32>
    %cst_5 = arith.constant 0.000000e+00 : f32
    %7 = vector.broadcast %cst_5 : f32 to vector<16x128xf32>
    %8 = arith.maximumf %6, %7 : vector<16x128xf32>
    %9 = arith.truncf %8 : vector<16x128xf32> to vector<16x128xbf16>
    %c0_6 = arith.constant 0 : index
    %c0_7 = arith.constant 0 : index
    %10 = vector.load %arg4[%c0_6, %c0_7] : memref<128x128xbf16, #tpu.memory_space<vmem>>, vector<128x128xbf16>
    %cst_8 = arith.constant dense<0.000000e+00> : vector<16x128xf32>
    %11 = tpu.matmul %9, %10, %cst_8 {dimension_numbers = #tpu.dot_dimension_numbers<[1], [0], [0], [1], [0, 0, 1, 1], [], []>} : vector<16x128xbf16>, vector<128x128xbf16>, vector<16x128xf32> -> vector<16x128xf32>
    %c0_9 = arith.constant 0 : index
    %c0_10 = arith.constant 0 : index
    %12 = vector.load %arg5[%c0_9, %c0_10] : memref<1x128xf32, #tpu.memory_space<vmem>>, vector<1x128xf32>
    %13 = vector.broadcast %12 : vector<1x128xf32> to vector<16x128xf32>
    %14 = arith.addf %11, %13 : vector<16x128xf32>
    %15 = arith.addf %14, %1 : vector<16x128xf32>
    %cst_11 = arith.constant dense<0.000000e+00> : vector<16xf32>
    %16 = vector.multi_reduction <add>, %15, %cst_11 [1] : vector<16x128xf32> to vector<16xf32>
    %17 = vector.shape_cast %16 : vector<16xf32> to vector<16x1xf32>
    %cst_12 = arith.constant 3.125000e-02 : f32
    %18 = vector.broadcast %cst_12 : f32 to vector<16x1xf32>
    %19 = arith.mulf %17, %18 : vector<16x1xf32>
    %20 = arith.mulf %15, %15 : vector<16x128xf32>
    %cst_13 = arith.constant dense<0.000000e+00> : vector<16xf32>
    %21 = vector.multi_reduction <add>, %20, %cst_13 [1] : vector<16x128xf32> to vector<16xf32>
    %22 = vector.shape_cast %21 : vector<16xf32> to vector<16x1xf32>
    %cst_14 = arith.constant 3.125000e-02 : f32
    %23 = vector.broadcast %cst_14 : f32 to vector<16x1xf32>
    %24 = arith.mulf %22, %23 : vector<16x1xf32>
    %25 = arith.mulf %19, %19 : vector<16x1xf32>
    %26 = arith.subf %24, %25 : vector<16x1xf32>
    %cst_15 = arith.constant 0.000000e+00 : f32
    %27 = vector.broadcast %cst_15 : f32 to vector<16x1xf32>
    %28 = arith.maximumf %26, %27 : vector<16x1xf32>
    %29 = vector.broadcast %19 : vector<16x1xf32> to vector<16x128xf32>
    %30 = arith.subf %15, %29 : vector<16x128xf32>
    %cst_16 = arith.constant 9.99999974E-6 : f32
    %31 = vector.broadcast %cst_16 : f32 to vector<16x1xf32>
    %32 = arith.addf %28, %31 : vector<16x1xf32>
    %33 = math.rsqrt %32 : vector<16x1xf32>
    %34 = vector.broadcast %33 : vector<16x1xf32> to vector<16x128xf32>
    %35 = arith.mulf %30, %34 : vector<16x128xf32>
    %c0_17 = arith.constant 0 : index
    %c0_18 = arith.constant 0 : index
    %36 = vector.load %arg6[%c0_17, %c0_18] : memref<1x128xf32, #tpu.memory_space<vmem>>, vector<1x128xf32>
    %37 = vector.broadcast %36 : vector<1x128xf32> to vector<16x128xf32>
    %38 = arith.mulf %35, %37 : vector<16x128xf32>
    %c0_19 = arith.constant 0 : index
    %c0_20 = arith.constant 0 : index
    %39 = vector.load %arg7[%c0_19, %c0_20] : memref<1x128xf32, #tpu.memory_space<vmem>>, vector<1x128xf32>
    %40 = vector.broadcast %39 : vector<1x128xf32> to vector<16x128xf32>
    %41 = arith.addf %38, %40 : vector<16x128xf32>
    %42 = arith.truncf %41 : vector<16x128xf32> to vector<16x128xbf16>
    %c0_21 = arith.constant 0 : index
    %c0_22 = arith.constant 0 : index
    %43 = vector.load %arg8[%c0_21, %c0_22] : memref<16x128xbf16, #tpu.memory_space<vmem>>, vector<16x128xbf16>
    tpu.vector_store %arg8[%c0_21, %c0_22], %42 {strides = array<i32>} : memref<16x128xbf16, #tpu.memory_space<vmem>>, vector<16x128xbf16>,
    return
  }
  func.func @transform_0(%arg0: i32) -> (i32, i32) {
    %c0_i32 = arith.constant 0 : i32
    %c0_i32_0 = arith.constant 0 : i32
    return %arg0, %c0_i32 : i32, i32
  }
  func.func @transform_1(%arg0: i32) -> (i32, i32) {
    %c0_i32 = arith.constant 0 : i32
    %c0_i32_0 = arith.constant 0 : i32
    %c0_i32_1 = arith.constant 0 : i32
    return %c0_i32, %c0_i32_0 : i32, i32
  }
  func.func @transform_2(%arg0: i32) -> (i32, i32) {
    %c0_i32 = arith.constant 0 : i32
    %c0_i32_0 = arith.constant 0 : i32
    %c0_i32_1 = arith.constant 0 : i32
    return %c0_i32, %c0_i32_0 : i32, i32
  }
  func.func @transform_3(%arg0: i32) -> (i32, i32) {
    %c0_i32 = arith.constant 0 : i32
    %c0_i32_0 = arith.constant 0 : i32
    %c0_i32_1 = arith.constant 0 : i32
    return %c0_i32, %c0_i32_0 : i32, i32
  }
  func.func @transform_4(%arg0: i32) -> (i32, i32) {
    %c0_i32 = arith.constant 0 : i32
    %c0_i32_0 = arith.constant 0 : i32
    %c0_i32_1 = arith.constant 0 : i32
    return %c0_i32, %c0_i32_0 : i32, i32
  }
  func.func @transform_5(%arg0: i32) -> (i32, i32) {
    %c0_i32 = arith.constant 0 : i32
    %c0_i32_0 = arith.constant 0 : i32
    %c0_i32_1 = arith.constant 0 : i32
    return %c0_i32, %c0_i32_0 : i32, i32
  }
  func.func @transform_6(%arg0: i32) -> (i32, i32) {
    %c0_i32 = arith.constant 0 : i32
    %c0_i32_0 = arith.constant 0 : i32
    %c0_i32_1 = arith.constant 0 : i32
    return %c0_i32, %c0_i32_0 : i32, i32
  }
  func.func @transform_7(%arg0: i32) -> (i32, i32) {
    %c0_i32 = arith.constant 0 : i32
    %c0_i32_0 = arith.constant 0 : i32
    return %arg0, %c0_i32 : i32, i32
  }
}

module attributes {stable_mosaic.version = 11 : i64} {
  func.func @_linear_kernel(%arg0: i32, %arg1: i32, %arg2: i32, %arg3: memref<16x128xbf16, #tpu.memory_space<vmem>>, %arg4: memref<128x128xbf16, #tpu.memory_space<vmem>>, %arg5: memref<1x128xf32, #tpu.memory_space<vmem>>, %arg6: memref<16x128xf32, #tpu.memory_space<vmem>>, %arg7: memref<16x128xf32, #tpu.memory_space<vmem>>) attributes {dimension_semantics = [#tpu.dimension_semantics<parallel>, #tpu.dimension_semantics<parallel>, #tpu.dimension_semantics<arbitrary>], iteration_bounds = array<i64: 1, 1, 1>, scalar_prefetch = 0 : i64, scratch_operands = 1 : i64, tpu.core_type = #tpu.core_type<tc>, window_params = [{transform_indices = @transform_0, window_bounds = array<i64: 16, 128>}, {transform_indices = @transform_1, window_bounds = array<i64: 128, 128>}, {transform_indices = @transform_2, window_bounds = array<i64: 1, 128>}, {transform_indices = @transform_3, window_bounds = array<i64: 16, 128>}]} {
    %c0_i32 = arith.constant 0 : i32
    %0 = arith.cmpi eq, %arg2, %c0_i32 : i32
    %1 = arith.extui %0 : i1 to i32
    %c0_i32_0 = arith.constant 0 : i32
    %2 = arith.cmpi ne, %1, %c0_i32_0 : i32
    scf.if %2 {
      %cst_10 = arith.constant 0.000000e+00 : f32
      %12 = vector.broadcast %cst_10 : f32 to vector<16x128xf32>
      %c0_11 = arith.constant 0 : index
      %c0_12 = arith.constant 0 : index
      %13 = vector.load %arg7[%c0_11, %c0_12] : memref<16x128xf32, #tpu.memory_space<vmem>>, vector<16x128xf32>
      tpu.vector_store %arg7[%c0_11, %c0_12], %12 {strides = array<i32>} : memref<16x128xf32, #tpu.memory_space<vmem>>, vector<16x128xf32>,
    } else {
    }
    %c0 = arith.constant 0 : index
    %c0_1 = arith.constant 0 : index
    %3 = vector.load %arg7[%c0, %c0_1] : memref<16x128xf32, #tpu.memory_space<vmem>>, vector<16x128xf32>
    %c0_2 = arith.constant 0 : index
    %c0_3 = arith.constant 0 : index
    %4 = vector.load %arg3[%c0_2, %c0_3] : memref<16x128xbf16, #tpu.memory_space<vmem>>, vector<16x128xbf16>
    %c0_4 = arith.constant 0 : index
    %c0_5 = arith.constant 0 : index
    %5 = vector.load %arg4[%c0_4, %c0_5] : memref<128x128xbf16, #tpu.memory_space<vmem>>, vector<128x128xbf16>
    %cst = arith.constant dense<0.000000e+00> : vector<16x128xf32>
    %6 = tpu.matmul %4, %5, %cst {dimension_numbers = #tpu.dot_dimension_numbers<[1], [0], [0], [1], [0, 0, 1, 1], [], []>} : vector<16x128xbf16>, vector<128x128xbf16>, vector<16x128xf32> -> vector<16x128xf32>
    %7 = arith.addf %3, %6 : vector<16x128xf32>
    %c0_6 = arith.constant 0 : index
    %c0_7 = arith.constant 0 : index
    %8 = vector.load %arg7[%c0_6, %c0_7] : memref<16x128xf32, #tpu.memory_space<vmem>>, vector<16x128xf32>
    tpu.vector_store %arg7[%c0_6, %c0_7], %7 {strides = array<i32>} : memref<16x128xf32, #tpu.memory_space<vmem>>, vector<16x128xf32>,
    %c0_i32_8 = arith.constant 0 : i32
    %9 = arith.cmpi eq, %arg2, %c0_i32_8 : i32
    %10 = arith.extui %9 : i1 to i32
    %c0_i32_9 = arith.constant 0 : i32
    %11 = arith.cmpi ne, %10, %c0_i32_9 : i32
    scf.if %11 {
      %c0_10 = arith.constant 0 : index
      %c0_11 = arith.constant 0 : index
      %12 = vector.load %arg7[%c0_10, %c0_11] : memref<16x128xf32, #tpu.memory_space<vmem>>, vector<16x128xf32>
      %c0_12 = arith.constant 0 : index
      %c0_13 = arith.constant 0 : index
      %13 = vector.load %arg5[%c0_12, %c0_13] : memref<1x128xf32, #tpu.memory_space<vmem>>, vector<1x128xf32>
      %14 = vector.broadcast %13 : vector<1x128xf32> to vector<16x128xf32>
      %15 = arith.addf %12, %14 : vector<16x128xf32>
      %c0_14 = arith.constant 0 : index
      %c0_15 = arith.constant 0 : index
      %16 = vector.load %arg6[%c0_14, %c0_15] : memref<16x128xf32, #tpu.memory_space<vmem>>, vector<16x128xf32>
      tpu.vector_store %arg6[%c0_14, %c0_15], %15 {strides = array<i32>} : memref<16x128xf32, #tpu.memory_space<vmem>>, vector<16x128xf32>,
    } else {
    }
    return
  }
  func.func @transform_0(%arg0: i32, %arg1: i32, %arg2: i32) -> (i32, i32) {
    %c0_i32 = arith.constant 0 : i32
    return %arg0, %arg2 : i32, i32
  }
  func.func @transform_1(%arg0: i32, %arg1: i32, %arg2: i32) -> (i32, i32) {
    %c0_i32 = arith.constant 0 : i32
    return %arg2, %arg1 : i32, i32
  }
  func.func @transform_2(%arg0: i32, %arg1: i32, %arg2: i32) -> (i32, i32) {
    %c0_i32 = arith.constant 0 : i32
    %c0_i32_0 = arith.constant 0 : i32
    return %c0_i32, %arg1 : i32, i32
  }
  func.func @transform_3(%arg0: i32, %arg1: i32, %arg2: i32) -> (i32, i32) {
    %c0_i32 = arith.constant 0 : i32
    return %arg0, %arg1 : i32, i32
  }
}

module attributes {stable_mosaic.version = 11 : i64} {
  func.func @_attn_block_kernel(%arg0: i32, %arg1: memref<1x8x128xbf16, #tpu.memory_space<vmem>>, %arg2: memref<128x384xbf16, #tpu.memory_space<vmem>>, %arg3: memref<1x384xf32, #tpu.memory_space<vmem>>, %arg4: memref<128x128xbf16, #tpu.memory_space<vmem>>, %arg5: memref<1x128xf32, #tpu.memory_space<vmem>>, %arg6: memref<1x128xf32, #tpu.memory_space<vmem>>, %arg7: memref<1x128xf32, #tpu.memory_space<vmem>>, %arg8: memref<1x8x128xbf16, #tpu.memory_space<vmem>>, %arg9: memref<8x128xf32, #tpu.memory_space<vmem>>) attributes {dimension_semantics = [#tpu.dimension_semantics<parallel>], iteration_bounds = array<i64: 2>, scalar_prefetch = 0 : i64, scratch_operands = 1 : i64, tpu.core_type = #tpu.core_type<tc>, window_params = [{transform_indices = @transform_0, window_bounds = array<i64: 1, 8, 128>}, {pipeline_mode = #tpu.pipeline_mode<synchronous>, transform_indices = @transform_1, window_bounds = array<i64: 128, 384>}, {pipeline_mode = #tpu.pipeline_mode<synchronous>, transform_indices = @transform_2, window_bounds = array<i64: 1, 384>}, {pipeline_mode = #tpu.pipeline_mode<synchronous>, transform_indices = @transform_3, window_bounds = array<i64: 128, 128>}, {pipeline_mode = #tpu.pipeline_mode<synchronous>, transform_indices = @transform_4, window_bounds = array<i64: 1, 128>}, {pipeline_mode = #tpu.pipeline_mode<synchronous>, transform_indices = @transform_5, window_bounds = array<i64: 1, 128>}, {pipeline_mode = #tpu.pipeline_mode<synchronous>, transform_indices = @transform_6, window_bounds = array<i64: 1, 128>}, {transform_indices = @transform_7, window_bounds = array<i64: 1, 8, 128>}]} {
    %c0 = arith.constant 0 : index
    %c0_0 = arith.constant 0 : index
    %c0_1 = arith.constant 0 : index
    %0 = vector.load %arg1[%c0, %c0_0, %c0_1] : memref<1x8x128xbf16, #tpu.memory_space<vmem>>, vector<1x8x128xbf16>
    %1 = vector.shape_cast %0 : vector<1x8x128xbf16> to vector<8x128xbf16>
    %2 = arith.extf %1 : vector<8x128xbf16> to vector<8x128xf32>
    %3 = arith.truncf %2 : vector<8x128xf32> to vector<8x128xbf16>
    %c0_2 = arith.constant 0 : index
    %c0_3 = arith.constant 0 : index
    %4 = vector.load %arg2[%c0_2, %c0_3] : memref<128x384xbf16, #tpu.memory_space<vmem>>, vector<128x384xbf16>
    %cst = arith.constant dense<0.000000e+00> : vector<8x384xf32>
    %5 = tpu.matmul %3, %4, %cst {dimension_numbers = #tpu.dot_dimension_numbers<[1], [0], [0], [1], [0, 0, 1, 1], [], []>} : vector<8x128xbf16>, vector<128x384xbf16>, vector<8x384xf32> -> vector<8x384xf32>
    %c0_4 = arith.constant 0 : index
    %c0_5 = arith.constant 0 : index
    %6 = vector.load %arg3[%c0_4, %c0_5] : memref<1x384xf32, #tpu.memory_space<vmem>>, vector<1x384xf32>
    %7 = vector.broadcast %6 : vector<1x384xf32> to vector<8x384xf32>
    %8 = arith.addf %5, %7 : vector<8x384xf32>
    %9 = arith.truncf %8 : vector<8x384xf32> to vector<8x384xbf16>
    %10 = vector.extract_strided_slice %9 {offsets = [0, 0], sizes = [8, 32], strides = [1, 1]} : vector<8x384xbf16> to vector<8x32xbf16>
    %11 = vector.extract_strided_slice %9 {offsets = [0, 128], sizes = [8, 32], strides = [1, 1]} : vector<8x384xbf16> to vector<8x32xbf16>
    %12 = vector.extract_strided_slice %9 {offsets = [0, 256], sizes = [8, 32], strides = [1, 1]} : vector<8x384xbf16> to vector<8x32xbf16>
    %cst_6 = arith.constant dense<0.000000e+00> : vector<8x8xf32>
    %13 = tpu.matmul %10, %11, %cst_6 {dimension_numbers = #tpu.dot_dimension_numbers<[1], [1], [0], [0], [0, 0, 1, 0], [], []>} : vector<8x32xbf16>, vector<8x32xbf16>, vector<8x8xf32> -> vector<8x8xf32>
    %cst_7 = arith.constant dense<0xFF800000> : vector<8xf32>
    %14 = vector.multi_reduction <maximumf>, %13, %cst_7 [1] : vector<8x8xf32> to vector<8xf32>
    %15 = vector.shape_cast %14 : vector<8xf32> to vector<8x1xf32>
    %16 = vector.broadcast %15 : vector<8x1xf32> to vector<8x8xf32>
    %17 = arith.subf %13, %16 : vector<8x8xf32>
    %18 = math.exp %17 : vector<8x8xf32>
    %cst_8 = arith.constant dense<0.000000e+00> : vector<8xf32>
    %19 = vector.multi_reduction <add>, %18, %cst_8 [1] : vector<8x8xf32> to vector<8xf32>
    %20 = vector.shape_cast %19 : vector<8xf32> to vector<8x1xf32>
    %21 = tpu.reciprocal %20 {approx = true} : vector<8x1xf32> -> vector<8x1xf32>
    %22 = vector.broadcast %21 : vector<8x1xf32> to vector<8x8xf32>
    %23 = arith.mulf %18, %22 : vector<8x8xf32>
    %24 = arith.truncf %23 : vector<8x8xf32> to vector<8x8xbf16>
    %cst_9 = arith.constant dense<0.000000e+00> : vector<8x32xf32>
    %25 = tpu.matmul %24, %12, %cst_9 {dimension_numbers = #tpu.dot_dimension_numbers<[1], [0], [0], [1], [0, 0, 1, 1], [], []>} : vector<8x8xbf16>, vector<8x32xbf16>, vector<8x32xf32> -> vector<8x32xf32>
    %c0_10 = arith.constant 0 : index
    %c0_11 = arith.constant 0 : index
    %26 = vector.load %arg9[%c0_10, %c0_11] : memref<8x128xf32, #tpu.memory_space<vmem>>, vector<8x32xf32>
    tpu.vector_store %arg9[%c0_10, %c0_11], %25 {strides = array<i32>} : memref<8x128xf32, #tpu.memory_space<vmem>>, vector<8x32xf32>,
    %27 = vector.extract_strided_slice %9 {offsets = [0, 32], sizes = [8, 32], strides = [1, 1]} : vector<8x384xbf16> to vector<8x32xbf16>
    %28 = vector.extract_strided_slice %9 {offsets = [0, 160], sizes = [8, 32], strides = [1, 1]} : vector<8x384xbf16> to vector<8x32xbf16>
    %29 = vector.extract_strided_slice %9 {offsets = [0, 288], sizes = [8, 32], strides = [1, 1]} : vector<8x384xbf16> to vector<8x32xbf16>
    %cst_12 = arith.constant dense<0.000000e+00> : vector<8x8xf32>
    %30 = tpu.matmul %27, %28, %cst_12 {dimension_numbers = #tpu.dot_dimension_numbers<[1], [1], [0], [0], [0, 0, 1, 0], [], []>} : vector<8x32xbf16>, vector<8x32xbf16>, vector<8x8xf32> -> vector<8x8xf32>
    %cst_13 = arith.constant dense<0xFF800000> : vector<8xf32>
    %31 = vector.multi_reduction <maximumf>, %30, %cst_13 [1] : vector<8x8xf32> to vector<8xf32>
    %32 = vector.shape_cast %31 : vector<8xf32> to vector<8x1xf32>
    %33 = vector.broadcast %32 : vector<8x1xf32> to vector<8x8xf32>
    %34 = arith.subf %30, %33 : vector<8x8xf32>
    %35 = math.exp %34 : vector<8x8xf32>
    %cst_14 = arith.constant dense<0.000000e+00> : vector<8xf32>
    %36 = vector.multi_reduction <add>, %35, %cst_14 [1] : vector<8x8xf32> to vector<8xf32>
    %37 = vector.shape_cast %36 : vector<8xf32> to vector<8x1xf32>
    %38 = tpu.reciprocal %37 {approx = true} : vector<8x1xf32> -> vector<8x1xf32>
    %39 = vector.broadcast %38 : vector<8x1xf32> to vector<8x8xf32>
    %40 = arith.mulf %35, %39 : vector<8x8xf32>
    %41 = arith.truncf %40 : vector<8x8xf32> to vector<8x8xbf16>
    %cst_15 = arith.constant dense<0.000000e+00> : vector<8x32xf32>
    %42 = tpu.matmul %41, %29, %cst_15 {dimension_numbers = #tpu.dot_dimension_numbers<[1], [0], [0], [1], [0, 0, 1, 1], [], []>} : vector<8x8xbf16>, vector<8x32xbf16>, vector<8x32xf32> -> vector<8x32xf32>
    %c0_16 = arith.constant 0 : index
    %c32 = arith.constant 32 : index
    %43 = vector.load %arg9[%c0_16, %c32] : memref<8x128xf32, #tpu.memory_space<vmem>>, vector<8x32xf32>
    tpu.vector_store %arg9[%c0_16, %c32], %42 {strides = array<i32>} : memref<8x128xf32, #tpu.memory_space<vmem>>, vector<8x32xf32>,
    %44 = vector.extract_strided_slice %9 {offsets = [0, 64], sizes = [8, 32], strides = [1, 1]} : vector<8x384xbf16> to vector<8x32xbf16>
    %45 = vector.extract_strided_slice %9 {offsets = [0, 192], sizes = [8, 32], strides = [1, 1]} : vector<8x384xbf16> to vector<8x32xbf16>
    %46 = vector.extract_strided_slice %9 {offsets = [0, 320], sizes = [8, 32], strides = [1, 1]} : vector<8x384xbf16> to vector<8x32xbf16>
    %cst_17 = arith.constant dense<0.000000e+00> : vector<8x8xf32>
    %47 = tpu.matmul %44, %45, %cst_17 {dimension_numbers = #tpu.dot_dimension_numbers<[1], [1], [0], [0], [0, 0, 1, 0], [], []>} : vector<8x32xbf16>, vector<8x32xbf16>, vector<8x8xf32> -> vector<8x8xf32>
    %cst_18 = arith.constant dense<0xFF800000> : vector<8xf32>
    %48 = vector.multi_reduction <maximumf>, %47, %cst_18 [1] : vector<8x8xf32> to vector<8xf32>
    %49 = vector.shape_cast %48 : vector<8xf32> to vector<8x1xf32>
    %50 = vector.broadcast %49 : vector<8x1xf32> to vector<8x8xf32>
    %51 = arith.subf %47, %50 : vector<8x8xf32>
    %52 = math.exp %51 : vector<8x8xf32>
    %cst_19 = arith.constant dense<0.000000e+00> : vector<8xf32>
    %53 = vector.multi_reduction <add>, %52, %cst_19 [1] : vector<8x8xf32> to vector<8xf32>
    %54 = vector.shape_cast %53 : vector<8xf32> to vector<8x1xf32>
    %55 = tpu.reciprocal %54 {approx = true} : vector<8x1xf32> -> vector<8x1xf32>
    %56 = vector.broadcast %55 : vector<8x1xf32> to vector<8x8xf32>
    %57 = arith.mulf %52, %56 : vector<8x8xf32>
    %58 = arith.truncf %57 : vector<8x8xf32> to vector<8x8xbf16>
    %cst_20 = arith.constant dense<0.000000e+00> : vector<8x32xf32>
    %59 = tpu.matmul %58, %46, %cst_20 {dimension_numbers = #tpu.dot_dimension_numbers<[1], [0], [0], [1], [0, 0, 1, 1], [], []>} : vector<8x8xbf16>, vector<8x32xbf16>, vector<8x32xf32> -> vector<8x32xf32>
    %c0_21 = arith.constant 0 : index
    %c64 = arith.constant 64 : index
    %60 = vector.load %arg9[%c0_21, %c64] : memref<8x128xf32, #tpu.memory_space<vmem>>, vector<8x32xf32>
    tpu.vector_store %arg9[%c0_21, %c64], %59 {strides = array<i32>} : memref<8x128xf32, #tpu.memory_space<vmem>>, vector<8x32xf32>,
    %61 = vector.extract_strided_slice %9 {offsets = [0, 96], sizes = [8, 32], strides = [1, 1]} : vector<8x384xbf16> to vector<8x32xbf16>
    %62 = vector.extract_strided_slice %9 {offsets = [0, 224], sizes = [8, 32], strides = [1, 1]} : vector<8x384xbf16> to vector<8x32xbf16>
    %63 = vector.extract_strided_slice %9 {offsets = [0, 352], sizes = [8, 32], strides = [1, 1]} : vector<8x384xbf16> to vector<8x32xbf16>
    %cst_22 = arith.constant dense<0.000000e+00> : vector<8x8xf32>
    %64 = tpu.matmul %61, %62, %cst_22 {dimension_numbers = #tpu.dot_dimension_numbers<[1], [1], [0], [0], [0, 0, 1, 0], [], []>} : vector<8x32xbf16>, vector<8x32xbf16>, vector<8x8xf32> -> vector<8x8xf32>
    %cst_23 = arith.constant dense<0xFF800000> : vector<8xf32>
    %65 = vector.multi_reduction <maximumf>, %64, %cst_23 [1] : vector<8x8xf32> to vector<8xf32>
    %66 = vector.shape_cast %65 : vector<8xf32> to vector<8x1xf32>
    %67 = vector.broadcast %66 : vector<8x1xf32> to vector<8x8xf32>
    %68 = arith.subf %64, %67 : vector<8x8xf32>
    %69 = math.exp %68 : vector<8x8xf32>
    %cst_24 = arith.constant dense<0.000000e+00> : vector<8xf32>
    %70 = vector.multi_reduction <add>, %69, %cst_24 [1] : vector<8x8xf32> to vector<8xf32>
    %71 = vector.shape_cast %70 : vector<8xf32> to vector<8x1xf32>
    %72 = tpu.reciprocal %71 {approx = true} : vector<8x1xf32> -> vector<8x1xf32>
    %73 = vector.broadcast %72 : vector<8x1xf32> to vector<8x8xf32>
    %74 = arith.mulf %69, %73 : vector<8x8xf32>
    %75 = arith.truncf %74 : vector<8x8xf32> to vector<8x8xbf16>
    %cst_25 = arith.constant dense<0.000000e+00> : vector<8x32xf32>
    %76 = tpu.matmul %75, %63, %cst_25 {dimension_numbers = #tpu.dot_dimension_numbers<[1], [0], [0], [1], [0, 0, 1, 1], [], []>} : vector<8x8xbf16>, vector<8x32xbf16>, vector<8x32xf32> -> vector<8x32xf32>
    %c0_26 = arith.constant 0 : index
    %c96 = arith.constant 96 : index
    %77 = vector.load %arg9[%c0_26, %c96] : memref<8x128xf32, #tpu.memory_space<vmem>>, vector<8x32xf32>
    tpu.vector_store %arg9[%c0_26, %c96], %76 {strides = array<i32>} : memref<8x128xf32, #tpu.memory_space<vmem>>, vector<8x32xf32>,
    %c0_27 = arith.constant 0 : index
    %c0_28 = arith.constant 0 : index
    %78 = vector.load %arg9[%c0_27, %c0_28] : memref<8x128xf32, #tpu.memory_space<vmem>>, vector<8x128xf32>
    %79 = arith.truncf %78 : vector<8x128xf32> to vector<8x128xbf16>
    %c0_29 = arith.constant 0 : index
    %c0_30 = arith.constant 0 : index
    %80 = vector.load %arg4[%c0_29, %c0_30] : memref<128x128xbf16, #tpu.memory_space<vmem>>, vector<128x128xbf16>
    %cst_31 = arith.constant dense<0.000000e+00> : vector<8x128xf32>
    %81 = tpu.matmul %79, %80, %cst_31 {dimension_numbers = #tpu.dot_dimension_numbers<[1], [0], [0], [1], [0, 0, 1, 1], [], []>} : vector<8x128xbf16>, vector<128x128xbf16>, vector<8x128xf32> -> vector<8x128xf32>
    %c0_32 = arith.constant 0 : index
    %c0_33 = arith.constant 0 : index
    %82 = vector.load %arg5[%c0_32, %c0_33] : memref<1x128xf32, #tpu.memory_space<vmem>>, vector<1x128xf32>
    %83 = vector.broadcast %82 : vector<1x128xf32> to vector<8x128xf32>
    %84 = arith.addf %81, %83 : vector<8x128xf32>
    %85 = arith.addf %84, %2 : vector<8x128xf32>
    %cst_34 = arith.constant dense<0.000000e+00> : vector<8xf32>
    %86 = vector.multi_reduction <add>, %85, %cst_34 [1] : vector<8x128xf32> to vector<8xf32>
    %87 = vector.shape_cast %86 : vector<8xf32> to vector<8x1xf32>
    %cst_35 = arith.constant 3.125000e-02 : f32
    %88 = vector.broadcast %cst_35 : f32 to vector<8x1xf32>
    %89 = arith.mulf %87, %88 : vector<8x1xf32>
    %90 = arith.mulf %85, %85 : vector<8x128xf32>
    %cst_36 = arith.constant dense<0.000000e+00> : vector<8xf32>
    %91 = vector.multi_reduction <add>, %90, %cst_36 [1] : vector<8x128xf32> to vector<8xf32>
    %92 = vector.shape_cast %91 : vector<8xf32> to vector<8x1xf32>
    %cst_37 = arith.constant 3.125000e-02 : f32
    %93 = vector.broadcast %cst_37 : f32 to vector<8x1xf32>
    %94 = arith.mulf %92, %93 : vector<8x1xf32>
    %95 = arith.mulf %89, %89 : vector<8x1xf32>
    %96 = arith.subf %94, %95 : vector<8x1xf32>
    %cst_38 = arith.constant 0.000000e+00 : f32
    %97 = vector.broadcast %cst_38 : f32 to vector<8x1xf32>
    %98 = arith.maximumf %96, %97 : vector<8x1xf32>
    %99 = vector.broadcast %89 : vector<8x1xf32> to vector<8x128xf32>
    %100 = arith.subf %85, %99 : vector<8x128xf32>
    %cst_39 = arith.constant 9.99999974E-6 : f32
    %101 = vector.broadcast %cst_39 : f32 to vector<8x1xf32>
    %102 = arith.addf %98, %101 : vector<8x1xf32>
    %103 = math.rsqrt %102 : vector<8x1xf32>
    %104 = vector.broadcast %103 : vector<8x1xf32> to vector<8x128xf32>
    %105 = arith.mulf %100, %104 : vector<8x128xf32>
    %c0_40 = arith.constant 0 : index
    %c0_41 = arith.constant 0 : index
    %106 = vector.load %arg6[%c0_40, %c0_41] : memref<1x128xf32, #tpu.memory_space<vmem>>, vector<1x128xf32>
    %107 = vector.broadcast %106 : vector<1x128xf32> to vector<8x128xf32>
    %108 = arith.mulf %105, %107 : vector<8x128xf32>
    %c0_42 = arith.constant 0 : index
    %c0_43 = arith.constant 0 : index
    %109 = vector.load %arg7[%c0_42, %c0_43] : memref<1x128xf32, #tpu.memory_space<vmem>>, vector<1x128xf32>
    %110 = vector.broadcast %109 : vector<1x128xf32> to vector<8x128xf32>
    %111 = arith.addf %108, %110 : vector<8x128xf32>
    %112 = arith.truncf %111 : vector<8x128xf32> to vector<8x128xbf16>
    %c0_44 = arith.constant 0 : index
    %c0_45 = arith.constant 0 : index
    %c0_46 = arith.constant 0 : index
    %113 = vector.load %arg8[%c0_44, %c0_45, %c0_46] : memref<1x8x128xbf16, #tpu.memory_space<vmem>>, vector<1x8x128xbf16>
    %114 = vector.shape_cast %113 : vector<1x8x128xbf16> to vector<8x128xbf16>
    %115 = vector.shape_cast %112 : vector<8x128xbf16> to vector<1x8x128xbf16>
    tpu.vector_store %arg8[%c0_44, %c0_45, %c0_46], %115 {strides = array<i32>} : memref<1x8x128xbf16, #tpu.memory_space<vmem>>, vector<1x8x128xbf16>,
    return
  }
  func.func @transform_0(%arg0: i32) -> (i32, i32, i32) {
    %c0_i32 = arith.constant 0 : i32
    %c0_i32_0 = arith.constant 0 : i32
    %c0_i32_1 = arith.constant 0 : i32
    return %arg0, %c0_i32, %c0_i32_0 : i32, i32, i32
  }
  func.func @transform_1(%arg0: i32) -> (i32, i32) {
    %c0_i32 = arith.constant 0 : i32
    %c0_i32_0 = arith.constant 0 : i32
    %c0_i32_1 = arith.constant 0 : i32
    return %c0_i32, %c0_i32_0 : i32, i32
  }
  func.func @transform_2(%arg0: i32) -> (i32, i32) {
    %c0_i32 = arith.constant 0 : i32
    %c0_i32_0 = arith.constant 0 : i32
    %c0_i32_1 = arith.constant 0 : i32
    return %c0_i32, %c0_i32_0 : i32, i32
  }
  func.func @transform_3(%arg0: i32) -> (i32, i32) {
    %c0_i32 = arith.constant 0 : i32
    %c0_i32_0 = arith.constant 0 : i32
    %c0_i32_1 = arith.constant 0 : i32
    return %c0_i32, %c0_i32_0 : i32, i32
  }
  func.func @transform_4(%arg0: i32) -> (i32, i32) {
    %c0_i32 = arith.constant 0 : i32
    %c0_i32_0 = arith.constant 0 : i32
    %c0_i32_1 = arith.constant 0 : i32
    return %c0_i32, %c0_i32_0 : i32, i32
  }
  func.func @transform_5(%arg0: i32) -> (i32, i32) {
    %c0_i32 = arith.constant 0 : i32
    %c0_i32_0 = arith.constant 0 : i32
    %c0_i32_1 = arith.constant 0 : i32
    return %c0_i32, %c0_i32_0 : i32, i32
  }
  func.func @transform_6(%arg0: i32) -> (i32, i32) {
    %c0_i32 = arith.constant 0 : i32
    %c0_i32_0 = arith.constant 0 : i32
    %c0_i32_1 = arith.constant 0 : i32
    return %c0_i32, %c0_i32_0 : i32, i32
  }
  func.func @transform_7(%arg0: i32) -> (i32, i32, i32) {
    %c0_i32 = arith.constant 0 : i32
    %c0_i32_0 = arith.constant 0 : i32
    %c0_i32_1 = arith.constant 0 : i32
    return %arg0, %c0_i32, %c0_i32_0 : i32, i32, i32
  }
}

module attributes {stable_mosaic.version = 11 : i64} {
  func.func @_attn_block_kernel(%arg0: i32, %arg1: memref<1x8x128xbf16, #tpu.memory_space<vmem>>, %arg2: memref<8x128xf32, #tpu.memory_space<vmem>>, %arg3: memref<128x384xbf16, #tpu.memory_space<vmem>>, %arg4: memref<1x384xf32, #tpu.memory_space<vmem>>, %arg5: memref<128x128xbf16, #tpu.memory_space<vmem>>, %arg6: memref<1x128xf32, #tpu.memory_space<vmem>>, %arg7: memref<1x128xf32, #tpu.memory_space<vmem>>, %arg8: memref<1x128xf32, #tpu.memory_space<vmem>>, %arg9: memref<1x8x128xbf16, #tpu.memory_space<vmem>>, %arg10: memref<8x128xf32, #tpu.memory_space<vmem>>) attributes {dimension_semantics = [#tpu.dimension_semantics<parallel>], iteration_bounds = array<i64: 2>, scalar_prefetch = 0 : i64, scratch_operands = 1 : i64, tpu.core_type = #tpu.core_type<tc>, window_params = [{transform_indices = @transform_0, window_bounds = array<i64: 1, 8, 128>}, {pipeline_mode = #tpu.pipeline_mode<synchronous>, transform_indices = @transform_1, window_bounds = array<i64: 8, 128>}, {pipeline_mode = #tpu.pipeline_mode<synchronous>, transform_indices = @transform_2, window_bounds = array<i64: 128, 384>}, {pipeline_mode = #tpu.pipeline_mode<synchronous>, transform_indices = @transform_3, window_bounds = array<i64: 1, 384>}, {pipeline_mode = #tpu.pipeline_mode<synchronous>, transform_indices = @transform_4, window_bounds = array<i64: 128, 128>}, {pipeline_mode = #tpu.pipeline_mode<synchronous>, transform_indices = @transform_5, window_bounds = array<i64: 1, 128>}, {pipeline_mode = #tpu.pipeline_mode<synchronous>, transform_indices = @transform_6, window_bounds = array<i64: 1, 128>}, {pipeline_mode = #tpu.pipeline_mode<synchronous>, transform_indices = @transform_7, window_bounds = array<i64: 1, 128>}, {transform_indices = @transform_8, window_bounds = array<i64: 1, 8, 128>}]} {
    %c0 = arith.constant 0 : index
    %c0_0 = arith.constant 0 : index
    %c0_1 = arith.constant 0 : index
    %0 = vector.load %arg1[%c0, %c0_0, %c0_1] : memref<1x8x128xbf16, #tpu.memory_space<vmem>>, vector<1x8x128xbf16>
    %1 = vector.shape_cast %0 : vector<1x8x128xbf16> to vector<8x128xbf16>
    %2 = arith.extf %1 : vector<8x128xbf16> to vector<8x128xf32>
    %cst = arith.constant 5.65685415 : f32
    %3 = vector.broadcast %cst : f32 to vector<8x128xf32>
    %4 = arith.mulf %2, %3 : vector<8x128xf32>
    %c0_2 = arith.constant 0 : index
    %c0_3 = arith.constant 0 : index
    %5 = vector.load %arg2[%c0_2, %c0_3] : memref<8x128xf32, #tpu.memory_space<vmem>>, vector<8x128xf32>
    %6 = arith.addf %4, %5 : vector<8x128xf32>
    %7 = arith.truncf %6 : vector<8x128xf32> to vector<8x128xbf16>
    %c0_4 = arith.constant 0 : index
    %c0_5 = arith.constant 0 : index
    %8 = vector.load %arg3[%c0_4, %c0_5] : memref<128x384xbf16, #tpu.memory_space<vmem>>, vector<128x384xbf16>
    %cst_6 = arith.constant dense<0.000000e+00> : vector<8x384xf32>
    %9 = tpu.matmul %7, %8, %cst_6 {dimension_numbers = #tpu.dot_dimension_numbers<[1], [0], [0], [1], [0, 0, 1, 1], [], []>} : vector<8x128xbf16>, vector<128x384xbf16>, vector<8x384xf32> -> vector<8x384xf32>
    %c0_7 = arith.constant 0 : index
    %c0_8 = arith.constant 0 : index
    %10 = vector.load %arg4[%c0_7, %c0_8] : memref<1x384xf32, #tpu.memory_space<vmem>>, vector<1x384xf32>
    %11 = vector.broadcast %10 : vector<1x384xf32> to vector<8x384xf32>
    %12 = arith.addf %9, %11 : vector<8x384xf32>
    %13 = arith.truncf %12 : vector<8x384xf32> to vector<8x384xbf16>
    %14 = vector.extract_strided_slice %13 {offsets = [0, 0], sizes = [8, 32], strides = [1, 1]} : vector<8x384xbf16> to vector<8x32xbf16>
    %15 = vector.extract_strided_slice %13 {offsets = [0, 128], sizes = [8, 32], strides = [1, 1]} : vector<8x384xbf16> to vector<8x32xbf16>
    %16 = vector.extract_strided_slice %13 {offsets = [0, 256], sizes = [8, 32], strides = [1, 1]} : vector<8x384xbf16> to vector<8x32xbf16>
    %cst_9 = arith.constant dense<0.000000e+00> : vector<8x8xf32>
    %17 = tpu.matmul %14, %15, %cst_9 {dimension_numbers = #tpu.dot_dimension_numbers<[1], [1], [0], [0], [0, 0, 1, 0], [], []>} : vector<8x32xbf16>, vector<8x32xbf16>, vector<8x8xf32> -> vector<8x8xf32>
    %cst_10 = arith.constant dense<0xFF800000> : vector<8xf32>
    %18 = vector.multi_reduction <maximumf>, %17, %cst_10 [1] : vector<8x8xf32> to vector<8xf32>
    %19 = vector.shape_cast %18 : vector<8xf32> to vector<8x1xf32>
    %20 = vector.broadcast %19 : vector<8x1xf32> to vector<8x8xf32>
    %21 = arith.subf %17, %20 : vector<8x8xf32>
    %22 = math.exp %21 : vector<8x8xf32>
    %cst_11 = arith.constant dense<0.000000e+00> : vector<8xf32>
    %23 = vector.multi_reduction <add>, %22, %cst_11 [1] : vector<8x8xf32> to vector<8xf32>
    %24 = vector.shape_cast %23 : vector<8xf32> to vector<8x1xf32>
    %25 = tpu.reciprocal %24 {approx = true} : vector<8x1xf32> -> vector<8x1xf32>
    %26 = vector.broadcast %25 : vector<8x1xf32> to vector<8x8xf32>
    %27 = arith.mulf %22, %26 : vector<8x8xf32>
    %28 = arith.truncf %27 : vector<8x8xf32> to vector<8x8xbf16>
    %cst_12 = arith.constant dense<0.000000e+00> : vector<8x32xf32>
    %29 = tpu.matmul %28, %16, %cst_12 {dimension_numbers = #tpu.dot_dimension_numbers<[1], [0], [0], [1], [0, 0, 1, 1], [], []>} : vector<8x8xbf16>, vector<8x32xbf16>, vector<8x32xf32> -> vector<8x32xf32>
    %c0_13 = arith.constant 0 : index
    %c0_14 = arith.constant 0 : index
    %30 = vector.load %arg10[%c0_13, %c0_14] : memref<8x128xf32, #tpu.memory_space<vmem>>, vector<8x32xf32>
    tpu.vector_store %arg10[%c0_13, %c0_14], %29 {strides = array<i32>} : memref<8x128xf32, #tpu.memory_space<vmem>>, vector<8x32xf32>,
    %31 = vector.extract_strided_slice %13 {offsets = [0, 32], sizes = [8, 32], strides = [1, 1]} : vector<8x384xbf16> to vector<8x32xbf16>
    %32 = vector.extract_strided_slice %13 {offsets = [0, 160], sizes = [8, 32], strides = [1, 1]} : vector<8x384xbf16> to vector<8x32xbf16>
    %33 = vector.extract_strided_slice %13 {offsets = [0, 288], sizes = [8, 32], strides = [1, 1]} : vector<8x384xbf16> to vector<8x32xbf16>
    %cst_15 = arith.constant dense<0.000000e+00> : vector<8x8xf32>
    %34 = tpu.matmul %31, %32, %cst_15 {dimension_numbers = #tpu.dot_dimension_numbers<[1], [1], [0], [0], [0, 0, 1, 0], [], []>} : vector<8x32xbf16>, vector<8x32xbf16>, vector<8x8xf32> -> vector<8x8xf32>
    %cst_16 = arith.constant dense<0xFF800000> : vector<8xf32>
    %35 = vector.multi_reduction <maximumf>, %34, %cst_16 [1] : vector<8x8xf32> to vector<8xf32>
    %36 = vector.shape_cast %35 : vector<8xf32> to vector<8x1xf32>
    %37 = vector.broadcast %36 : vector<8x1xf32> to vector<8x8xf32>
    %38 = arith.subf %34, %37 : vector<8x8xf32>
    %39 = math.exp %38 : vector<8x8xf32>
    %cst_17 = arith.constant dense<0.000000e+00> : vector<8xf32>
    %40 = vector.multi_reduction <add>, %39, %cst_17 [1] : vector<8x8xf32> to vector<8xf32>
    %41 = vector.shape_cast %40 : vector<8xf32> to vector<8x1xf32>
    %42 = tpu.reciprocal %41 {approx = true} : vector<8x1xf32> -> vector<8x1xf32>
    %43 = vector.broadcast %42 : vector<8x1xf32> to vector<8x8xf32>
    %44 = arith.mulf %39, %43 : vector<8x8xf32>
    %45 = arith.truncf %44 : vector<8x8xf32> to vector<8x8xbf16>
    %cst_18 = arith.constant dense<0.000000e+00> : vector<8x32xf32>
    %46 = tpu.matmul %45, %33, %cst_18 {dimension_numbers = #tpu.dot_dimension_numbers<[1], [0], [0], [1], [0, 0, 1, 1], [], []>} : vector<8x8xbf16>, vector<8x32xbf16>, vector<8x32xf32> -> vector<8x32xf32>
    %c0_19 = arith.constant 0 : index
    %c32 = arith.constant 32 : index
    %47 = vector.load %arg10[%c0_19, %c32] : memref<8x128xf32, #tpu.memory_space<vmem>>, vector<8x32xf32>
    tpu.vector_store %arg10[%c0_19, %c32], %46 {strides = array<i32>} : memref<8x128xf32, #tpu.memory_space<vmem>>, vector<8x32xf32>,
    %48 = vector.extract_strided_slice %13 {offsets = [0, 64], sizes = [8, 32], strides = [1, 1]} : vector<8x384xbf16> to vector<8x32xbf16>
    %49 = vector.extract_strided_slice %13 {offsets = [0, 192], sizes = [8, 32], strides = [1, 1]} : vector<8x384xbf16> to vector<8x32xbf16>
    %50 = vector.extract_strided_slice %13 {offsets = [0, 320], sizes = [8, 32], strides = [1, 1]} : vector<8x384xbf16> to vector<8x32xbf16>
    %cst_20 = arith.constant dense<0.000000e+00> : vector<8x8xf32>
    %51 = tpu.matmul %48, %49, %cst_20 {dimension_numbers = #tpu.dot_dimension_numbers<[1], [1], [0], [0], [0, 0, 1, 0], [], []>} : vector<8x32xbf16>, vector<8x32xbf16>, vector<8x8xf32> -> vector<8x8xf32>
    %cst_21 = arith.constant dense<0xFF800000> : vector<8xf32>
    %52 = vector.multi_reduction <maximumf>, %51, %cst_21 [1] : vector<8x8xf32> to vector<8xf32>
    %53 = vector.shape_cast %52 : vector<8xf32> to vector<8x1xf32>
    %54 = vector.broadcast %53 : vector<8x1xf32> to vector<8x8xf32>
    %55 = arith.subf %51, %54 : vector<8x8xf32>
    %56 = math.exp %55 : vector<8x8xf32>
    %cst_22 = arith.constant dense<0.000000e+00> : vector<8xf32>
    %57 = vector.multi_reduction <add>, %56, %cst_22 [1] : vector<8x8xf32> to vector<8xf32>
    %58 = vector.shape_cast %57 : vector<8xf32> to vector<8x1xf32>
    %59 = tpu.reciprocal %58 {approx = true} : vector<8x1xf32> -> vector<8x1xf32>
    %60 = vector.broadcast %59 : vector<8x1xf32> to vector<8x8xf32>
    %61 = arith.mulf %56, %60 : vector<8x8xf32>
    %62 = arith.truncf %61 : vector<8x8xf32> to vector<8x8xbf16>
    %cst_23 = arith.constant dense<0.000000e+00> : vector<8x32xf32>
    %63 = tpu.matmul %62, %50, %cst_23 {dimension_numbers = #tpu.dot_dimension_numbers<[1], [0], [0], [1], [0, 0, 1, 1], [], []>} : vector<8x8xbf16>, vector<8x32xbf16>, vector<8x32xf32> -> vector<8x32xf32>
    %c0_24 = arith.constant 0 : index
    %c64 = arith.constant 64 : index
    %64 = vector.load %arg10[%c0_24, %c64] : memref<8x128xf32, #tpu.memory_space<vmem>>, vector<8x32xf32>
    tpu.vector_store %arg10[%c0_24, %c64], %63 {strides = array<i32>} : memref<8x128xf32, #tpu.memory_space<vmem>>, vector<8x32xf32>,
    %65 = vector.extract_strided_slice %13 {offsets = [0, 96], sizes = [8, 32], strides = [1, 1]} : vector<8x384xbf16> to vector<8x32xbf16>
    %66 = vector.extract_strided_slice %13 {offsets = [0, 224], sizes = [8, 32], strides = [1, 1]} : vector<8x384xbf16> to vector<8x32xbf16>
    %67 = vector.extract_strided_slice %13 {offsets = [0, 352], sizes = [8, 32], strides = [1, 1]} : vector<8x384xbf16> to vector<8x32xbf16>
    %cst_25 = arith.constant dense<0.000000e+00> : vector<8x8xf32>
    %68 = tpu.matmul %65, %66, %cst_25 {dimension_numbers = #tpu.dot_dimension_numbers<[1], [1], [0], [0], [0, 0, 1, 0], [], []>} : vector<8x32xbf16>, vector<8x32xbf16>, vector<8x8xf32> -> vector<8x8xf32>
    %cst_26 = arith.constant dense<0xFF800000> : vector<8xf32>
    %69 = vector.multi_reduction <maximumf>, %68, %cst_26 [1] : vector<8x8xf32> to vector<8xf32>
    %70 = vector.shape_cast %69 : vector<8xf32> to vector<8x1xf32>
    %71 = vector.broadcast %70 : vector<8x1xf32> to vector<8x8xf32>
    %72 = arith.subf %68, %71 : vector<8x8xf32>
    %73 = math.exp %72 : vector<8x8xf32>
    %cst_27 = arith.constant dense<0.000000e+00> : vector<8xf32>
    %74 = vector.multi_reduction <add>, %73, %cst_27 [1] : vector<8x8xf32> to vector<8xf32>
    %75 = vector.shape_cast %74 : vector<8xf32> to vector<8x1xf32>
    %76 = tpu.reciprocal %75 {approx = true} : vector<8x1xf32> -> vector<8x1xf32>
    %77 = vector.broadcast %76 : vector<8x1xf32> to vector<8x8xf32>
    %78 = arith.mulf %73, %77 : vector<8x8xf32>
    %79 = arith.truncf %78 : vector<8x8xf32> to vector<8x8xbf16>
    %cst_28 = arith.constant dense<0.000000e+00> : vector<8x32xf32>
    %80 = tpu.matmul %79, %67, %cst_28 {dimension_numbers = #tpu.dot_dimension_numbers<[1], [0], [0], [1], [0, 0, 1, 1], [], []>} : vector<8x8xbf16>, vector<8x32xbf16>, vector<8x32xf32> -> vector<8x32xf32>
    %c0_29 = arith.constant 0 : index
    %c96 = arith.constant 96 : index
    %81 = vector.load %arg10[%c0_29, %c96] : memref<8x128xf32, #tpu.memory_space<vmem>>, vector<8x32xf32>
    tpu.vector_store %arg10[%c0_29, %c96], %80 {strides = array<i32>} : memref<8x128xf32, #tpu.memory_space<vmem>>, vector<8x32xf32>,
    %c0_30 = arith.constant 0 : index
    %c0_31 = arith.constant 0 : index
    %82 = vector.load %arg10[%c0_30, %c0_31] : memref<8x128xf32, #tpu.memory_space<vmem>>, vector<8x128xf32>
    %83 = arith.truncf %82 : vector<8x128xf32> to vector<8x128xbf16>
    %c0_32 = arith.constant 0 : index
    %c0_33 = arith.constant 0 : index
    %84 = vector.load %arg5[%c0_32, %c0_33] : memref<128x128xbf16, #tpu.memory_space<vmem>>, vector<128x128xbf16>
    %cst_34 = arith.constant dense<0.000000e+00> : vector<8x128xf32>
    %85 = tpu.matmul %83, %84, %cst_34 {dimension_numbers = #tpu.dot_dimension_numbers<[1], [0], [0], [1], [0, 0, 1, 1], [], []>} : vector<8x128xbf16>, vector<128x128xbf16>, vector<8x128xf32> -> vector<8x128xf32>
    %c0_35 = arith.constant 0 : index
    %c0_36 = arith.constant 0 : index
    %86 = vector.load %arg6[%c0_35, %c0_36] : memref<1x128xf32, #tpu.memory_space<vmem>>, vector<1x128xf32>
    %87 = vector.broadcast %86 : vector<1x128xf32> to vector<8x128xf32>
    %88 = arith.addf %85, %87 : vector<8x128xf32>
    %89 = arith.addf %88, %6 : vector<8x128xf32>
    %cst_37 = arith.constant dense<0.000000e+00> : vector<8xf32>
    %90 = vector.multi_reduction <add>, %89, %cst_37 [1] : vector<8x128xf32> to vector<8xf32>
    %91 = vector.shape_cast %90 : vector<8xf32> to vector<8x1xf32>
    %cst_38 = arith.constant 3.125000e-02 : f32
    %92 = vector.broadcast %cst_38 : f32 to vector<8x1xf32>
    %93 = arith.mulf %91, %92 : vector<8x1xf32>
    %94 = arith.mulf %89, %89 : vector<8x128xf32>
    %cst_39 = arith.constant dense<0.000000e+00> : vector<8xf32>
    %95 = vector.multi_reduction <add>, %94, %cst_39 [1] : vector<8x128xf32> to vector<8xf32>
    %96 = vector.shape_cast %95 : vector<8xf32> to vector<8x1xf32>
    %cst_40 = arith.constant 3.125000e-02 : f32
    %97 = vector.broadcast %cst_40 : f32 to vector<8x1xf32>
    %98 = arith.mulf %96, %97 : vector<8x1xf32>
    %99 = arith.mulf %93, %93 : vector<8x1xf32>
    %100 = arith.subf %98, %99 : vector<8x1xf32>
    %cst_41 = arith.constant 0.000000e+00 : f32
    %101 = vector.broadcast %cst_41 : f32 to vector<8x1xf32>
    %102 = arith.maximumf %100, %101 : vector<8x1xf32>
    %103 = vector.broadcast %93 : vector<8x1xf32> to vector<8x128xf32>
    %104 = arith.subf %89, %103 : vector<8x128xf32>
    %cst_42 = arith.constant 9.99999974E-6 : f32
    %105 = vector.broadcast %cst_42 : f32 to vector<8x1xf32>
    %106 = arith.addf %102, %105 : vector<8x1xf32>
    %107 = math.rsqrt %106 : vector<8x1xf32>
    %108 = vector.broadcast %107 : vector<8x1xf32> to vector<8x128xf32>
    %109 = arith.mulf %104, %108 : vector<8x128xf32>
    %c0_43 = arith.constant 0 : index
    %c0_44 = arith.constant 0 : index
    %110 = vector.load %arg7[%c0_43, %c0_44] : memref<1x128xf32, #tpu.memory_space<vmem>>, vector<1x128xf32>
    %111 = vector.broadcast %110 : vector<1x128xf32> to vector<8x128xf32>
    %112 = arith.mulf %109, %111 : vector<8x128xf32>
    %c0_45 = arith.constant 0 : index
    %c0_46 = arith.constant 0 : index
    %113 = vector.load %arg8[%c0_45, %c0_46] : memref<1x128xf32, #tpu.memory_space<vmem>>, vector<1x128xf32>
    %114 = vector.broadcast %113 : vector<1x128xf32> to vector<8x128xf32>
    %115 = arith.addf %112, %114 : vector<8x128xf32>
    %116 = arith.truncf %115 : vector<8x128xf32> to vector<8x128xbf16>
    %c0_47 = arith.constant 0 : index
    %c0_48 = arith.constant 0 : index
    %c0_49 = arith.constant 0 : index
    %117 = vector.load %arg9[%c0_47, %c0_48, %c0_49] : memref<1x8x128xbf16, #tpu.memory_space<vmem>>, vector<1x8x128xbf16>
    %118 = vector.shape_cast %117 : vector<1x8x128xbf16> to vector<8x128xbf16>
    %119 = vector.shape_cast %116 : vector<8x128xbf16> to vector<1x8x128xbf16>
    tpu.vector_store %arg9[%c0_47, %c0_48, %c0_49], %119 {strides = array<i32>} : memref<1x8x128xbf16, #tpu.memory_space<vmem>>, vector<1x8x128xbf16>,
    return
  }
  func.func @transform_0(%arg0: i32) -> (i32, i32, i32) {
    %c0_i32 = arith.constant 0 : i32
    %c0_i32_0 = arith.constant 0 : i32
    %c0_i32_1 = arith.constant 0 : i32
    return %arg0, %c0_i32, %c0_i32_0 : i32, i32, i32
  }
  func.func @transform_1(%arg0: i32) -> (i32, i32) {
    %c0_i32 = arith.constant 0 : i32
    %c0_i32_0 = arith.constant 0 : i32
    %c0_i32_1 = arith.constant 0 : i32
    return %c0_i32, %c0_i32_0 : i32, i32
  }
  func.func @transform_2(%arg0: i32) -> (i32, i32) {
    %c0_i32 = arith.constant 0 : i32
    %c0_i32_0 = arith.constant 0 : i32
    %c0_i32_1 = arith.constant 0 : i32
    return %c0_i32, %c0_i32_0 : i32, i32
  }
  func.func @transform_3(%arg0: i32) -> (i32, i32) {
    %c0_i32 = arith.constant 0 : i32
    %c0_i32_0 = arith.constant 0 : i32
    %c0_i32_1 = arith.constant 0 : i32
    return %c0_i32, %c0_i32_0 : i32, i32
  }
  func.func @transform_4(%arg0: i32) -> (i32, i32) {
    %c0_i32 = arith.constant 0 : i32
    %c0_i32_0 = arith.constant 0 : i32
    %c0_i32_1 = arith.constant 0 : i32
    return %c0_i32, %c0_i32_0 : i32, i32
  }
  func.func @transform_5(%arg0: i32) -> (i32, i32) {
    %c0_i32 = arith.constant 0 : i32
    %c0_i32_0 = arith.constant 0 : i32
    %c0_i32_1 = arith.constant 0 : i32
    return %c0_i32, %c0_i32_0 : i32, i32
  }
  func.func @transform_6(%arg0: i32) -> (i32, i32) {
    %c0_i32 = arith.constant 0 : i32
    %c0_i32_0 = arith.constant 0 : i32
    %c0_i32_1 = arith.constant 0 : i32
    return %c0_i32, %c0_i32_0 : i32, i32
  }
  func.func @transform_7(%arg0: i32) -> (i32, i32) {
    %c0_i32 = arith.constant 0 : i32
    %c0_i32_0 = arith.constant 0 : i32
    %c0_i32_1 = arith.constant 0 : i32
    return %c0_i32, %c0_i32_0 : i32, i32
  }
  func.func @transform_8(%arg0: i32) -> (i32, i32, i32) {
    %c0_i32 = arith.constant 0 : i32
    %c0_i32_0 = arith.constant 0 : i32
    %c0_i32_1 = arith.constant 0 : i32
    return %arg0, %c0_i32, %c0_i32_0 : i32, i32, i32
  }
}

</mosaic_0001>

<llo_original>
// kernel: transformer_forward.9
$region0: #{transformer_forward.9}
  #allocation0 [shape = 'u32[]', space=smem, size = 0x4, offset = 0x4, fixed_abs, tag = 'smem constant byte address 0x4 - core index']
  #allocation1 [shape = 'u32[144,128]{1,0:T(1,128)}', space=vmem, size = 0x12000, scoped, tag = 'internal scratch']
  #allocation2 [shape = 'f32[16,128]{1,0:T(8,128)}', space=vmem, size = 0x2000, scoped, tag = 'scratch operand']
  %s0 = inlined_call_operand.vmem [shape: bf16[16,128], index: 0, kind: input, shape index: {}]
  %s1 = inlined_call_operand.vmem [shape: bf16[128,128], index: 1, kind: input, shape index: {}]
  %s2 = inlined_call_operand.vmem [shape: f32[1,128], index: 2, kind: input, shape index: {}]
  %s3 = inlined_call_operand.hbm [shape: f32[16,128], index: 3, kind: output, shape index: {}]
  %s4 = sld [smem:[#allocation0]]
  $region30: #{transformer_forward.9} parent=0
    _
  %s6 = ssub.s32 1, %s4
  %s7 = scalar_select 0, %s6, %s4
  $region1: #{transformer_forward.9} parent=0
    #allocation3 [shape = 'u8[8192]{0}', space=vmem, size = 0x2000, scoped, tag = 'output window, operand 0, single buffered']
    #allocation4 [shape = 's32[1]{0}', space=sflag, size = 0x4, scoped, tag = 'scoped memory for transformer_forward.9']
    %8 = vsyncpa [#allocation4], 0
    // Predicated region
    $region2: #{transformer_forward.9} parent=1 // pred_check
      _
    $region3: #{transformer_forward.9} parent=1 // pred_check_branch
      %10 = sbr.rel (0) target = $region5
    $region4: #{transformer_forward.9} parent=1 // pred_region
      _
    $region5: #{transformer_forward.9} parent=1 // pred_fallthru
      _
    // Predicated region
    $region6: #{transformer_forward.9} parent=1 // pred_check
      _
    $region7: #{transformer_forward.9} parent=1 // pred_check_branch
      %12 = sbr.rel (0) target = $region9
    $region8: #{transformer_forward.9} parent=1 // pred_region
      _
    $region9: #{transformer_forward.9} parent=1 // pred_fallthru
      _
    // Predicated region
    $region10: #{transformer_forward.9} parent=1 // pred_check
      _
    $region11: #{transformer_forward.9} parent=1 // pred_check_branch
      %14 = sbr.rel (0) target = $region13
    $region12: #{transformer_forward.9} parent=1 // pred_region
      _
    $region13: #{transformer_forward.9} parent=1 // pred_fallthru
      _
    %p16 = scmp.eq.s32.totalorder 0, 0
    // Predicated region
    $region14: #{transformer_forward.9} parent=1 // pred_check
      %p17 = pneg %p16
    $region15: #{transformer_forward.9} parent=1 // pred_check_branch
      %19 = sbr.rel (%p17) target = $region17
    $region16: #{transformer_forward.9} parent=1 // pred_region
      %20 = vst [vmem:[#allocation2] sm:$0xff] 0.0
      %21 = vst [vmem:[#allocation2 + $0x8] sm:$0xff] 0.0
    $region17: #{transformer_forward.9} parent=1 // pred_fallthru
      _
    %v22 = vld [vmem:[#allocation2] sm:$0xff]
    %v23 = vld [vmem:[#allocation2 + $0x8] sm:$0xff]
    %v24 = vld [vmem:[%s0] sm:$0xf]
    %v25 = vld [vmem:[%s0 + $0x4] sm:$0xf]
    %v26 = vld [vmem:[%s1] sm:$0xf]
    %v27 = vld [vmem:[%s1 + $0x4] sm:$0xf]
    %v28 = vld [vmem:[%s1 + $0x8] sm:$0xf]
    %v29 = vld [vmem:[%s1 + $0xc] sm:$0xf]
    %v30 = vld [vmem:[%s1 + $0x10] sm:$0xf]
    %v31 = vld [vmem:[%s1 + $0x14] sm:$0xf]
    %v32 = vld [vmem:[%s1 + $0x18] sm:$0xf]
    %v33 = vld [vmem:[%s1 + $0x1c] sm:$0xf]
    %v34 = vld [vmem:[%s1 + $0x20] sm:$0xf]
    %v35 = vld [vmem:[%s1 + $0x24] sm:$0xf]
    %v36 = vld [vmem:[%s1 + $0x28] sm:$0xf]
    %v37 = vld [vmem:[%s1 + $0x2c] sm:$0xf]
    %v38 = vld [vmem:[%s1 + $0x30] sm:$0xf]
    %v39 = vld [vmem:[%s1 + $0x34] sm:$0xf]
    %v40 = vld [vmem:[%s1 + $0x38] sm:$0xf]
    %v41 = vld [vmem:[%s1 + $0x3c] sm:$0xf]
    %v44 = vunpack.c.l.b16 %v24
    %v45 = vunpack.c.l.b16 %v25
    %v46 = vpack.c.b16 %v45, %v44
    %v64 = vunpack.c.l.b16 %v26
    %v65 = vunpack.c.l.b16 %v27
    %v66 = vunpack.c.l.b16 %v28
    %v67 = vunpack.c.l.b16 %v29
    %v68 = vunpack.c.l.b16 %v30
    %v69 = vunpack.c.l.b16 %v31
    %v70 = vunpack.c.l.b16 %v32
    %v71 = vunpack.c.l.b16 %v33
    %v72 = vunpack.c.l.b16 %v34
    %v73 = vunpack.c.l.b16 %v35
    %v74 = vunpack.c.l.b16 %v36
    %v75 = vunpack.c.l.b16 %v37
    %v76 = vunpack.c.l.b16 %v38
    %v77 = vunpack.c.l.b16 %v39
    %v78 = vunpack.c.l.b16 %v40
    %v79 = vunpack.c.l.b16 %v41
    %v80 = vpack.c.b16 %v65, %v64
    %v81 = vpack.c.b16 %v67, %v66
    %v82 = vpack.c.b16 %v69, %v68
    %v83 = vpack.c.b16 %v71, %v70
    %v84 = vpack.c.b16 %v73, %v72
    %v85 = vpack.c.b16 %v75, %v74
    %v86 = vpack.c.b16 %v77, %v76
    %v87 = vpack.c.b16 %v79, %v78
    %96 = vmatprep.subr.bf16.mxu0 0
    %97 = vmatpush1.bf16.msra.mxu0 %v80
    %98 = vmatprep.subr.bf16.mxu0 0
    %99 = vmatpush1.bf16.msra.mxu0 %v81
    %100 = vmatprep.subr.bf16.mxu0 0
    %101 = vmatpush1.bf16.msra.mxu0 %v82
    %102 = vmatprep.subr.bf16.mxu0 0
    %103 = vmatpush1.bf16.msra.mxu0 %v83
    %104 = vmatprep.subr.bf16.mxu0 0
    %105 = vmatpush1.bf16.msra.mxu0 %v84
    %106 = vmatprep.subr.bf16.mxu0 0
    %107 = vmatpush1.bf16.msra.mxu0 %v85
    %108 = vmatprep.subr.bf16.mxu0 0
    %109 = vmatpush1.bf16.msra.mxu0 %v86
    %110 = vmatprep.subr.bf16.mxu0 0
    %111 = vmatpush1.bf16.msra.mxu0 %v87
    %112 = vmatprep.subr.bf16.mxu0 0
    %113 = vmatpush1.bf16.msra.mxu0 0
    %114 = vmatprep.subr.bf16.mxu0 0
    %115 = vmatpush1.bf16.msra.mxu0 0
    %116 = vmatprep.subr.bf16.mxu0 0
    %117 = vmatpush1.bf16.msra.mxu0 0
    %118 = vmatprep.subr.bf16.mxu0 0
    %119 = vmatpush1.bf16.msra.mxu0 0
    %120 = vmatprep.subr.bf16.mxu0 0
    %121 = vmatpush1.bf16.msra.mxu0 0
    %122 = vmatprep.subr.bf16.mxu0 0
    %123 = vmatpush1.bf16.msra.mxu0 0
    %124 = vmatprep.subr.bf16.mxu0 0
    %125 = vmatpush1.bf16.msra.mxu0 0
    %126 = vmatprep.subr.bf16.mxu0 0
    %127 = vmatpush1.bf16.msra.mxu0 0
    %128 = vmatprep.mubr.bf16.mxu0 0
    %129 = vmatmul.mubr.bf16.gmra.mrb[0].mxu0 %v46
    %v130 = vpop.f32.mrb[0].mxu0
    %v131 = vadd.f32 0.0, %v130
    %v132 = vpop.f32.mrb[0].mxu0
    %v133 = vpop.f32.mrb[0].mxu0
    %v134 = vadd.f32 0.0, %v133
    %v135 = vpop.f32.mrb[0].mxu0
    %136 = vdwg.mxu0
    %v137 = vadd.f32 %v22, %v131
    %v138 = vadd.f32 %v23, %v134
    %139 = vst [vmem:[#allocation2] sm:$0xff] %v137
    %140 = vst [vmem:[#allocation2 + $0x8] sm:$0xff] %v138
    // Predicated region
    $region18: #{transformer_forward.9} parent=1 // pred_check
      %p141 = pneg %p16
    $region19: #{transformer_forward.9} parent=1 // pred_check_branch
      %143 = sbr.rel (%p141) target = $region21
    $region20: #{transformer_forward.9} parent=1 // pred_region
      %v144 = vld [vmem:[#allocation2] sm:$0xff]
      %v145 = vld [vmem:[#allocation2 + $0x8] sm:$0xff]
      %v146 = vld [vmem:[%s2] sm:$0x1]
      %v148 = vlaneseq
      %v149 = vshrl.u32 %v148, 7
      %v150 = vsub.s32 0, %v149
      %v151 = vrot.slane %v146, %v150
      %v153 = vadd.f32 %v144, %v151
      %v154 = vadd.f32 %v145, %v151
      %155 = vst [vmem:[#allocation3] sm:$0xff] %v153
      %156 = vst [vmem:[#allocation3 + $0x8] sm:$0xff] %v154
    $region21: #{transformer_forward.9} parent=1 // pred_fallthru
      _
    // Predicated region
    $region22: #{transformer_forward.9} parent=1 // pred_check
      _
    $region23: #{transformer_forward.9} parent=1 // pred_check_branch
      %158 = sbr.rel (0) target = $region25
    $region24: #{transformer_forward.9} parent=1 // pred_region
      %s160 = ssub.s32 256, 256
      %161 = vsyncadd [#allocation4], %s160
      %s162 = sshll.u32 [#allocation3], 4
      %s163 = int_to_ptr.vmem [resolvable:$true] %s162
      %168 = dma.vmem_to_hbm [thread:$0]  %s163, 256, %s3, [#allocation4], 128, 128, 8
    $region25: #{transformer_forward.9} parent=1 // pred_fallthru
      _
    // Predicated region
    $region26: #{transformer_forward.9} parent=1 // pred_check
      _
    $region27: #{transformer_forward.9} parent=1 // pred_check_branch
      %170 = sbr.rel (0) target = $region29
    $region28: #{transformer_forward.9} parent=1 // pred_region
      %171 = dma.done [#allocation4], 256
    $region29: #{transformer_forward.9} parent=1 // pred_fallthru
      _
    %172 = vsyncpa [#allocation4], 1

// kernel: transformer_forward.6
$region0: #{transformer_forward.6}
  #allocation0 [shape = 'u32[]', space=smem, size = 0x4, offset = 0x4, fixed_abs, tag = 'smem constant byte address 0x4 - core index']
  #allocation1 [shape = 'u32[144,128]{1,0:T(1,128)}', space=vmem, size = 0x12000, scoped, tag = 'internal scratch']
  %s0 = inlined_call_operand.vmem [shape: bf16[16,128], index: 0, kind: input, shape index: {}]
  %s1 = inlined_call_operand.vmem [shape: bf16[128,128], index: 1, kind: input, shape index: {}]
  %s2 = inlined_call_operand.vmem [shape: f32[1,128], index: 2, kind: input, shape index: {}]
  %s3 = inlined_call_operand.vmem [shape: bf16[128,128], index: 3, kind: input, shape index: {}]
  %s4 = inlined_call_operand.vmem [shape: f32[1,128], index: 4, kind: input, shape index: {}]
  %s5 = inlined_call_operand.vmem [shape: f32[1,128], index: 5, kind: input, shape index: {}]
  %s6 = inlined_call_operand.vmem [shape: f32[1,128], index: 6, kind: input, shape index: {}]
  %s7 = inlined_call_operand.vmem [shape: bf16[16,128], index: 7, kind: output, shape index: {}]
  %s8 = sld [smem:[#allocation0]]
  $region38: #{transformer_forward.6} parent=0
    _
  %s10 = ssub.s32 1, %s8
  %s11 = scalar_select 0, %s10, %s8
  // Predicated region
  $region2: #{transformer_forward.6} parent=0 // pred_check
    _
  $region3: #{transformer_forward.6} parent=0 // pred_check_branch
    %13 = sbr.rel (0) target = $region5
  $region4: #{transformer_forward.6} parent=0 // pred_region
    _
  $region5: #{transformer_forward.6} parent=0 // pred_fallthru
    _
  // Predicated region
  $region6: #{transformer_forward.6} parent=0 // pred_check
    _
  $region7: #{transformer_forward.6} parent=0 // pred_check_branch
    %15 = sbr.rel (0) target = $region9
  $region8: #{transformer_forward.6} parent=0 // pred_region
    _
  $region9: #{transformer_forward.6} parent=0 // pred_fallthru
    _
  // Predicated region
  $region10: #{transformer_forward.6} parent=0 // pred_check
    _
  $region11: #{transformer_forward.6} parent=0 // pred_check_branch
    %17 = sbr.rel (0) target = $region13
  $region12: #{transformer_forward.6} parent=0 // pred_region
    _
  $region13: #{transformer_forward.6} parent=0 // pred_fallthru
    _
  // Predicated region
  $region14: #{transformer_forward.6} parent=0 // pred_check
    _
  $region15: #{transformer_forward.6} parent=0 // pred_check_branch
    %19 = sbr.rel (0) target = $region17
  $region16: #{transformer_forward.6} parent=0 // pred_region
    _
  $region17: #{transformer_forward.6} parent=0 // pred_fallthru
    _
  // Predicated region
  $region18: #{transformer_forward.6} parent=0 // pred_check
    _
  $region19: #{transformer_forward.6} parent=0 // pred_check_branch
    %21 = sbr.rel (0) target = $region21
  $region20: #{transformer_forward.6} parent=0 // pred_region
    _
  $region21: #{transformer_forward.6} parent=0 // pred_fallthru
    _
  // Predicated region
  $region22: #{transformer_forward.6} parent=0 // pred_check
    _
  $region23: #{transformer_forward.6} parent=0 // pred_check_branch
    %23 = sbr.rel (0) target = $region25
  $region24: #{transformer_forward.6} parent=0 // pred_region
    _
  $region25: #{transformer_forward.6} parent=0 // pred_fallthru
    _
  // Predicated region
  $region26: #{transformer_forward.6} parent=0 // pred_check
    _
  $region27: #{transformer_forward.6} parent=0 // pred_check_branch
    %25 = sbr.rel (0) target = $region29
  $region28: #{transformer_forward.6} parent=0 // pred_region
    _
  $region29: #{transformer_forward.6} parent=0 // pred_fallthru
    _
  %v27 = vld [vmem:[%s0] sm:$0xf]
  %v28 = vld [vmem:[%s0 + $0x4] sm:$0xf]
  %v29 = vunpack.c.l.bf16 %v27
  %v30 = vunpack.c.l.bf16 %v28
  %v31 = vld [vmem:[%s1] sm:$0xf]
  %v32 = vld [vmem:[%s1 + $0x4] sm:$0xf]
  %v33 = vld [vmem:[%s1 + $0x8] sm:$0xf]
  %v34 = vld [vmem:[%s1 + $0xc] sm:$0xf]
  %v35 = vld [vmem:[%s1 + $0x10] sm:$0xf]
  %v36 = vld [vmem:[%s1 + $0x14] sm:$0xf]
  %v37 = vld [vmem:[%s1 + $0x18] sm:$0xf]
  %v38 = vld [vmem:[%s1 + $0x1c] sm:$0xf]
  %v39 = vld [vmem:[%s1 + $0x20] sm:$0xf]
  %v40 = vld [vmem:[%s1 + $0x24] sm:$0xf]
  %v41 = vld [vmem:[%s1 + $0x28] sm:$0xf]
  %v42 = vld [vmem:[%s1 + $0x2c] sm:$0xf]
  %v43 = vld [vmem:[%s1 + $0x30] sm:$0xf]
  %v44 = vld [vmem:[%s1 + $0x34] sm:$0xf]
  %v45 = vld [vmem:[%s1 + $0x38] sm:$0xf]
  %v46 = vld [vmem:[%s1 + $0x3c] sm:$0xf]
  %v47 = vld [vmem:[%s2] sm:$0x1]
  %v49 = vlaneseq
  %v50 = vshrl.u32 %v49, 7
  %v51 = vsub.s32 0, %v50
  %v52 = vrot.slane %v47, %v51
  %v56 = vunpack.c.l.b16 %v27
  %v57 = vunpack.c.l.b16 %v28
  %v58 = vpack.c.b16 %v57, %v56
  %v76 = vunpack.c.l.b16 %v31
  %v77 = vunpack.c.l.b16 %v32
  %v78 = vunpack.c.l.b16 %v33
  %v79 = vunpack.c.l.b16 %v34
  %v80 = vunpack.c.l.b16 %v35
  %v81 = vunpack.c.l.b16 %v36
  %v82 = vunpack.c.l.b16 %v37
  %v83 = vunpack.c.l.b16 %v38
  %v84 = vunpack.c.l.b16 %v39
  %v85 = vunpack.c.l.b16 %v40
  %v86 = vunpack.c.l.b16 %v41
  %v87 = vunpack.c.l.b16 %v42
  %v88 = vunpack.c.l.b16 %v43
  %v89 = vunpack.c.l.b16 %v44
  %v90 = vunpack.c.l.b16 %v45
  %v91 = vunpack.c.l.b16 %v46
  %v92 = vpack.c.b16 %v77, %v76
  %v93 = vpack.c.b16 %v79, %v78
  %v94 = vpack.c.b16 %v81, %v80
  %v95 = vpack.c.b16 %v83, %v82
  %v96 = vpack.c.b16 %v85, %v84
  %v97 = vpack.c.b16 %v87, %v86
  %v98 = vpack.c.b16 %v89, %v88
  %v99 = vpack.c.b16 %v91, %v90
  %108 = vmatprep.subr.bf16.mxu0 0
  %109 = vmatpush1.bf16.msra.mxu0 %v92
  %110 = vmatprep.subr.bf16.mxu0 0
  %111 = vmatpush1.bf16.msra.mxu0 %v93
  %112 = vmatprep.subr.bf16.mxu0 0
  %113 = vmatpush1.bf16.msra.mxu0 %v94
  %114 = vmatprep.subr.bf16.mxu0 0
  %115 = vmatpush1.bf16.msra.mxu0 %v95
  %116 = vmatprep.subr.bf16.mxu0 0
  %117 = vmatpush1.bf16.msra.mxu0 %v96
  %118 = vmatprep.subr.bf16.mxu0 0
  %119 = vmatpush1.bf16.msra.mxu0 %v97
  %120 = vmatprep.subr.bf16.mxu0 0
  %121 = vmatpush1.bf16.msra.mxu0 %v98
  %122 = vmatprep.subr.bf16.mxu0 0
  %123 = vmatpush1.bf16.msra.mxu0 %v99
  %124 = vmatprep.subr.bf16.mxu0 0
  %125 = vmatpush1.bf16.msra.mxu0 0
  %126 = vmatprep.subr.bf16.mxu0 0
  %127 = vmatpush1.bf16.msra.mxu0 0
  %128 = vmatprep.subr.bf16.mxu0 0
  %129 = vmatpush1.bf16.msra.mxu0 0
  %130 = vmatprep.subr.bf16.mxu0 0
  %131 = vmatpush1.bf16.msra.mxu0 0
  %132 = vmatprep.subr.bf16.mxu0 0
  %133 = vmatpush1.bf16.msra.mxu0 0
  %134 = vmatprep.subr.bf16.mxu0 0
  %135 = vmatpush1.bf16.msra.mxu0 0
  %136 = vmatprep.subr.bf16.mxu0 0
  %137 = vmatpush1.bf16.msra.mxu0 0
  %138 = vmatprep.subr.bf16.mxu0 0
  %139 = vmatpush1.bf16.msra.mxu0 0
  %140 = vmatprep.mubr.bf16.mxu0 0
  %141 = vmatmul.mubr.bf16.gmra.mrb[0].mxu0 %v58
  %v142 = vpop.f32.mrb[0].mxu0
  %v143 = vadd.f32 %v52, %v142
  %v144 = vpop.f32.mrb[0].mxu0
  %v145 = vpop.f32.mrb[0].mxu0
  %v146 = vadd.f32 %v52, %v145
  %v147 = vpop.f32.mrb[0].mxu0
  %148 = vdwg.mxu0
  %v149 = vmax.f32 %v143, 0.0
  %v150 = vmax.f32 %v146, 0.0
  %v151 = vpack.c.bf16 %v150, %v149
  %v152 = vld [vmem:[%s3] sm:$0xf]
  %v153 = vld [vmem:[%s3 + $0x4] sm:$0xf]
  %v154 = vld [vmem:[%s3 + $0x8] sm:$0xf]
  %v155 = vld [vmem:[%s3 + $0xc] sm:$0xf]
  %v156 = vld [vmem:[%s3 + $0x10] sm:$0xf]
  %v157 = vld [vmem:[%s3 + $0x14] sm:$0xf]
  %v158 = vld [vmem:[%s3 + $0x18] sm:$0xf]
  %v159 = vld [vmem:[%s3 + $0x1c] sm:$0xf]
  %v160 = vld [vmem:[%s3 + $0x20] sm:$0xf]
  %v161 = vld [vmem:[%s3 + $0x24] sm:$0xf]
  %v162 = vld [vmem:[%s3 + $0x28] sm:$0xf]
  %v163 = vld [vmem:[%s3 + $0x2c] sm:$0xf]
  %v164 = vld [vmem:[%s3 + $0x30] sm:$0xf]
  %v165 = vld [vmem:[%s3 + $0x34] sm:$0xf]
  %v166 = vld [vmem:[%s3 + $0x38] sm:$0xf]
  %v167 = vld [vmem:[%s3 + $0x3c] sm:$0xf]
  %v168 = vld [vmem:[%s4] sm:$0x1]
  %v170 = vlaneseq
  %v171 = vshrl.u32 %v170, 7
  %v172 = vsub.s32 0, %v171
  %v173 = vrot.slane %v168, %v172
  %v191 = vunpack.c.l.b16 %v152
  %v192 = vunpack.c.l.b16 %v153
  %v193 = vunpack.c.l.b16 %v154
  %v194 = vunpack.c.l.b16 %v155
  %v195 = vunpack.c.l.b16 %v156
  %v196 = vunpack.c.l.b16 %v157
  %v197 = vunpack.c.l.b16 %v158
  %v198 = vunpack.c.l.b16 %v159
  %v199 = vunpack.c.l.b16 %v160
  %v200 = vunpack.c.l.b16 %v161
  %v201 = vunpack.c.l.b16 %v162
  %v202 = vunpack.c.l.b16 %v163
  %v203 = vunpack.c.l.b16 %v164
  %v204 = vunpack.c.l.b16 %v165
  %v205 = vunpack.c.l.b16 %v166
  %v206 = vunpack.c.l.b16 %v167
  %v207 = vpack.c.b16 %v192, %v191
  %v208 = vpack.c.b16 %v194, %v193
  %v209 = vpack.c.b16 %v196, %v195
  %v210 = vpack.c.b16 %v198, %v197
  %v211 = vpack.c.b16 %v200, %v199
  %v212 = vpack.c.b16 %v202, %v201
  %v213 = vpack.c.b16 %v204, %v203
  %v214 = vpack.c.b16 %v206, %v205
  %223 = vmatprep.subr.bf16.mxu0 0
  %224 = vmatpush1.bf16.msra.mxu0 %v207
  %225 = vmatprep.subr.bf16.mxu0 0
  %226 = vmatpush1.bf16.msra.mxu0 %v208
  %227 = vmatprep.subr.bf16.mxu0 0
  %228 = vmatpush1.bf16.msra.mxu0 %v209
  %229 = vmatprep.subr.bf16.mxu0 0
  %230 = vmatpush1.bf16.msra.mxu0 %v210
  %231 = vmatprep.subr.bf16.mxu0 0
  %232 = vmatpush1.bf16.msra.mxu0 %v211
  %233 = vmatprep.subr.bf16.mxu0 0
  %234 = vmatpush1.bf16.msra.mxu0 %v212
  %235 = vmatprep.subr.bf16.mxu0 0
  %236 = vmatpush1.bf16.msra.mxu0 %v213
  %237 = vmatprep.subr.bf16.mxu0 0
  %238 = vmatpush1.bf16.msra.mxu0 %v214
  %239 = vmatprep.subr.bf16.mxu0 0
  %240 = vmatpush1.bf16.msra.mxu0 0
  %241 = vmatprep.subr.bf16.mxu0 0
  %242 = vmatpush1.bf16.msra.mxu0 0
  %243 = vmatprep.subr.bf16.mxu0 0
  %244 = vmatpush1.bf16.msra.mxu0 0
  %245 = vmatprep.subr.bf16.mxu0 0
  %246 = vmatpush1.bf16.msra.mxu0 0
  %247 = vmatprep.subr.bf16.mxu0 0
  %248 = vmatpush1.bf16.msra.mxu0 0
  %249 = vmatprep.subr.bf16.mxu0 0
  %250 = vmatpush1.bf16.msra.mxu0 0
  %251 = vmatprep.subr.bf16.mxu0 0
  %252 = vmatpush1.bf16.msra.mxu0 0
  %253 = vmatprep.subr.bf16.mxu0 0
  %254 = vmatpush1.bf16.msra.mxu0 0
  %255 = vmatprep.mubr.bf16.mxu0 0
  %256 = vmatmul.mubr.bf16.gmra.mrb[0].mxu0 %v151
  %v257 = vpop.f32.mrb[0].mxu0
  %v258 = vadd.f32 %v173, %v257
  %v259 = vpop.f32.mrb[0].mxu0
  %v260 = vpop.f32.mrb[0].mxu0
  %v261 = vadd.f32 %v173, %v260
  %v262 = vpop.f32.mrb[0].mxu0
  %263 = vdwg.mxu0
  %v264 = vadd.f32 %v258, %v29
  %v265 = vadd.f32 %v261, %v30
  %266 = vadd.xlane.f32.xlu0 %v264
  %v267 = vpop.xlane.xlu0 %266
  %268 = vadd.xlane.f32.xlu0 %v265
  %v269 = vpop.xlane.xlu0 %268
  %v270 = vmul.f32 %v267, 0.03125
  %v271 = vmul.f32 %v269, 0.03125
  %v272 = vmul.f32 %v264, %v264
  %v273 = vmul.f32 %v265, %v265
  %274 = vadd.xlane.f32.xlu0 %v272
  %v275 = vpop.xlane.xlu0 %274
  %276 = vadd.xlane.f32.xlu0 %v273
  %v277 = vpop.xlane.xlu0 %276
  %v278 = vmul.f32 %v275, 0.03125
  %v279 = vmul.f32 %v277, 0.03125
  %v280 = vmul.f32 %v270, %v270
  %v281 = vmul.f32 %v271, %v271
  %v282 = vsub.f32 %v278, %v280
  %v283 = vsub.f32 %v279, %v281
  %v284 = vmax.f32 %v282, 0.0
  %v285 = vmax.f32 %v283, 0.0
  %v286 = vsub.f32 %v264, %v270
  %v287 = vsub.f32 %v265, %v271
  %v288 = vadd.f32 %v284, 1e-05
  %v289 = vadd.f32 %v285, 1e-05
  %v290 = vrsqrt.pop %v288
  %v291 = vrsqrt.pop %v289
  %v292 = vmul.f32 %v286, %v290
  %v293 = vmul.f32 %v287, %v291
  %v294 = vld [vmem:[%s5] sm:$0x1]
  %v296 = vlaneseq
  %v297 = vshrl.u32 %v296, 7
  %v298 = vsub.s32 0, %v297
  %v299 = vrot.slane %v294, %v298
  %v301 = vmul.f32 %v292, %v299
  %v302 = vmul.f32 %v293, %v299
  %v303 = vld [vmem:[%s6] sm:$0x1]
  %v305 = vlaneseq
  %v306 = vshrl.u32 %v305, 7
  %v307 = vsub.s32 0, %v306
  %v308 = vrot.slane %v303, %v307
  %v310 = vadd.f32 %v301, %v308
  %v311 = vadd.f32 %v302, %v308
  %v312 = vpack.c.bf16 %v311, %v310
  %v314 = vunpack.c.l.b16 %v312
  %v315 = vunpack.c.h.b16 %v312
  %v316 = vpack.c.b16 %v314, %v314
  %v317 = vpack.c.b16 %v315, %v315
  %320 = vst [vmem:[%s7] sm:$0xf] %v316
  %321 = vst [vmem:[%s7 + $0x4] sm:$0xf] %v317
  // Predicated region
  $region30: #{transformer_forward.6} parent=0 // pred_check
    _
  $region31: #{transformer_forward.6} parent=0 // pred_check_branch
    %323 = sbr.rel (0) target = $region33
  $region32: #{transformer_forward.6} parent=0 // pred_region
    _
  $region33: #{transformer_forward.6} parent=0 // pred_fallthru
    _
  // Predicated region
  $region34: #{transformer_forward.6} parent=0 // pred_check
    _
  $region35: #{transformer_forward.6} parent=0 // pred_check_branch
    %325 = sbr.rel (0) target = $region37
  $region36: #{transformer_forward.6} parent=0 // pred_region
    _
  $region37: #{transformer_forward.6} parent=0 // pred_fallthru
    _

// kernel: transformer_forward.7
$region0: #{transformer_forward.7}
  #allocation0 [shape = 'u32[]', space=smem, size = 0x4, offset = 0x4, fixed_abs, tag = 'smem constant byte address 0x4 - core index']
  #allocation1 [shape = 'u32[144,128]{1,0:T(1,128)}', space=vmem, size = 0x12000, scoped, tag = 'internal scratch']
  #allocation2 [shape = 'f32[8,128]{1,0:T(8,128)}', space=vmem, size = 0x1000, scoped, tag = 'scratch operand']
  %s0 = inlined_call_operand.vmem [shape: bf16[2,8,128], index: 0, kind: input, shape index: {}]
  %s1 = inlined_call_operand.vmem [shape: bf16[128,384], index: 1, kind: input, shape index: {}]
  %s2 = inlined_call_operand.vmem [shape: f32[1,384], index: 2, kind: input, shape index: {}]
  %s3 = inlined_call_operand.vmem [shape: bf16[128,128], index: 3, kind: input, shape index: {}]
  %s4 = inlined_call_operand.vmem [shape: f32[1,128], index: 4, kind: input, shape index: {}]
  %s5 = inlined_call_operand.vmem [shape: f32[1,128], index: 5, kind: input, shape index: {}]
  %s6 = inlined_call_operand.vmem [shape: f32[1,128], index: 6, kind: input, shape index: {}]
  %s7 = inlined_call_operand.vmem [shape: bf16[2,8,128], index: 7, kind: output, shape index: {}]
  %s8 = sld [smem:[#allocation0]]
  $region61: #{transformer_forward.7} parent=0
    _
  %s10 = ssub.s32 1, %s8
  %s11 = scalar_select 0, %s10, %s8
  loop: start=0, step=1, limit=4
  $region2: #{transformer_forward.7} parent=0 // loop_pre_header
    _
  $region3: #{transformer_forward.7} parent=0 // loop_header
    %s13 = sphi 0, %s17
    %p14 = scmp.ge.s32.totalorder %s13, 4
    %s23 = sphi 0, %s25
    %s26 = sphi 0, %s23
    %s27 = sphi 0, %s26
    %s43 = sphi 0, %s27
    %s47 = sphi 0, %s47
    %s49 = sphi 0, %s47
    %s50 = sphi 0, %s49
    %s64 = sphi 0, %s50
    %s68 = sphi 0, %s68
    %s70 = sphi 0, %s68
    %s71 = sphi 0, %s70
    %s85 = sphi 0, %s71
    %s89 = sphi 0, %s89
    %s91 = sphi 0, %s89
    %s92 = sphi 0, %s91
    %s106 = sphi 0, %s92
    %s110 = sphi 0, %s110
    %s112 = sphi 0, %s110
    %s113 = sphi 0, %s112
    %s127 = sphi 0, %s113
    %s131 = sphi 0, %s131
    %s133 = sphi 0, %s131
    %s134 = sphi 0, %s133
    %s148 = sphi 0, %s134
    %s152 = sphi 0, %s152
    %s154 = sphi 0, %s152
    %s155 = sphi 0, %s154
    %s169 = sphi 0, %s155
    %s175 = sphi 0, %s177
    %s178 = sphi 0, %s175
    %s179 = sphi 0, %s178
    %s195 = sphi 0, %s179
  $region4: #{transformer_forward.7} parent=0 // loop_header_branch
    %16 = sbr.rel (%p14) target = $region8
  $region5: #{transformer_forward.7} parent=0 // loop_body
    %s18 = ssub.s32 %s13, 1
    %s19 = ssub.s32 %s13, 2
    %s20 = sadd.s32 %s13, 1
    %s21 = ssub.s32 %s13, %s20
    %p22 = scmp.eq.s32.totalorder %s21, 0
    %s24 = sadd.s32 %s23, 1
    %s25 = scalar_select %p22, %s23, %s24
    %p28 = pneg %p22
    %p29 = scmp.eq.s32.totalorder %s13, 1
    %p30 = por %p28, %p29
    %p31 = scmp.ne.s32.totalorder %s23, %s26
    %p32 = scmp.eq.s32.totalorder %s13, 0
    %p33 = por %p31, %p32
    %p34 = scmp.ne.s32.totalorder %s23, %s26
    %p35 = scmp.eq.s32.totalorder %s18, 1
    %p36 = por %p34, %p35
    %p37 = scmp.ne.s32.totalorder %s26, %s27
    %p38 = scmp.eq.s32.totalorder %s18, 0
    %p39 = por %p37, %p38
    %p40 = scmp.ne.s32.totalorder %s26, %s27
    %p41 = scmp.eq.s32.totalorder %s19, 1
    %p42 = por %p40, %p41
    %p44 = scmp.ne.s32.totalorder %s27, %s43
    %p45 = scmp.eq.s32.totalorder %s19, 0
    %p46 = por %p44, %p45
    %s48 = sadd.s32 %s47, 1
    %p51 = scmp.eq.s32.totalorder %s13, 1
    %p52 = scmp.ne.s32.totalorder %s47, %s49
    %p53 = scmp.eq.s32.totalorder %s13, 0
    %p54 = por %p52, %p53
    %p55 = scmp.ne.s32.totalorder %s47, %s49
    %p56 = scmp.eq.s32.totalorder %s18, 1
    %p57 = por %p55, %p56
    %p58 = scmp.ne.s32.totalorder %s49, %s50
    %p59 = scmp.eq.s32.totalorder %s18, 0
    %p60 = por %p58, %p59
    %p61 = scmp.ne.s32.totalorder %s49, %s50
    %p62 = scmp.eq.s32.totalorder %s19, 1
    %p63 = por %p61, %p62
    %p65 = scmp.ne.s32.totalorder %s50, %s64
    %p66 = scmp.eq.s32.totalorder %s19, 0
    %p67 = por %p65, %p66
    %s69 = sadd.s32 %s68, 1
    %p72 = scmp.eq.s32.totalorder %s13, 1
    %p73 = scmp.ne.s32.totalorder %s68, %s70
    %p74 = scmp.eq.s32.totalorder %s13, 0
    %p75 = por %p73, %p74
    %p76 = scmp.ne.s32.totalorder %s68, %s70
    %p77 = scmp.eq.s32.totalorder %s18, 1
    %p78 = por %p76, %p77
    %p79 = scmp.ne.s32.totalorder %s70, %s71
    %p80 = scmp.eq.s32.totalorder %s18, 0
    %p81 = por %p79, %p80
    %p82 = scmp.ne.s32.totalorder %s70, %s71
    %p83 = scmp.eq.s32.totalorder %s19, 1
    %p84 = por %p82, %p83
    %p86 = scmp.ne.s32.totalorder %s71, %s85
    %p87 = scmp.eq.s32.totalorder %s19, 0
    %p88 = por %p86, %p87
    %s90 = sadd.s32 %s89, 1
    %p93 = scmp.eq.s32.totalorder %s13, 1
    %p94 = scmp.ne.s32.totalorder %s89, %s91
    %p95 = scmp.eq.s32.totalorder %s13, 0
    %p96 = por %p94, %p95
    %p97 = scmp.ne.s32.totalorder %s89, %s91
    %p98 = scmp.eq.s32.totalorder %s18, 1
    %p99 = por %p97, %p98
    %p100 = scmp.ne.s32.totalorder %s91, %s92
    %p101 = scmp.eq.s32.totalorder %s18, 0
    %p102 = por %p100, %p101
    %p103 = scmp.ne.s32.totalorder %s91, %s92
    %p104 = scmp.eq.s32.totalorder %s19, 1
    %p105 = por %p103, %p104
    %p107 = scmp.ne.s32.totalorder %s92, %s106
    %p108 = scmp.eq.s32.totalorder %s19, 0
    %p109 = por %p107, %p108
    %s111 = sadd.s32 %s110, 1
    %p114 = scmp.eq.s32.totalorder %s13, 1
    %p115 = scmp.ne.s32.totalorder %s110, %s112
    %p116 = scmp.eq.s32.totalorder %s13, 0
    %p117 = por %p115, %p116
    %p118 = scmp.ne.s32.totalorder %s110, %s112
    %p119 = scmp.eq.s32.totalorder %s18, 1
    %p120 = por %p118, %p119
    %p121 = scmp.ne.s32.totalorder %s112, %s113
    %p122 = scmp.eq.s32.totalorder %s18, 0
    %p123 = por %p121, %p122
    %p124 = scmp.ne.s32.totalorder %s112, %s113
    %p125 = scmp.eq.s32.totalorder %s19, 1
    %p126 = por %p124, %p125
    %p128 = scmp.ne.s32.totalorder %s113, %s127
    %p129 = scmp.eq.s32.totalorder %s19, 0
    %p130 = por %p128, %p129
    %s132 = sadd.s32 %s131, 1
    %p135 = scmp.eq.s32.totalorder %s13, 1
    %p136 = scmp.ne.s32.totalorder %s131, %s133
    %p137 = scmp.eq.s32.totalorder %s13, 0
    %p138 = por %p136, %p137
    %p139 = scmp.ne.s32.totalorder %s131, %s133
    %p140 = scmp.eq.s32.totalorder %s18, 1
    %p141 = por %p139, %p140
    %p142 = scmp.ne.s32.totalorder %s133, %s134
    %p143 = scmp.eq.s32.totalorder %s18, 0
    %p144 = por %p142, %p143
    %p145 = scmp.ne.s32.totalorder %s133, %s134
    %p146 = scmp.eq.s32.totalorder %s19, 1
    %p147 = por %p145, %p146
    %p149 = scmp.ne.s32.totalorder %s134, %s148
    %p150 = scmp.eq.s32.totalorder %s19, 0
    %p151 = por %p149, %p150
    %s153 = sadd.s32 %s152, 1
    %p156 = scmp.eq.s32.totalorder %s13, 1
    %p157 = scmp.ne.s32.totalorder %s152, %s154
    %p158 = scmp.eq.s32.totalorder %s13, 0
    %p159 = por %p157, %p158
    %p160 = scmp.ne.s32.totalorder %s152, %s154
    %p161 = scmp.eq.s32.totalorder %s18, 1
    %p162 = por %p160, %p161
    %p163 = scmp.ne.s32.totalorder %s154, %s155
    %p164 = scmp.eq.s32.totalorder %s18, 0
    %p165 = por %p163, %p164
    %p166 = scmp.ne.s32.totalorder %s154, %s155
    %p167 = scmp.eq.s32.totalorder %s19, 1
    %p168 = por %p166, %p167
    %p170 = scmp.ne.s32.totalorder %s155, %s169
    %p171 = scmp.eq.s32.totalorder %s19, 0
    %p172 = por %p170, %p171
    %s173 = ssub.s32 %s13, %s20
    %p174 = scmp.eq.s32.totalorder %s173, 0
    %s176 = sadd.s32 %s175, 1
    %s177 = scalar_select %p174, %s175, %s176
    %p180 = pneg %p174
    %p181 = scmp.eq.s32.totalorder %s13, 1
    %p182 = por %p180, %p181
    %p183 = scmp.ne.s32.totalorder %s175, %s178
    %p184 = scmp.eq.s32.totalorder %s13, 0
    %p185 = por %p183, %p184
    %p186 = scmp.ne.s32.totalorder %s175, %s178
    %p187 = scmp.eq.s32.totalorder %s18, 1
    %p188 = por %p186, %p187
    %p189 = scmp.ne.s32.totalorder %s178, %s179
    %p190 = scmp.eq.s32.totalorder %s18, 0
    %p191 = por %p189, %p190
    %p192 = scmp.ne.s32.totalorder %s178, %s179
    %p193 = scmp.eq.s32.totalorder %s19, 1
    %p194 = por %p192, %p193
    %p196 = scmp.ne.s32.totalorder %s179, %s195
    %p197 = scmp.eq.s32.totalorder %s19, 0
    %p198 = por %p196, %p197
    %p199 = scmp.le.s32.totalorder 1, %s13
    %p200 = scmp.lt.s32.totalorder %s13, 3
    %p201 = pnand %p199, %p200
    %p202 = pneg %p201
    // Predicated region
    $region9: #{transformer_forward.7} parent=5 // pred_check
      _
    $region10: #{transformer_forward.7} parent=5 // pred_check_branch
      %204 = sbr.rel (%p201) target = $region12
    $region11: #{transformer_forward.7} parent=5 // pred_region
      %s205 = ssub.s32 %s13, 1
      // Predicated region
      $region13: #{transformer_forward.7} parent=11 // pred_check
        %p206 = pneg %p60
      $region14: #{transformer_forward.7} parent=11 // pred_check_branch
        %208 = sbr.rel (%p206) target = $region16
      $region15: #{transformer_forward.7} parent=11 // pred_region
        _
      $region16: #{transformer_forward.7} parent=11 // pred_fallthru
        _
      // Predicated region
      $region17: #{transformer_forward.7} parent=11 // pred_check
        %p209 = pneg %p81
      $region18: #{transformer_forward.7} parent=11 // pred_check_branch
        %211 = sbr.rel (%p209) target = $region20
      $region19: #{transformer_forward.7} parent=11 // pred_region
        _
      $region20: #{transformer_forward.7} parent=11 // pred_fallthru
        _
      // Predicated region
      $region21: #{transformer_forward.7} parent=11 // pred_check
        %p212 = pneg %p102
      $region22: #{transformer_forward.7} parent=11 // pred_check_branch
        %214 = sbr.rel (%p212) target = $region24
      $region23: #{transformer_forward.7} parent=11 // pred_region
        _
      $region24: #{transformer_forward.7} parent=11 // pred_fallthru
        _
      // Predicated region
      $region25: #{transformer_forward.7} parent=11 // pred_check
        %p215 = pneg %p123
      $region26: #{transformer_forward.7} parent=11 // pred_check_branch
        %217 = sbr.rel (%p215) target = $region28
      $region27: #{transformer_forward.7} parent=11 // pred_region
        _
      $region28: #{transformer_forward.7} parent=11 // pred_fallthru
        _
      // Predicated region
      $region29: #{transformer_forward.7} parent=11 // pred_check
        %p218 = pneg %p144
      $region30: #{transformer_forward.7} parent=11 // pred_check_branch
        %220 = sbr.rel (%p218) target = $region32
      $region31: #{transformer_forward.7} parent=11 // pred_region
        _
      $region32: #{transformer_forward.7} parent=11 // pred_fallthru
        _
      // Predicated region
      $region33: #{transformer_forward.7} parent=11 // pred_check
        %p221 = pneg %p165
      $region34: #{transformer_forward.7} parent=11 // pred_check_branch
        %223 = sbr.rel (%p221) target = $region36
      $region35: #{transformer_forward.7} parent=11 // pred_region
        _
      $region36: #{transformer_forward.7} parent=11 // pred_fallthru
        _
    $region12: #{transformer_forward.7} parent=5 // pred_fallthru
      _
    %p224 = scmp.lt.s32.totalorder %s13, 2
    // Predicated region
    $region37: #{transformer_forward.7} parent=5 // pred_check
      %p225 = pneg %p224
    $region38: #{transformer_forward.7} parent=5 // pred_check_branch
      %227 = sbr.rel (%p225) target = $region40
    $region39: #{transformer_forward.7} parent=5 // pred_region
      // Predicated region
      $region41: #{transformer_forward.7} parent=39 // pred_check
        %p228 = pneg %p33
      $region42: #{transformer_forward.7} parent=39 // pred_check_branch
        %230 = sbr.rel (%p228) target = $region44
      $region43: #{transformer_forward.7} parent=39 // pred_region
        %p231 = scmp.lt.s32.totalorder %s13, 1
        %s232 = scalar_select %p231, %s13, 1
        %s233 = smul.addr %s232, 4
        %s234 = scalar_lea.vmem %s0, %s233
      $region44: #{transformer_forward.7} parent=39 // pred_fallthru
        _
    $region40: #{transformer_forward.7} parent=5 // pred_fallthru
      _
    %p235 = scmp.le.s32.totalorder 1, %s13
    %p236 = scmp.lt.s32.totalorder %s13, 3
    %p237 = pnand %p235, %p236
    %p238 = pneg %p237
    // Predicated region
    $region45: #{transformer_forward.7} parent=5 // pred_check
      _
    $region46: #{transformer_forward.7} parent=5 // pred_check_branch
      %240 = sbr.rel (%p237) target = $region48
    $region47: #{transformer_forward.7} parent=5 // pred_region
      %s241 = ssub.s32 %s13, 1
      %p242 = scmp.lt.s32.totalorder %s18, 1
      %s243 = scalar_select %p242, %s18, 1
      %s244 = smul.addr %s243, 4
      %s245 = scalar_lea.vmem %s0, %s244
      %p246 = pneg %p39
      %p247 = pneg %p36
      %p248 = pneg %p60
      %p249 = pneg %p57
      %p250 = pneg %p81
      %p251 = pneg %p78
      %p252 = pneg %p102
      %p253 = pneg %p99
      %p254 = pneg %p123
      %p255 = pneg %p120
      %p256 = pneg %p144
      %p257 = pneg %p141
      %p258 = pneg %p165
      %p259 = pneg %p162
      %p260 = pneg %p191
      %p261 = pneg %p188
      %p262 = scmp.lt.s32.totalorder %s18, 1
      %s263 = scalar_select %p262, %s18, 1
      %s264 = smul.addr %s263, 4
      %s265 = scalar_lea.vmem %s7, %s264
      %p266 = scmp.lt.s32.totalorder %s18, 1
      %s267 = scalar_select %p266, %s18, 1
      %s268 = smul.addr %s267, 4
      %s269 = scalar_lea.vmem %s0, %s268
      %p270 = scmp.lt.s32.totalorder %s18, 1
      %s271 = scalar_select %p270, %s18, 1
      %s272 = smul.addr %s271, 4
      %s273 = scalar_lea.vmem %s7, %s272
      %v275 = vld [vmem:[%s269] sm:$0xf]
      %v276 = vunpack.c.l.bf16 %v275
      %v277 = vld [vmem:[%s1] sm:$0xff]
      %v278 = vld [vmem:[%s1 + $0x8] sm:$0xf]
      %v279 = vld [vmem:[%s1 + $0xc] sm:$0xff]
      %v280 = vld [vmem:[%s1 + $0x14] sm:$0xf]
      %v281 = vld [vmem:[%s1 + $0x18] sm:$0xff]
      %v282 = vld [vmem:[%s1 + $0x20] sm:$0xf]
      %v283 = vld [vmem:[%s1 + $0x24] sm:$0xff]
      %v284 = vld [vmem:[%s1 + $0x2c] sm:$0xf]
      %v285 = vld [vmem:[%s1 + $0x30] sm:$0xff]
      %v286 = vld [vmem:[%s1 + $0x38] sm:$0xf]
      %v287 = vld [vmem:[%s1 + $0x3c] sm:$0xff]
      %v288 = vld [vmem:[%s1 + $0x44] sm:$0xf]
      %v289 = vld [vmem:[%s1 + $0x48] sm:$0xff]
      %v290 = vld [vmem:[%s1 + $0x50] sm:$0xf]
      %v291 = vld [vmem:[%s1 + $0x54] sm:$0xff]
      %v292 = vld [vmem:[%s1 + $0x5c] sm:$0xf]
      %v293 = vld [vmem:[%s1 + $0x60] sm:$0xff]
      %v294 = vld [vmem:[%s1 + $0x68] sm:$0xf]
      %v295 = vld [vmem:[%s1 + $0x6c] sm:$0xff]
      %v296 = vld [vmem:[%s1 + $0x74] sm:$0xf]
      %v297 = vld [vmem:[%s1 + $0x78] sm:$0xff]
      %v298 = vld [vmem:[%s1 + $0x80] sm:$0xf]
      %v299 = vld [vmem:[%s1 + $0x84] sm:$0xff]
      %v300 = vld [vmem:[%s1 + $0x8c] sm:$0xf]
      %v301 = vld [vmem:[%s1 + $0x90] sm:$0xff]
      %v302 = vld [vmem:[%s1 + $0x98] sm:$0xf]
      %v303 = vld [vmem:[%s1 + $0x9c] sm:$0xff]
      %v304 = vld [vmem:[%s1 + $0xa4] sm:$0xf]
      %v305 = vld [vmem:[%s1 + $0xa8] sm:$0xff]
      %v306 = vld [vmem:[%s1 + $0xb0] sm:$0xf]
      %v307 = vld [vmem:[%s1 + $0xb4] sm:$0xff]
      %v308 = vld [vmem:[%s1 + $0xbc] sm:$0xf]
      %v309 = vld [vmem:[%s2] sm:$0x7]
      %v311 = vlaneseq
      %v312 = vshrl.u32 %v311, 7
      %v313 = vsub.s32 0, %v312
      %v314 = vrot.slane %v309, %v313
      %v315 = vlaneseq
      %v316 = vshrl.u32 %v315, 7
      %v317 = vsub.s32 1, %v316
      %v318 = vrot.slane %v309, %v317
      %v319 = vlaneseq
      %v320 = vshrl.u32 %v319, 7
      %v321 = vsub.s32 2, %v320
      %v322 = vrot.slane %v309, %v321
      %v358 = vunpack.c.l.b16 %v277
      %v359 = vunpack.c.h.b16 %v277
      %v360 = vunpack.c.l.b16 %v278
      %v361 = vunpack.c.l.b16 %v279
      %v362 = vunpack.c.h.b16 %v279
      %v363 = vunpack.c.l.b16 %v280
      %v364 = vunpack.c.l.b16 %v281
      %v365 = vunpack.c.h.b16 %v281
      %v366 = vunpack.c.l.b16 %v282
      %v367 = vunpack.c.l.b16 %v283
      %v368 = vunpack.c.h.b16 %v283
      %v369 = vunpack.c.l.b16 %v284
      %v370 = vunpack.c.l.b16 %v285
      %v371 = vunpack.c.h.b16 %v285
      %v372 = vunpack.c.l.b16 %v286
      %v373 = vunpack.c.l.b16 %v287
      %v374 = vunpack.c.h.b16 %v287
      %v375 = vunpack.c.l.b16 %v288
      %v376 = vunpack.c.l.b16 %v289
      %v377 = vunpack.c.h.b16 %v289
      %v378 = vunpack.c.l.b16 %v290
      %v379 = vunpack.c.l.b16 %v291
      %v380 = vunpack.c.h.b16 %v291
      %v381 = vunpack.c.l.b16 %v292
      %v382 = vunpack.c.l.b16 %v293
      %v383 = vunpack.c.h.b16 %v293
      %v384 = vunpack.c.l.b16 %v294
      %v385 = vunpack.c.l.b16 %v295
      %v386 = vunpack.c.h.b16 %v295
      %v387 = vunpack.c.l.b16 %v296
      %v388 = vunpack.c.l.b16 %v297
      %v389 = vunpack.c.h.b16 %v297
      %v390 = vunpack.c.l.b16 %v298
      %v391 = vunpack.c.l.b16 %v299
      %v392 = vunpack.c.h.b16 %v299
      %v393 = vunpack.c.l.b16 %v300
      %v394 = vunpack.c.l.b16 %v301
      %v395 = vunpack.c.h.b16 %v301
      %v396 = vunpack.c.l.b16 %v302
      %v397 = vunpack.c.l.b16 %v303
      %v398 = vunpack.c.h.b16 %v303
      %v399 = vunpack.c.l.b16 %v304
      %v400 = vunpack.c.l.b16 %v305
      %v401 = vunpack.c.h.b16 %v305
      %v402 = vunpack.c.l.b16 %v306
      %v403 = vunpack.c.l.b16 %v307
      %v404 = vunpack.c.h.b16 %v307
      %v405 = vunpack.c.l.b16 %v308
      %v406 = vpack.c.b16 %v361, %v358
      %v407 = vpack.c.b16 %v362, %v359
      %v408 = vpack.c.b16 %v363, %v360
      %v409 = vpack.c.b16 %v367, %v364
      %v410 = vpack.c.b16 %v368, %v365
      %v411 = vpack.c.b16 %v369, %v366
      %v412 = vpack.c.b16 %v373, %v370
      %v413 = vpack.c.b16 %v374, %v371
      %v414 = vpack.c.b16 %v375, %v372
      %v415 = vpack.c.b16 %v379, %v376
      %v416 = vpack.c.b16 %v380, %v377
      %v417 = vpack.c.b16 %v381, %v378
      %v418 = vpack.c.b16 %v385, %v382
      %v419 = vpack.c.b16 %v386, %v383
      %v420 = vpack.c.b16 %v387, %v384
      %v421 = vpack.c.b16 %v391, %v388
      %v422 = vpack.c.b16 %v392, %v389
      %v423 = vpack.c.b16 %v393, %v390
      %v424 = vpack.c.b16 %v397, %v394
      %v425 = vpack.c.b16 %v398, %v395
      %v426 = vpack.c.b16 %v399, %v396
      %v427 = vpack.c.b16 %v403, %v400
      %v428 = vpack.c.b16 %v404, %v401
      %v429 = vpack.c.b16 %v405, %v402
      %454 = vmatprep.subr.bf16.mxu0 %v407
      %455 = vmatpush1.bf16.msra.mxu0 %v406
      %456 = vmatprep.subr.bf16.mxu0 %v410
      %457 = vmatpush1.bf16.msra.mxu0 %v409
      %458 = vmatprep.subr.bf16.mxu0 %v413
      %459 = vmatpush1.bf16.msra.mxu0 %v412
      %460 = vmatprep.subr.bf16.mxu0 %v416
      %461 = vmatpush1.bf16.msra.mxu0 %v415
      %462 = vmatprep.subr.bf16.mxu0 %v419
      %463 = vmatpush1.bf16.msra.mxu0 %v418
      %464 = vmatprep.subr.bf16.mxu0 %v422
      %465 = vmatpush1.bf16.msra.mxu0 %v421
      %466 = vmatprep.subr.bf16.mxu0 %v425
      %467 = vmatpush1.bf16.msra.mxu0 %v424
      %468 = vmatprep.subr.bf16.mxu0 %v428
      %469 = vmatpush1.bf16.msra.mxu0 %v427
      %470 = vmatprep.subr.bf16.mxu0 0
      %471 = vmatpush1.bf16.msra.mxu0 0
      %472 = vmatprep.subr.bf16.mxu0 0
      %473 = vmatpush1.bf16.msra.mxu0 0
      %474 = vmatprep.subr.bf16.mxu0 0
      %475 = vmatpush1.bf16.msra.mxu0 0
      %476 = vmatprep.subr.bf16.mxu0 0
      %477 = vmatpush1.bf16.msra.mxu0 0
      %478 = vmatprep.subr.bf16.mxu0 0
      %479 = vmatpush1.bf16.msra.mxu0 0
      %480 = vmatprep.subr.bf16.mxu0 0
      %481 = vmatpush1.bf16.msra.mxu0 0
      %482 = vmatprep.subr.bf16.mxu0 0
      %483 = vmatpush1.bf16.msra.mxu0 0
      %484 = vmatprep.subr.bf16.mxu0 0
      %485 = vmatpush1.bf16.msra.mxu0 0
      %486 = vmatprep.mubr.bf16.mxu0 0
      %487 = vmatmul.mubr.bf16.gmra.mrb[0].mxu0 %v275
      %v488 = vpop.f32.mrb[0].mxu0
      %v489 = vadd.f32 %v314, %v488
      %v490 = vpop.f32.mrb[0].mxu0
      %v491 = vadd.f32 %v318, %v490
      %v492 = vpop.f32.mrb[0].mxu0
      %v493 = vpop.f32.mrb[0].mxu0
      %494 = vdwg.mxu0
      %495 = vmatprep.subr.bf16.mxu0 0
      %496 = vmatpush1.bf16.msra.mxu0 %v408
      %497 = vmatprep.subr.bf16.mxu0 0
      %498 = vmatpush1.bf16.msra.mxu0 %v411
      %499 = vmatprep.subr.bf16.mxu0 0
      %500 = vmatpush1.bf16.msra.mxu0 %v414
      %501 = vmatprep.subr.bf16.mxu0 0
      %502 = vmatpush1.bf16.msra.mxu0 %v417
      %503 = vmatprep.subr.bf16.mxu0 0
      %504 = vmatpush1.bf16.msra.mxu0 %v420
      %505 = vmatprep.subr.bf16.mxu0 0
      %506 = vmatpush1.bf16.msra.mxu0 %v423
      %507 = vmatprep.subr.bf16.mxu0 0
      %508 = vmatpush1.bf16.msra.mxu0 %v426
      %509 = vmatprep.subr.bf16.mxu0 0
      %510 = vmatpush1.bf16.msra.mxu0 %v429
      %511 = vmatprep.subr.bf16.mxu0 0
      %512 = vmatpush1.bf16.msra.mxu0 0
      %513 = vmatprep.subr.bf16.mxu0 0
      %514 = vmatpush1.bf16.msra.mxu0 0
      %515 = vmatprep.subr.bf16.mxu0 0
      %516 = vmatpush1.bf16.msra.mxu0 0
      %517 = vmatprep.subr.bf16.mxu0 0
      %518 = vmatpush1.bf16.msra.mxu0 0
      %519 = vmatprep.subr.bf16.mxu0 0
      %520 = vmatpush1.bf16.msra.mxu0 0
      %521 = vmatprep.subr.bf16.mxu0 0
      %522 = vmatpush1.bf16.msra.mxu0 0
      %523 = vmatprep.subr.bf16.mxu0 0
      %524 = vmatpush1.bf16.msra.mxu0 0
      %525 = vmatprep.subr.bf16.mxu0 0
      %526 = vmatpush1.bf16.msra.mxu0 0
      %527 = vmatprep.mubr.bf16.mxu0 0
      %528 = vmatmul.mubr.bf16.gmra.mrb[0].mxu0 %v275
      %v529 = vpop.f32.mrb[0].mxu0
      %v530 = vadd.f32 %v322, %v529
      %v531 = vpop.f32.mrb[0].mxu0
      %v532 = vpop.f32.mrb[0].mxu0
      %v533 = vpop.f32.mrb[0].mxu0
      %534 = vdwg.mxu0
      %v535 = vpack.c.bf16 %v489, %v489
      %v536 = vpack.c.bf16 %v491, %v491
      %v537 = vpack.c.bf16 %v530, %v530
      %vm538 = vcmask 261120
      %v540 = vsel %vm538, %v535, 0
      %v543 = vsel %vm538, %v536, 0
      %545 = vmatprep.subr.bf16.mxu0 0
      %546 = vmatpush1.bf16.xpose.msra.mxu0 %v543
      %547 = vmatprep.subr.bf16.mxu0 0
      %548 = vmatpush1.bf16.xpose.msra.mxu0 0
      %549 = vmatprep.subr.bf16.mxu0 0
      %550 = vmatpush1.bf16.xpose.msra.mxu0 0
      %551 = vmatprep.subr.bf16.mxu0 0
      %552 = vmatpush1.bf16.xpose.msra.mxu0 0
      %553 = vmatprep.subr.bf16.mxu0 0
      %554 = vmatpush1.bf16.xpose.msra.mxu0 0
      %555 = vmatprep.subr.bf16.mxu0 0
      %556 = vmatpush1.bf16.xpose.msra.mxu0 0
      %557 = vmatprep.subr.bf16.mxu0 0
      %558 = vmatpush1.bf16.xpose.msra.mxu0 0
      %559 = vmatprep.subr.bf16.mxu0 0
      %560 = vmatpush1.bf16.xpose.msra.mxu0 0
      %561 = vmatprep.subr.bf16.mxu0 0
      %562 = vmatpush1.bf16.xpose.msra.mxu0 0
      %563 = vmatprep.subr.bf16.mxu0 0
      %564 = vmatpush1.bf16.xpose.msra.mxu0 0
      %565 = vmatprep.subr.bf16.mxu0 0
      %566 = vmatpush1.bf16.xpose.msra.mxu0 0
      %567 = vmatprep.subr.bf16.mxu0 0
      %568 = vmatpush1.bf16.xpose.msra.mxu0 0
      %569 = vmatprep.subr.bf16.mxu0 0
      %570 = vmatpush1.bf16.xpose.msra.mxu0 0
      %571 = vmatprep.subr.bf16.mxu0 0
      %572 = vmatpush1.bf16.xpose.msra.mxu0 0
      %573 = vmatprep.subr.bf16.mxu0 0
      %574 = vmatpush1.bf16.xpose.msra.mxu0 0
      %575 = vmatprep.subr.bf16.mxu0 0
      %576 = vmatpush1.bf16.xpose.msra.mxu0 0
      %577 = vmatprep.mubr.bf16.mxu0 0
      %578 = vmatmul.mubr.bf16.gmra.mrb[0].mxu0 %v540
      %v579 = vpop.f32.mrb[0].mxu0
      %v580 = vadd.f32 0.0, %v579
      %v581 = vpop.f32.mrb[0].mxu0
      %v582 = vpop.f32.mrb[0].mxu0
      %v583 = vpop.f32.mrb[0].mxu0
      %584 = vdwg.mxu0
      %vm585 = vcmask 64512
      %v586 = vsel %vm585, %v580, -inf
      %587 = vmax.xlane.f32.xlu0 %v586
      %v588 = vpop.xlane.xlu0 %587
      %v589 = vsub.f32 %v580, %v588
      %v590 = vmul.f32 %v589, 1.442695
      %v591 = vpow.pop %v590
      %v592 = vsel %vm585, %v591, 0.0
      %593 = vadd.xlane.f32.xlu0 %v592
      %v594 = vpop.xlane.xlu0 %593
      %v595 = vrcp.pop %v594
      %v596 = vmul.f32 %v591, %v595
      %v597 = vpack.c.bf16 %v596, %v596
      %v599 = vsel %vm585, %v597, 0
      %vm601 = vcmask 1043456
      %v603 = vsel %vm601, %v537, 0
      %605 = vmatprep.subr.bf16.mxu0 0
      %606 = vmatpush1.bf16.msra.mxu0 %v603
      %607 = vmatprep.subr.bf16.mxu0 0
      %608 = vmatpush1.bf16.msra.mxu0 0
      %609 = vmatprep.subr.bf16.mxu0 0
      %610 = vmatpush1.bf16.msra.mxu0 0
      %611 = vmatprep.subr.bf16.mxu0 0
      %612 = vmatpush1.bf16.msra.mxu0 0
      %613 = vmatprep.subr.bf16.mxu0 0
      %614 = vmatpush1.bf16.msra.mxu0 0
      %615 = vmatprep.subr.bf16.mxu0 0
      %616 = vmatpush1.bf16.msra.mxu0 0
      %617 = vmatprep.subr.bf16.mxu0 0
      %618 = vmatpush1.bf16.msra.mxu0 0
      %619 = vmatprep.subr.bf16.mxu0 0
      %620 = vmatpush1.bf16.msra.mxu0 0
      %621 = vmatprep.subr.bf16.mxu0 0
      %622 = vmatpush1.bf16.msra.mxu0 0
      %623 = vmatprep.subr.bf16.mxu0 0
      %624 = vmatpush1.bf16.msra.mxu0 0
      %625 = vmatprep.subr.bf16.mxu0 0
      %626 = vmatpush1.bf16.msra.mxu0 0
      %627 = vmatprep.subr.bf16.mxu0 0
      %628 = vmatpush1.bf16.msra.mxu0 0
      %629 = vmatprep.subr.bf16.mxu0 0
      %630 = vmatpush1.bf16.msra.mxu0 0
      %631 = vmatprep.subr.bf16.mxu0 0
      %632 = vmatpush1.bf16.msra.mxu0 0
      %633 = vmatprep.subr.bf16.mxu0 0
      %634 = vmatpush1.bf16.msra.mxu0 0
      %635 = vmatprep.subr.bf16.mxu0 0
      %636 = vmatpush1.bf16.msra.mxu0 0
      %637 = vmatprep.mubr.bf16.mxu0 0
      %638 = vmatmul.mubr.bf16.gmra.mrb[0].mxu0 %v599
      %v639 = vpop.f32.mrb[0].mxu0
      %v640 = vadd.f32 0.0, %v639
      %v641 = vpop.f32.mrb[0].mxu0
      %v642 = vpop.f32.mrb[0].mxu0
      %v643 = vpop.f32.mrb[0].mxu0
      %644 = vdwg.mxu0
      %645 = vst.msk [vmem:[#allocation2] sm:$0xff] %vm538, %v640
      %647 = vrot.lane.b32.xlu0 %v535, 96
      %v648 = vpop.permute.xlu0 %647
      %650 = vrot.lane.b32.xlu0 %v536, 96
      %v651 = vpop.permute.xlu0 %650
      %v653 = vsel %vm538, %v648, 0
      %v656 = vsel %vm538, %v651, 0
      %658 = vmatprep.subr.bf16.mxu0 0
      %659 = vmatpush1.bf16.xpose.msra.mxu0 %v656
      %660 = vmatprep.subr.bf16.mxu0 0
      %661 = vmatpush1.bf16.xpose.msra.mxu0 0
      %662 = vmatprep.subr.bf16.mxu0 0
      %663 = vmatpush1.bf16.xpose.msra.mxu0 0
      %664 = vmatprep.subr.bf16.mxu0 0
      %665 = vmatpush1.bf16.xpose.msra.mxu0 0
      %666 = vmatprep.subr.bf16.mxu0 0
      %667 = vmatpush1.bf16.xpose.msra.mxu0 0
      %668 = vmatprep.subr.bf16.mxu0 0
      %669 = vmatpush1.bf16.xpose.msra.mxu0 0
      %670 = vmatprep.subr.bf16.mxu0 0
      %671 = vmatpush1.bf16.xpose.msra.mxu0 0
      %672 = vmatprep.subr.bf16.mxu0 0
      %673 = vmatpush1.bf16.xpose.msra.mxu0 0
      %674 = vmatprep.subr.bf16.mxu0 0
      %675 = vmatpush1.bf16.xpose.msra.mxu0 0
      %676 = vmatprep.subr.bf16.mxu0 0
      %677 = vmatpush1.bf16.xpose.msra.mxu0 0
      %678 = vmatprep.subr.bf16.mxu0 0
      %679 = vmatpush1.bf16.xpose.msra.mxu0 0
      %680 = vmatprep.subr.bf16.mxu0 0
      %681 = vmatpush1.bf16.xpose.msra.mxu0 0
      %682 = vmatprep.subr.bf16.mxu0 0
      %683 = vmatpush1.bf16.xpose.msra.mxu0 0
      %684 = vmatprep.subr.bf16.mxu0 0
      %685 = vmatpush1.bf16.xpose.msra.mxu0 0
      %686 = vmatprep.subr.bf16.mxu0 0
      %687 = vmatpush1.bf16.xpose.msra.mxu0 0
      %688 = vmatprep.subr.bf16.mxu0 0
      %689 = vmatpush1.bf16.xpose.msra.mxu0 0
      %690 = vmatprep.mubr.bf16.mxu0 0
      %691 = vmatmul.mubr.bf16.gmra.mrb[0].mxu0 %v653
      %v692 = vpop.f32.mrb[0].mxu0
      %v693 = vadd.f32 0.0, %v692
      %v694 = vpop.f32.mrb[0].mxu0
      %v695 = vpop.f32.mrb[0].mxu0
      %v696 = vpop.f32.mrb[0].mxu0
      %697 = vdwg.mxu0
      %v698 = vsel %vm585, %v693, -inf
      %699 = vmax.xlane.f32.xlu0 %v698
      %v700 = vpop.xlane.xlu0 %699
      %v701 = vsub.f32 %v693, %v700
      %v702 = vmul.f32 %v701, 1.442695
      %v703 = vpow.pop %v702
      %v704 = vsel %vm585, %v703, 0.0
      %705 = vadd.xlane.f32.xlu0 %v704
      %v706 = vpop.xlane.xlu0 %705
      %v707 = vrcp.pop %v706
      %v708 = vmul.f32 %v703, %v707
      %v709 = vpack.c.bf16 %v708, %v708
      %711 = vrot.lane.b32.xlu0 %v537, 96
      %v712 = vpop.permute.xlu0 %711
      %v714 = vsel %vm585, %v709, 0
      %v717 = vsel %vm601, %v712, 0
      %719 = vmatprep.subr.bf16.mxu0 0
      %720 = vmatpush1.bf16.msra.mxu0 %v717
      %721 = vmatprep.subr.bf16.mxu0 0
      %722 = vmatpush1.bf16.msra.mxu0 0
      %723 = vmatprep.subr.bf16.mxu0 0
      %724 = vmatpush1.bf16.msra.mxu0 0
      %725 = vmatprep.subr.bf16.mxu0 0
      %726 = vmatpush1.bf16.msra.mxu0 0
      %727 = vmatprep.subr.bf16.mxu0 0
      %728 = vmatpush1.bf16.msra.mxu0 0
      %729 = vmatprep.subr.bf16.mxu0 0
      %730 = vmatpush1.bf16.msra.mxu0 0
      %731 = vmatprep.subr.bf16.mxu0 0
      %732 = vmatpush1.bf16.msra.mxu0 0
      %733 = vmatprep.subr.bf16.mxu0 0
      %734 = vmatpush1.bf16.msra.mxu0 0
      %735 = vmatprep.subr.bf16.mxu0 0
      %736 = vmatpush1.bf16.msra.mxu0 0
      %737 = vmatprep.subr.bf16.mxu0 0
      %738 = vmatpush1.bf16.msra.mxu0 0
      %739 = vmatprep.subr.bf16.mxu0 0
      %740 = vmatpush1.bf16.msra.mxu0 0
      %741 = vmatprep.subr.bf16.mxu0 0
      %742 = vmatpush1.bf16.msra.mxu0 0
      %743 = vmatprep.subr.bf16.mxu0 0
      %744 = vmatpush1.bf16.msra.mxu0 0
      %745 = vmatprep.subr.bf16.mxu0 0
      %746 = vmatpush1.bf16.msra.mxu0 0
      %747 = vmatprep.subr.bf16.mxu0 0
      %748 = vmatpush1.bf16.msra.mxu0 0
      %749 = vmatprep.subr.bf16.mxu0 0
      %750 = vmatpush1.bf16.msra.mxu0 0
      %751 = vmatprep.mubr.bf16.mxu0 0
      %752 = vmatmul.mubr.bf16.gmra.mrb[0].mxu0 %v714
      %v753 = vpop.f32.mrb[0].mxu0
      %v754 = vadd.f32 0.0, %v753
      %v755 = vpop.f32.mrb[0].mxu0
      %v756 = vpop.f32.mrb[0].mxu0
      %v757 = vpop.f32.mrb[0].mxu0
      %758 = vdwg.mxu0
      %760 = vrot.lane.b32.xlu0 %v754, 32
      %v761 = vpop.permute.xlu0 %760
      %vm763 = vcmask 523520
      %764 = vst.msk [vmem:[#allocation2] sm:$0xff] %vm763, %v761
      %765 = vrot.lane.b32.xlu0 %v535, 64
      %v766 = vpop.permute.xlu0 %765
      %767 = vrot.lane.b32.xlu0 %v536, 64
      %v768 = vpop.permute.xlu0 %767
      %v770 = vsel %vm538, %v766, 0
      %v773 = vsel %vm538, %v768, 0
      %775 = vmatprep.subr.bf16.mxu0 0
      %776 = vmatpush1.bf16.xpose.msra.mxu0 %v773
      %777 = vmatprep.subr.bf16.mxu0 0
      %778 = vmatpush1.bf16.xpose.msra.mxu0 0
      %779 = vmatprep.subr.bf16.mxu0 0
      %780 = vmatpush1.bf16.xpose.msra.mxu0 0
      %781 = vmatprep.subr.bf16.mxu0 0
      %782 = vmatpush1.bf16.xpose.msra.mxu0 0
      %783 = vmatprep.subr.bf16.mxu0 0
      %784 = vmatpush1.bf16.xpose.msra.mxu0 0
      %785 = vmatprep.subr.bf16.mxu0 0
      %786 = vmatpush1.bf16.xpose.msra.mxu0 0
      %787 = vmatprep.subr.bf16.mxu0 0
      %788 = vmatpush1.bf16.xpose.msra.mxu0 0
      %789 = vmatprep.subr.bf16.mxu0 0
      %790 = vmatpush1.bf16.xpose.msra.mxu0 0
      %791 = vmatprep.subr.bf16.mxu0 0
      %792 = vmatpush1.bf16.xpose.msra.mxu0 0
      %793 = vmatprep.subr.bf16.mxu0 0
      %794 = vmatpush1.bf16.xpose.msra.mxu0 0
      %795 = vmatprep.subr.bf16.mxu0 0
      %796 = vmatpush1.bf16.xpose.msra.mxu0 0
      %797 = vmatprep.subr.bf16.mxu0 0
      %798 = vmatpush1.bf16.xpose.msra.mxu0 0
      %799 = vmatprep.subr.bf16.mxu0 0
      %800 = vmatpush1.bf16.xpose.msra.mxu0 0
      %801 = vmatprep.subr.bf16.mxu0 0
      %802 = vmatpush1.bf16.xpose.msra.mxu0 0
      %803 = vmatprep.subr.bf16.mxu0 0
      %804 = vmatpush1.bf16.xpose.msra.mxu0 0
      %805 = vmatprep.subr.bf16.mxu0 0
      %806 = vmatpush1.bf16.xpose.msra.mxu0 0
      %807 = vmatprep.mubr.bf16.mxu0 0
      %808 = vmatmul.mubr.bf16.gmra.mrb[0].mxu0 %v770
      %v809 = vpop.f32.mrb[0].mxu0
      %v810 = vadd.f32 0.0, %v809
      %v811 = vpop.f32.mrb[0].mxu0
      %v812 = vpop.f32.mrb[0].mxu0
      %v813 = vpop.f32.mrb[0].mxu0
      %814 = vdwg.mxu0
      %v815 = vsel %vm585, %v810, -inf
      %816 = vmax.xlane.f32.xlu0 %v815
      %v817 = vpop.xlane.xlu0 %816
      %v818 = vsub.f32 %v810, %v817
      %v819 = vmul.f32 %v818, 1.442695
      %v820 = vpow.pop %v819
      %v821 = vsel %vm585, %v820, 0.0
      %822 = vadd.xlane.f32.xlu0 %v821
      %v823 = vpop.xlane.xlu0 %822
      %v824 = vrcp.pop %v823
      %v825 = vmul.f32 %v820, %v824
      %v826 = vpack.c.bf16 %v825, %v825
      %827 = vrot.lane.b32.xlu0 %v537, 64
      %v828 = vpop.permute.xlu0 %827
      %v830 = vsel %vm585, %v826, 0
      %v833 = vsel %vm601, %v828, 0
      %835 = vmatprep.subr.bf16.mxu0 0
      %836 = vmatpush1.bf16.msra.mxu0 %v833
      %837 = vmatprep.subr.bf16.mxu0 0
      %838 = vmatpush1.bf16.msra.mxu0 0
      %839 = vmatprep.subr.bf16.mxu0 0
      %840 = vmatpush1.bf16.msra.mxu0 0
      %841 = vmatprep.subr.bf16.mxu0 0
      %842 = vmatpush1.bf16.msra.mxu0 0
      %843 = vmatprep.subr.bf16.mxu0 0
      %844 = vmatpush1.bf16.msra.mxu0 0
      %845 = vmatprep.subr.bf16.mxu0 0
      %846 = vmatpush1.bf16.msra.mxu0 0
      %847 = vmatprep.subr.bf16.mxu0 0
      %848 = vmatpush1.bf16.msra.mxu0 0
      %849 = vmatprep.subr.bf16.mxu0 0
      %850 = vmatpush1.bf16.msra.mxu0 0
      %851 = vmatprep.subr.bf16.mxu0 0
      %852 = vmatpush1.bf16.msra.mxu0 0
      %853 = vmatprep.subr.bf16.mxu0 0
      %854 = vmatpush1.bf16.msra.mxu0 0
      %855 = vmatprep.subr.bf16.mxu0 0
      %856 = vmatpush1.bf16.msra.mxu0 0
      %857 = vmatprep.subr.bf16.mxu0 0
      %858 = vmatpush1.bf16.msra.mxu0 0
      %859 = vmatprep.subr.bf16.mxu0 0
      %860 = vmatpush1.bf16.msra.mxu0 0
      %861 = vmatprep.subr.bf16.mxu0 0
      %862 = vmatpush1.bf16.msra.mxu0 0
      %863 = vmatprep.subr.bf16.mxu0 0
      %864 = vmatpush1.bf16.msra.mxu0 0
      %865 = vmatprep.subr.bf16.mxu0 0
      %866 = vmatpush1.bf16.msra.mxu0 0
      %867 = vmatprep.mubr.bf16.mxu0 0
      %868 = vmatmul.mubr.bf16.gmra.mrb[0].mxu0 %v830
      %v869 = vpop.f32.mrb[0].mxu0
      %v870 = vadd.f32 0.0, %v869
      %v871 = vpop.f32.mrb[0].mxu0
      %v872 = vpop.f32.mrb[0].mxu0
      %v873 = vpop.f32.mrb[0].mxu0
      %874 = vdwg.mxu0
      %876 = vrot.lane.b32.xlu0 %v870, 64
      %v877 = vpop.permute.xlu0 %876
      %vm879 = vcmask 785920
      %880 = vst.msk [vmem:[#allocation2] sm:$0xff] %vm879, %v877
      %881 = vrot.lane.b32.xlu0 %v535, 32
      %v882 = vpop.permute.xlu0 %881
      %883 = vrot.lane.b32.xlu0 %v536, 32
      %v884 = vpop.permute.xlu0 %883
      %v886 = vsel %vm538, %v882, 0
      %v889 = vsel %vm538, %v884, 0
      %891 = vmatprep.subr.bf16.mxu0 0
      %892 = vmatpush1.bf16.xpose.msra.mxu0 %v889
      %893 = vmatprep.subr.bf16.mxu0 0
      %894 = vmatpush1.bf16.xpose.msra.mxu0 0
      %895 = vmatprep.subr.bf16.mxu0 0
      %896 = vmatpush1.bf16.xpose.msra.mxu0 0
      %897 = vmatprep.subr.bf16.mxu0 0
      %898 = vmatpush1.bf16.xpose.msra.mxu0 0
      %899 = vmatprep.subr.bf16.mxu0 0
      %900 = vmatpush1.bf16.xpose.msra.mxu0 0
      %901 = vmatprep.subr.bf16.mxu0 0
      %902 = vmatpush1.bf16.xpose.msra.mxu0 0
      %903 = vmatprep.subr.bf16.mxu0 0
      %904 = vmatpush1.bf16.xpose.msra.mxu0 0
      %905 = vmatprep.subr.bf16.mxu0 0
      %906 = vmatpush1.bf16.xpose.msra.mxu0 0
      %907 = vmatprep.subr.bf16.mxu0 0
      %908 = vmatpush1.bf16.xpose.msra.mxu0 0
      %909 = vmatprep.subr.bf16.mxu0 0
      %910 = vmatpush1.bf16.xpose.msra.mxu0 0
      %911 = vmatprep.subr.bf16.mxu0 0
      %912 = vmatpush1.bf16.xpose.msra.mxu0 0
      %913 = vmatprep.subr.bf16.mxu0 0
      %914 = vmatpush1.bf16.xpose.msra.mxu0 0
      %915 = vmatprep.subr.bf16.mxu0 0
      %916 = vmatpush1.bf16.xpose.msra.mxu0 0
      %917 = vmatprep.subr.bf16.mxu0 0
      %918 = vmatpush1.bf16.xpose.msra.mxu0 0
      %919 = vmatprep.subr.bf16.mxu0 0
      %920 = vmatpush1.bf16.xpose.msra.mxu0 0
      %921 = vmatprep.subr.bf16.mxu0 0
      %922 = vmatpush1.bf16.xpose.msra.mxu0 0
      %923 = vmatprep.mubr.bf16.mxu0 0
      %924 = vmatmul.mubr.bf16.gmra.mrb[0].mxu0 %v886
      %v925 = vpop.f32.mrb[0].mxu0
      %v926 = vadd.f32 0.0, %v925
      %v927 = vpop.f32.mrb[0].mxu0
      %v928 = vpop.f32.mrb[0].mxu0
      %v929 = vpop.f32.mrb[0].mxu0
      %930 = vdwg.mxu0
      %v931 = vsel %vm585, %v926, -inf
      %932 = vmax.xlane.f32.xlu0 %v931
      %v933 = vpop.xlane.xlu0 %932
      %v934 = vsub.f32 %v926, %v933
      %v935 = vmul.f32 %v934, 1.442695
      %v936 = vpow.pop %v935
      %v937 = vsel %vm585, %v936, 0.0
      %938 = vadd.xlane.f32.xlu0 %v937
      %v939 = vpop.xlane.xlu0 %938
      %v940 = vrcp.pop %v939
      %v941 = vmul.f32 %v936, %v940
      %v942 = vpack.c.bf16 %v941, %v941
      %943 = vrot.lane.b32.xlu0 %v537, 32
      %v944 = vpop.permute.xlu0 %943
      %v946 = vsel %vm585, %v942, 0
      %v949 = vsel %vm601, %v944, 0
      %951 = vmatprep.subr.bf16.mxu0 0
      %952 = vmatpush1.bf16.msra.mxu0 %v949
      %953 = vmatprep.subr.bf16.mxu0 0
      %954 = vmatpush1.bf16.msra.mxu0 0
      %955 = vmatprep.subr.bf16.mxu0 0
      %956 = vmatpush1.bf16.msra.mxu0 0
      %957 = vmatprep.subr.bf16.mxu0 0
      %958 = vmatpush1.bf16.msra.mxu0 0
      %959 = vmatprep.subr.bf16.mxu0 0
      %960 = vmatpush1.bf16.msra.mxu0 0
      %961 = vmatprep.subr.bf16.mxu0 0
      %962 = vmatpush1.bf16.msra.mxu0 0
      %963 = vmatprep.subr.bf16.mxu0 0
      %964 = vmatpush1.bf16.msra.mxu0 0
      %965 = vmatprep.subr.bf16.mxu0 0
      %966 = vmatpush1.bf16.msra.mxu0 0
      %967 = vmatprep.subr.bf16.mxu0 0
      %968 = vmatpush1.bf16.msra.mxu0 0
      %969 = vmatprep.subr.bf16.mxu0 0
      %970 = vmatpush1.bf16.msra.mxu0 0
      %971 = vmatprep.subr.bf16.mxu0 0
      %972 = vmatpush1.bf16.msra.mxu0 0
      %973 = vmatprep.subr.bf16.mxu0 0
      %974 = vmatpush1.bf16.msra.mxu0 0
      %975 = vmatprep.subr.bf16.mxu0 0
      %976 = vmatpush1.bf16.msra.mxu0 0
      %977 = vmatprep.subr.bf16.mxu0 0
      %978 = vmatpush1.bf16.msra.mxu0 0
      %979 = vmatprep.subr.bf16.mxu0 0
      %980 = vmatpush1.bf16.msra.mxu0 0
      %981 = vmatprep.subr.bf16.mxu0 0
      %982 = vmatpush1.bf16.msra.mxu0 0
      %983 = vmatprep.mubr.bf16.mxu0 0
      %984 = vmatmul.mubr.bf16.gmra.mrb[0].mxu0 %v946
      %v985 = vpop.f32.mrb[0].mxu0
      %v986 = vadd.f32 0.0, %v985
      %v987 = vpop.f32.mrb[0].mxu0
      %v988 = vpop.f32.mrb[0].mxu0
      %v989 = vpop.f32.mrb[0].mxu0
      %990 = vdwg.mxu0
      %992 = vrot.lane.b32.xlu0 %v986, 96
      %v993 = vpop.permute.xlu0 %992
      %vm995 = vcmask 1048320
      %996 = vst.msk [vmem:[#allocation2] sm:$0xff] %vm995, %v993
      %v997 = vld [vmem:[#allocation2] sm:$0xff]
      %v998 = vpack.c.bf16 %v997, %v997
      %v999 = vld [vmem:[%s3] sm:$0xf]
      %v1000 = vld [vmem:[%s3 + $0x4] sm:$0xf]
      %v1001 = vld [vmem:[%s3 + $0x8] sm:$0xf]
      %v1002 = vld [vmem:[%s3 + $0xc] sm:$0xf]
      %v1003 = vld [vmem:[%s3 + $0x10] sm:$0xf]
      %v1004 = vld [vmem:[%s3 + $0x14] sm:$0xf]
      %v1005 = vld [vmem:[%s3 + $0x18] sm:$0xf]
      %v1006 = vld [vmem:[%s3 + $0x1c] sm:$0xf]
      %v1007 = vld [vmem:[%s3 + $0x20] sm:$0xf]
      %v1008 = vld [vmem:[%s3 + $0x24] sm:$0xf]
      %v1009 = vld [vmem:[%s3 + $0x28] sm:$0xf]
      %v1010 = vld [vmem:[%s3 + $0x2c] sm:$0xf]
      %v1011 = vld [vmem:[%s3 + $0x30] sm:$0xf]
      %v1012 = vld [vmem:[%s3 + $0x34] sm:$0xf]
      %v1013 = vld [vmem:[%s3 + $0x38] sm:$0xf]
      %v1014 = vld [vmem:[%s3 + $0x3c] sm:$0xf]
      %v1015 = vld [vmem:[%s4] sm:$0x1]
      %v1017 = vlaneseq
      %v1018 = vshrl.u32 %v1017, 7
      %v1019 = vsub.s32 0, %v1018
      %v1020 = vrot.slane %v1015, %v1019
      %v1038 = vunpack.c.l.b16 %v999
      %v1039 = vunpack.c.l.b16 %v1000
      %v1040 = vunpack.c.l.b16 %v1001
      %v1041 = vunpack.c.l.b16 %v1002
      %v1042 = vunpack.c.l.b16 %v1003
      %v1043 = vunpack.c.l.b16 %v1004
      %v1044 = vunpack.c.l.b16 %v1005
      %v1045 = vunpack.c.l.b16 %v1006
      %v1046 = vunpack.c.l.b16 %v1007
      %v1047 = vunpack.c.l.b16 %v1008
      %v1048 = vunpack.c.l.b16 %v1009
      %v1049 = vunpack.c.l.b16 %v1010
      %v1050 = vunpack.c.l.b16 %v1011
      %v1051 = vunpack.c.l.b16 %v1012
      %v1052 = vunpack.c.l.b16 %v1013
      %v1053 = vunpack.c.l.b16 %v1014
      %v1054 = vpack.c.b16 %v1039, %v1038
      %v1055 = vpack.c.b16 %v1041, %v1040
      %v1056 = vpack.c.b16 %v1043, %v1042
      %v1057 = vpack.c.b16 %v1045, %v1044
      %v1058 = vpack.c.b16 %v1047, %v1046
      %v1059 = vpack.c.b16 %v1049, %v1048
      %v1060 = vpack.c.b16 %v1051, %v1050
      %v1061 = vpack.c.b16 %v1053, %v1052
      %1070 = vmatprep.subr.bf16.mxu0 0
      %1071 = vmatpush1.bf16.msra.mxu0 %v1054
      %1072 = vmatprep.subr.bf16.mxu0 0
      %1073 = vmatpush1.bf16.msra.mxu0 %v1055
      %1074 = vmatprep.subr.bf16.mxu0 0
      %1075 = vmatpush1.bf16.msra.mxu0 %v1056
      %1076 = vmatprep.subr.bf16.mxu0 0
      %1077 = vmatpush1.bf16.msra.mxu0 %v1057
      %1078 = vmatprep.subr.bf16.mxu0 0
      %1079 = vmatpush1.bf16.msra.mxu0 %v1058
      %1080 = vmatprep.subr.bf16.mxu0 0
      %1081 = vmatpush1.bf16.msra.mxu0 %v1059
      %1082 = vmatprep.subr.bf16.mxu0 0
      %1083 = vmatpush1.bf16.msra.mxu0 %v1060
      %1084 = vmatprep.subr.bf16.mxu0 0
      %1085 = vmatpush1.bf16.msra.mxu0 %v1061
      %1086 = vmatprep.subr.bf16.mxu0 0
      %1087 = vmatpush1.bf16.msra.mxu0 0
      %1088 = vmatprep.subr.bf16.mxu0 0
      %1089 = vmatpush1.bf16.msra.mxu0 0
      %1090 = vmatprep.subr.bf16.mxu0 0
      %1091 = vmatpush1.bf16.msra.mxu0 0
      %1092 = vmatprep.subr.bf16.mxu0 0
      %1093 = vmatpush1.bf16.msra.mxu0 0
      %1094 = vmatprep.subr.bf16.mxu0 0
      %1095 = vmatpush1.bf16.msra.mxu0 0
      %1096 = vmatprep.subr.bf16.mxu0 0
      %1097 = vmatpush1.bf16.msra.mxu0 0
      %1098 = vmatprep.subr.bf16.mxu0 0
      %1099 = vmatpush1.bf16.msra.mxu0 0
      %1100 = vmatprep.subr.bf16.mxu0 0
      %1101 = vmatpush1.bf16.msra.mxu0 0
      %1102 = vmatprep.mubr.bf16.mxu0 0
      %1103 = vmatmul.mubr.bf16.gmra.mrb[0].mxu0 %v998
      %v1104 = vpop.f32.mrb[0].mxu0
      %v1105 = vadd.f32 %v1020, %v1104
      %v1106 = vpop.f32.mrb[0].mxu0
      %v1107 = vpop.f32.mrb[0].mxu0
      %v1108 = vpop.f32.mrb[0].mxu0
      %1109 = vdwg.mxu0
      %v1110 = vadd.f32 %v1105, %v276
      %1111 = vadd.xlane.f32.xlu0 %v1110
      %v1112 = vpop.xlane.xlu0 %1111
      %v1113 = vmul.f32 %v1112, 0.03125
      %v1114 = vmul.f32 %v1110, %v1110
      %1115 = vadd.xlane.f32.xlu0 %v1114
      %v1116 = vpop.xlane.xlu0 %1115
      %v1117 = vmul.f32 %v1116, 0.03125
      %v1118 = vmul.f32 %v1113, %v1113
      %v1119 = vsub.f32 %v1117, %v1118
      %v1120 = vmax.f32 %v1119, 0.0
      %v1121 = vsub.f32 %v1110, %v1113
      %v1122 = vadd.f32 %v1120, 1e-05
      %v1123 = vrsqrt.pop %v1122
      %v1124 = vmul.f32 %v1121, %v1123
      %v1125 = vld [vmem:[%s5] sm:$0x1]
      %v1127 = vlaneseq
      %v1128 = vshrl.u32 %v1127, 7
      %v1129 = vsub.s32 0, %v1128
      %v1130 = vrot.slane %v1125, %v1129
      %v1132 = vmul.f32 %v1124, %v1130
      %v1133 = vld [vmem:[%s6] sm:$0x1]
      %v1135 = vlaneseq
      %v1136 = vshrl.u32 %v1135, 7
      %v1137 = vsub.s32 0, %v1136
      %v1138 = vrot.slane %v1133, %v1137
      %v1140 = vadd.f32 %v1132, %v1138
      %v1141 = vpack.c.bf16 %v1140, %v1140
      %1142 = vst [vmem:[%s273] sm:$0xf] %v1141
      %p1143 = scmp.lt.s32.totalorder %s18, 1
      %s1144 = scalar_select %p1143, %s18, 1
      %s1145 = smul.addr %s1144, 4
      %s1146 = scalar_lea.vmem %s7, %s1145
      // Predicated region
      $region49: #{transformer_forward.7} parent=47 // pred_check
        %p1147 = pneg %p188
      $region50: #{transformer_forward.7} parent=47 // pred_check_branch
        %1149 = sbr.rel (%p1147) target = $region52
      $region51: #{transformer_forward.7} parent=47 // pred_region
        _
      $region52: #{transformer_forward.7} parent=47 // pred_fallthru
        _
    $region48: #{transformer_forward.7} parent=5 // pred_fallthru
      _
    %p1150 = scmp.le.s32.totalorder 2, %s13
    // Predicated region
    $region53: #{transformer_forward.7} parent=5 // pred_check
      %p1151 = pneg %p1150
    $region54: #{transformer_forward.7} parent=5 // pred_check_branch
      %1153 = sbr.rel (%p1151) target = $region56
    $region55: #{transformer_forward.7} parent=5 // pred_region
      %s1154 = ssub.s32 %s13, 2
      // Predicated region
      $region57: #{transformer_forward.7} parent=55 // pred_check
        %p1155 = pneg %p194
      $region58: #{transformer_forward.7} parent=55 // pred_check_branch
        %1157 = sbr.rel (%p1155) target = $region60
      $region59: #{transformer_forward.7} parent=55 // pred_region
        %p1158 = scmp.lt.s32.totalorder %s19, 1
        %s1159 = scalar_select %p1158, %s19, 1
        %s1160 = smul.addr %s1159, 4
        %s1161 = scalar_lea.vmem %s7, %s1160
      $region60: #{transformer_forward.7} parent=55 // pred_fallthru
        _
    $region56: #{transformer_forward.7} parent=5 // pred_fallthru
      _
  $region6: #{transformer_forward.7} parent=0 // loop_footer
    %s17 = sadd.s32 1, %s13
  $region7: #{transformer_forward.7} parent=0 // loop_footer_branch
    %12 = sbr.rel target = $region3
  $region8: #{transformer_forward.7} parent=0 // loop_exit
    _

// kernel: transformer_forward.5
$region0: #{transformer_forward.5}
  #allocation0 [shape = 'u32[]', space=smem, size = 0x4, offset = 0x4, fixed_abs, tag = 'smem constant byte address 0x4 - core index']
  #allocation1 [shape = 'u32[144,128]{1,0:T(1,128)}', space=vmem, size = 0x12000, scoped, tag = 'internal scratch']
  #allocation2 [shape = 'f32[8,128]{1,0:T(8,128)}', space=vmem, size = 0x1000, scoped, tag = 'scratch operand']
  %s0 = inlined_call_operand.vmem [shape: bf16[2,8,128], index: 0, kind: input, shape index: {}]
  %s1 = inlined_call_operand.vmem [shape: f32[8,128], index: 1, kind: input, shape index: {}]
  %s2 = inlined_call_operand.hbm [shape: bf16[128,384], index: 2, kind: input, shape index: {}]
  %s3 = inlined_call_operand.vmem [shape: f32[1,384], index: 3, kind: input, shape index: {}]
  %s4 = inlined_call_operand.vmem [shape: bf16[128,128], index: 4, kind: input, shape index: {}]
  %s5 = inlined_call_operand.vmem [shape: f32[1,128], index: 5, kind: input, shape index: {}]
  %s6 = inlined_call_operand.vmem [shape: f32[1,128], index: 6, kind: input, shape index: {}]
  %s7 = inlined_call_operand.vmem [shape: f32[1,128], index: 7, kind: input, shape index: {}]
  %s8 = inlined_call_operand.vmem [shape: bf16[2,8,128], index: 8, kind: output, shape index: {}]
  %s9 = sld [smem:[#allocation0]]
  $region69: #{transformer_forward.5} parent=0
    _
  %s11 = ssub.s32 1, %s9
  %s12 = scalar_select 0, %s11, %s9
  $region1: #{transformer_forward.5} parent=0
    #allocation3 [shape = 'u8[98304]{0}', space=vmem, size = 0x18000, scoped, tag = 'input window, operand 2, single buffered']
    #allocation4 [shape = 's32[2]{0}', space=sflag, size = 0x8, scoped, tag = 'scoped memory for transformer_forward.5']
    %13 = vsyncpa [#allocation4], 0
    loop: start=0, step=1, limit=4
    $region2: #{transformer_forward.5} parent=1 // loop_pre_header
      _
    $region3: #{transformer_forward.5} parent=1 // loop_header
      %s15 = sphi 0, %s19
      %p16 = scmp.ge.s32.totalorder %s15, 4
      %s25 = sphi 0, %s27
      %s28 = sphi 0, %s25
      %s29 = sphi 0, %s28
      %s45 = sphi 0, %s29
      %s49 = sphi 0, %s49
      %s51 = sphi 0, %s49
      %s52 = sphi 0, %s51
      %s66 = sphi 0, %s52
      %s70 = sphi 0, %s70
      %s72 = sphi 0, %s70
      %s73 = sphi 0, %s72
      %s87 = sphi 0, %s73
      %s91 = sphi 0, %s91
      %s93 = sphi 0, %s91
      %s94 = sphi 0, %s93
      %s108 = sphi 0, %s94
      %s112 = sphi 0, %s112
      %s114 = sphi 0, %s112
      %s115 = sphi 0, %s114
      %s129 = sphi 0, %s115
      %s133 = sphi 0, %s133
      %s135 = sphi 0, %s133
      %s136 = sphi 0, %s135
      %s150 = sphi 0, %s136
      %s154 = sphi 0, %s154
      %s156 = sphi 0, %s154
      %s157 = sphi 0, %s156
      %s171 = sphi 0, %s157
      %s175 = sphi 0, %s175
      %s177 = sphi 0, %s175
      %s178 = sphi 0, %s177
      %s192 = sphi 0, %s178
      %s198 = sphi 0, %s200
      %s201 = sphi 0, %s198
      %s202 = sphi 0, %s201
      %s218 = sphi 0, %s202
    $region4: #{transformer_forward.5} parent=1 // loop_header_branch
      %18 = sbr.rel (%p16) target = $region8
    $region5: #{transformer_forward.5} parent=1 // loop_body
      %s20 = ssub.s32 %s15, 1
      %s21 = ssub.s32 %s15, 2
      %s22 = sadd.s32 %s15, 1
      %s23 = ssub.s32 %s15, %s22
      %p24 = scmp.eq.s32.totalorder %s23, 0
      %s26 = sadd.s32 %s25, 1
      %s27 = scalar_select %p24, %s25, %s26
      %p30 = pneg %p24
      %p31 = scmp.eq.s32.totalorder %s15, 1
      %p32 = por %p30, %p31
      %p33 = scmp.ne.s32.totalorder %s25, %s28
      %p34 = scmp.eq.s32.totalorder %s15, 0
      %p35 = por %p33, %p34
      %p36 = scmp.ne.s32.totalorder %s25, %s28
      %p37 = scmp.eq.s32.totalorder %s20, 1
      %p38 = por %p36, %p37
      %p39 = scmp.ne.s32.totalorder %s28, %s29
      %p40 = scmp.eq.s32.totalorder %s20, 0
      %p41 = por %p39, %p40
      %p42 = scmp.ne.s32.totalorder %s28, %s29
      %p43 = scmp.eq.s32.totalorder %s21, 1
      %p44 = por %p42, %p43
      %p46 = scmp.ne.s32.totalorder %s29, %s45
      %p47 = scmp.eq.s32.totalorder %s21, 0
      %p48 = por %p46, %p47
      %s50 = sadd.s32 %s49, 1
      %p53 = scmp.eq.s32.totalorder %s15, 1
      %p54 = scmp.ne.s32.totalorder %s49, %s51
      %p55 = scmp.eq.s32.totalorder %s15, 0
      %p56 = por %p54, %p55
      %p57 = scmp.ne.s32.totalorder %s49, %s51
      %p58 = scmp.eq.s32.totalorder %s20, 1
      %p59 = por %p57, %p58
      %p60 = scmp.ne.s32.totalorder %s51, %s52
      %p61 = scmp.eq.s32.totalorder %s20, 0
      %p62 = por %p60, %p61
      %p63 = scmp.ne.s32.totalorder %s51, %s52
      %p64 = scmp.eq.s32.totalorder %s21, 1
      %p65 = por %p63, %p64
      %p67 = scmp.ne.s32.totalorder %s52, %s66
      %p68 = scmp.eq.s32.totalorder %s21, 0
      %p69 = por %p67, %p68
      %s71 = sadd.s32 %s70, 1
      %p74 = scmp.eq.s32.totalorder %s15, 1
      %p75 = scmp.ne.s32.totalorder %s70, %s72
      %p76 = scmp.eq.s32.totalorder %s15, 0
      %p77 = por %p75, %p76
      %p78 = scmp.ne.s32.totalorder %s70, %s72
      %p79 = scmp.eq.s32.totalorder %s20, 1
      %p80 = por %p78, %p79
      %p81 = scmp.ne.s32.totalorder %s72, %s73
      %p82 = scmp.eq.s32.totalorder %s20, 0
      %p83 = por %p81, %p82
      %p84 = scmp.ne.s32.totalorder %s72, %s73
      %p85 = scmp.eq.s32.totalorder %s21, 1
      %p86 = por %p84, %p85
      %p88 = scmp.ne.s32.totalorder %s73, %s87
      %p89 = scmp.eq.s32.totalorder %s21, 0
      %p90 = por %p88, %p89
      %s92 = sadd.s32 %s91, 1
      %p95 = scmp.eq.s32.totalorder %s15, 1
      %p96 = scmp.ne.s32.totalorder %s91, %s93
      %p97 = scmp.eq.s32.totalorder %s15, 0
      %p98 = por %p96, %p97
      %p99 = scmp.ne.s32.totalorder %s91, %s93
      %p100 = scmp.eq.s32.totalorder %s20, 1
      %p101 = por %p99, %p100
      %p102 = scmp.ne.s32.totalorder %s93, %s94
      %p103 = scmp.eq.s32.totalorder %s20, 0
      %p104 = por %p102, %p103
      %p105 = scmp.ne.s32.totalorder %s93, %s94
      %p106 = scmp.eq.s32.totalorder %s21, 1
      %p107 = por %p105, %p106
      %p109 = scmp.ne.s32.totalorder %s94, %s108
      %p110 = scmp.eq.s32.totalorder %s21, 0
      %p111 = por %p109, %p110
      %s113 = sadd.s32 %s112, 1
      %p116 = scmp.eq.s32.totalorder %s15, 1
      %p117 = scmp.ne.s32.totalorder %s112, %s114
      %p118 = scmp.eq.s32.totalorder %s15, 0
      %p119 = por %p117, %p118
      %p120 = scmp.ne.s32.totalorder %s112, %s114
      %p121 = scmp.eq.s32.totalorder %s20, 1
      %p122 = por %p120, %p121
      %p123 = scmp.ne.s32.totalorder %s114, %s115
      %p124 = scmp.eq.s32.totalorder %s20, 0
      %p125 = por %p123, %p124
      %p126 = scmp.ne.s32.totalorder %s114, %s115
      %p127 = scmp.eq.s32.totalorder %s21, 1
      %p128 = por %p126, %p127
      %p130 = scmp.ne.s32.totalorder %s115, %s129
      %p131 = scmp.eq.s32.totalorder %s21, 0
      %p132 = por %p130, %p131
      %s134 = sadd.s32 %s133, 1
      %p137 = scmp.eq.s32.totalorder %s15, 1
      %p138 = scmp.ne.s32.totalorder %s133, %s135
      %p139 = scmp.eq.s32.totalorder %s15, 0
      %p140 = por %p138, %p139
      %p141 = scmp.ne.s32.totalorder %s133, %s135
      %p142 = scmp.eq.s32.totalorder %s20, 1
      %p143 = por %p141, %p142
      %p144 = scmp.ne.s32.totalorder %s135, %s136
      %p145 = scmp.eq.s32.totalorder %s20, 0
      %p146 = por %p144, %p145
      %p147 = scmp.ne.s32.totalorder %s135, %s136
      %p148 = scmp.eq.s32.totalorder %s21, 1
      %p149 = por %p147, %p148
      %p151 = scmp.ne.s32.totalorder %s136, %s150
      %p152 = scmp.eq.s32.totalorder %s21, 0
      %p153 = por %p151, %p152
      %s155 = sadd.s32 %s154, 1
      %p158 = scmp.eq.s32.totalorder %s15, 1
      %p159 = scmp.ne.s32.totalorder %s154, %s156
      %p160 = scmp.eq.s32.totalorder %s15, 0
      %p161 = por %p159, %p160
      %p162 = scmp.ne.s32.totalorder %s154, %s156
      %p163 = scmp.eq.s32.totalorder %s20, 1
      %p164 = por %p162, %p163
      %p165 = scmp.ne.s32.totalorder %s156, %s157
      %p166 = scmp.eq.s32.totalorder %s20, 0
      %p167 = por %p165, %p166
      %p168 = scmp.ne.s32.totalorder %s156, %s157
      %p169 = scmp.eq.s32.totalorder %s21, 1
      %p170 = por %p168, %p169
      %p172 = scmp.ne.s32.totalorder %s157, %s171
      %p173 = scmp.eq.s32.totalorder %s21, 0
      %p174 = por %p172, %p173
      %s176 = sadd.s32 %s175, 1
      %p179 = scmp.eq.s32.totalorder %s15, 1
      %p180 = scmp.ne.s32.totalorder %s175, %s177
      %p181 = scmp.eq.s32.totalorder %s15, 0
      %p182 = por %p180, %p181
      %p183 = scmp.ne.s32.totalorder %s175, %s177
      %p184 = scmp.eq.s32.totalorder %s20, 1
      %p185 = por %p183, %p184
      %p186 = scmp.ne.s32.totalorder %s177, %s178
      %p187 = scmp.eq.s32.totalorder %s20, 0
      %p188 = por %p186, %p187
      %p189 = scmp.ne.s32.totalorder %s177, %s178
      %p190 = scmp.eq.s32.totalorder %s21, 1
      %p191 = por %p189, %p190
      %p193 = scmp.ne.s32.totalorder %s178, %s192
      %p194 = scmp.eq.s32.totalorder %s21, 0
      %p195 = por %p193, %p194
      %s196 = ssub.s32 %s15, %s22
      %p197 = scmp.eq.s32.totalorder %s196, 0
      %s199 = sadd.s32 %s198, 1
      %s200 = scalar_select %p197, %s198, %s199
      %p203 = pneg %p197
      %p204 = scmp.eq.s32.totalorder %s15, 1
      %p205 = por %p203, %p204
      %p206 = scmp.ne.s32.totalorder %s198, %s201
      %p207 = scmp.eq.s32.totalorder %s15, 0
      %p208 = por %p206, %p207
      %p209 = scmp.ne.s32.totalorder %s198, %s201
      %p210 = scmp.eq.s32.totalorder %s20, 1
      %p211 = por %p209, %p210
      %p212 = scmp.ne.s32.totalorder %s201, %s202
      %p213 = scmp.eq.s32.totalorder %s20, 0
      %p214 = por %p212, %p213
      %p215 = scmp.ne.s32.totalorder %s201, %s202
      %p216 = scmp.eq.s32.totalorder %s21, 1
      %p217 = por %p215, %p216
      %p219 = scmp.ne.s32.totalorder %s202, %s218
      %p220 = scmp.eq.s32.totalorder %s21, 0
      %p221 = por %p219, %p220
      %p222 = scmp.le.s32.totalorder 1, %s15
      %p223 = scmp.lt.s32.totalorder %s15, 3
      %p224 = pnand %p222, %p223
      %p225 = pneg %p224
      // Predicated region
      $region9: #{transformer_forward.5} parent=5 // pred_check
        _
      $region10: #{transformer_forward.5} parent=5 // pred_check_branch
        %227 = sbr.rel (%p224) target = $region12
      $region11: #{transformer_forward.5} parent=5 // pred_region
        %s228 = ssub.s32 %s15, 1
        // Predicated region
        $region13: #{transformer_forward.5} parent=11 // pred_check
          %p229 = pneg %p62
        $region14: #{transformer_forward.5} parent=11 // pred_check_branch
          %231 = sbr.rel (%p229) target = $region16
        $region15: #{transformer_forward.5} parent=11 // pred_region
          _
        $region16: #{transformer_forward.5} parent=11 // pred_fallthru
          _
        // Predicated region
        $region17: #{transformer_forward.5} parent=11 // pred_check
          %p232 = pneg %p83
        $region18: #{transformer_forward.5} parent=11 // pred_check_branch
          %234 = sbr.rel (%p232) target = $region20
        $region19: #{transformer_forward.5} parent=11 // pred_region
          %s236 = ssub.s32 3072, 3072
          %237 = vsyncadd [#allocation4], %s236
          %s238 = sshll.u32 [#allocation3], 4
          %s239 = int_to_ptr.vmem [resolvable:$true] %s238
          %244 = dma.hbm_to_vmem [thread:$0]  %s2, 3072, %s239, [#allocation4], 192, 192, 12
        $region20: #{transformer_forward.5} parent=11 // pred_fallthru
          _
        // Predicated region
        $region21: #{transformer_forward.5} parent=11 // pred_check
          %p245 = pneg %p104
        $region22: #{transformer_forward.5} parent=11 // pred_check_branch
          %247 = sbr.rel (%p245) target = $region24
        $region23: #{transformer_forward.5} parent=11 // pred_region
          _
        $region24: #{transformer_forward.5} parent=11 // pred_fallthru
          _
        // Predicated region
        $region25: #{transformer_forward.5} parent=11 // pred_check
          %p248 = pneg %p125
        $region26: #{transformer_forward.5} parent=11 // pred_check_branch
          %250 = sbr.rel (%p248) target = $region28
        $region27: #{transformer_forward.5} parent=11 // pred_region
          _
        $region28: #{transformer_forward.5} parent=11 // pred_fallthru
          _
        // Predicated region
        $region29: #{transformer_forward.5} parent=11 // pred_check
          %p251 = pneg %p146
        $region30: #{transformer_forward.5} parent=11 // pred_check_branch
          %253 = sbr.rel (%p251) target = $region32
        $region31: #{transformer_forward.5} parent=11 // pred_region
          _
        $region32: #{transformer_forward.5} parent=11 // pred_fallthru
          _
        // Predicated region
        $region33: #{transformer_forward.5} parent=11 // pred_check
          %p254 = pneg %p167
        $region34: #{transformer_forward.5} parent=11 // pred_check_branch
          %256 = sbr.rel (%p254) target = $region36
        $region35: #{transformer_forward.5} parent=11 // pred_region
          _
        $region36: #{transformer_forward.5} parent=11 // pred_fallthru
          _
        // Predicated region
        $region37: #{transformer_forward.5} parent=11 // pred_check
          %p257 = pneg %p188
        $region38: #{transformer_forward.5} parent=11 // pred_check_branch
          %259 = sbr.rel (%p257) target = $region40
        $region39: #{transformer_forward.5} parent=11 // pred_region
          _
        $region40: #{transformer_forward.5} parent=11 // pred_fallthru
          _
      $region12: #{transformer_forward.5} parent=5 // pred_fallthru
        _
      %p260 = scmp.lt.s32.totalorder %s15, 2
      // Predicated region
      $region41: #{transformer_forward.5} parent=5 // pred_check
        %p261 = pneg %p260
      $region42: #{transformer_forward.5} parent=5 // pred_check_branch
        %263 = sbr.rel (%p261) target = $region44
      $region43: #{transformer_forward.5} parent=5 // pred_region
        // Predicated region
        $region45: #{transformer_forward.5} parent=43 // pred_check
          %p264 = pneg %p35
        $region46: #{transformer_forward.5} parent=43 // pred_check_branch
          %266 = sbr.rel (%p264) target = $region48
        $region47: #{transformer_forward.5} parent=43 // pred_region
          %p267 = scmp.lt.s32.totalorder %s15, 1
          %s268 = scalar_select %p267, %s15, 1
          %s269 = smul.addr %s268, 4
          %s270 = scalar_lea.vmem %s0, %s269
        $region48: #{transformer_forward.5} parent=43 // pred_fallthru
          _
      $region44: #{transformer_forward.5} parent=5 // pred_fallthru
        _
      %p271 = scmp.le.s32.totalorder 1, %s15
      %p272 = scmp.lt.s32.totalorder %s15, 3
      %p273 = pnand %p271, %p272
      %p274 = pneg %p273
      // Predicated region
      $region49: #{transformer_forward.5} parent=5 // pred_check
        _
      $region50: #{transformer_forward.5} parent=5 // pred_check_branch
        %276 = sbr.rel (%p273) target = $region52
      $region51: #{transformer_forward.5} parent=5 // pred_region
        %s277 = ssub.s32 %s15, 1
        // Predicated region
        $region53: #{transformer_forward.5} parent=51 // pred_check
          %p278 = pneg %p83
        $region54: #{transformer_forward.5} parent=51 // pred_check_branch
          %280 = sbr.rel (%p278) target = $region56
        $region55: #{transformer_forward.5} parent=51 // pred_region
          %281 = dma.done [#allocation4], 3072
        $region56: #{transformer_forward.5} parent=51 // pred_fallthru
          _
        %p282 = scmp.lt.s32.totalorder %s20, 1
        %s283 = scalar_select %p282, %s20, 1
        %s284 = smul.addr %s283, 4
        %s285 = scalar_lea.vmem %s0, %s284
        %p286 = pneg %p41
        %p287 = pneg %p38
        %p288 = pneg %p62
        %p289 = pneg %p59
        %p290 = pneg %p83
        %p291 = pneg %p80
        %p292 = pneg %p104
        %p293 = pneg %p101
        %p294 = pneg %p125
        %p295 = pneg %p122
        %p296 = pneg %p146
        %p297 = pneg %p143
        %p298 = pneg %p167
        %p299 = pneg %p164
        %p300 = pneg %p188
        %p301 = pneg %p185
        %p302 = pneg %p214
        %p303 = pneg %p211
        %p304 = scmp.lt.s32.totalorder %s20, 1
        %s305 = scalar_select %p304, %s20, 1
        %s306 = smul.addr %s305, 4
        %s307 = scalar_lea.vmem %s8, %s306
        %p308 = scmp.lt.s32.totalorder %s20, 1
        %s309 = scalar_select %p308, %s20, 1
        %s310 = smul.addr %s309, 4
        %s311 = scalar_lea.vmem %s0, %s310
        %p312 = scmp.lt.s32.totalorder %s20, 1
        %s313 = scalar_select %p312, %s20, 1
        %s314 = smul.addr %s313, 4
        %s315 = scalar_lea.vmem %s8, %s314
        %v317 = vld [vmem:[%s311] sm:$0xf]
        %v318 = vunpack.c.l.bf16 %v317
        %v319 = vmul.f32 %v318, 5.656854
        %v320 = vld [vmem:[%s1] sm:$0xff]
        %v321 = vadd.f32 %v319, %v320
        %v322 = vpack.c.bf16 %v321, %v321
        %v323 = vld [vmem:[#allocation3] sm:$0xff]
        %v324 = vld [vmem:[#allocation3 + $0x8] sm:$0xf]
        %v325 = vld [vmem:[#allocation3 + $0xc] sm:$0xff]
        %v326 = vld [vmem:[#allocation3 + $0x14] sm:$0xf]
        %v327 = vld [vmem:[#allocation3 + $0x18] sm:$0xff]
        %v328 = vld [vmem:[#allocation3 + $0x20] sm:$0xf]
        %v329 = vld [vmem:[#allocation3 + $0x24] sm:$0xff]
        %v330 = vld [vmem:[#allocation3 + $0x2c] sm:$0xf]
        %v331 = vld [vmem:[#allocation3 + $0x30] sm:$0xff]
        %v332 = vld [vmem:[#allocation3 + $0x38] sm:$0xf]
        %v333 = vld [vmem:[#allocation3 + $0x3c] sm:$0xff]
        %v334 = vld [vmem:[#allocation3 + $0x44] sm:$0xf]
        %v335 = vld [vmem:[#allocation3 + $0x48] sm:$0xff]
        %v336 = vld [vmem:[#allocation3 + $0x50] sm:$0xf]
        %v337 = vld [vmem:[#allocation3 + $0x54] sm:$0xff]
        %v338 = vld [vmem:[#allocation3 + $0x5c] sm:$0xf]
        %v339 = vld [vmem:[#allocation3 + $0x60] sm:$0xff]
        %v340 = vld [vmem:[#allocation3 + $0x68] sm:$0xf]
        %v341 = vld [vmem:[#allocation3 + $0x6c] sm:$0xff]
        %v342 = vld [vmem:[#allocation3 + $0x74] sm:$0xf]
        %v343 = vld [vmem:[#allocation3 + $0x78] sm:$0xff]
        %v344 = vld [vmem:[#allocation3 + $0x80] sm:$0xf]
        %v345 = vld [vmem:[#allocation3 + $0x84] sm:$0xff]
        %v346 = vld [vmem:[#allocation3 + $0x8c] sm:$0xf]
        %v347 = vld [vmem:[#allocation3 + $0x90] sm:$0xff]
        %v348 = vld [vmem:[#allocation3 + $0x98] sm:$0xf]
        %v349 = vld [vmem:[#allocation3 + $0x9c] sm:$0xff]
        %v350 = vld [vmem:[#allocation3 + $0xa4] sm:$0xf]
        %v351 = vld [vmem:[#allocation3 + $0xa8] sm:$0xff]
        %v352 = vld [vmem:[#allocation3 + $0xb0] sm:$0xf]
        %v353 = vld [vmem:[#allocation3 + $0xb4] sm:$0xff]
        %v354 = vld [vmem:[#allocation3 + $0xbc] sm:$0xf]
        %v355 = vld [vmem:[%s3] sm:$0x7]
        %v357 = vlaneseq
        %v358 = vshrl.u32 %v357, 7
        %v359 = vsub.s32 0, %v358
        %v360 = vrot.slane %v355, %v359
        %v361 = vlaneseq
        %v362 = vshrl.u32 %v361, 7
        %v363 = vsub.s32 1, %v362
        %v364 = vrot.slane %v355, %v363
        %v365 = vlaneseq
        %v366 = vshrl.u32 %v365, 7
        %v367 = vsub.s32 2, %v366
        %v368 = vrot.slane %v355, %v367
        %v404 = vunpack.c.l.b16 %v323
        %v405 = vunpack.c.h.b16 %v323
        %v406 = vunpack.c.l.b16 %v324
        %v407 = vunpack.c.l.b16 %v325
        %v408 = vunpack.c.h.b16 %v325
        %v409 = vunpack.c.l.b16 %v326
        %v410 = vunpack.c.l.b16 %v327
        %v411 = vunpack.c.h.b16 %v327
        %v412 = vunpack.c.l.b16 %v328
        %v413 = vunpack.c.l.b16 %v329
        %v414 = vunpack.c.h.b16 %v329
        %v415 = vunpack.c.l.b16 %v330
        %v416 = vunpack.c.l.b16 %v331
        %v417 = vunpack.c.h.b16 %v331
        %v418 = vunpack.c.l.b16 %v332
        %v419 = vunpack.c.l.b16 %v333
        %v420 = vunpack.c.h.b16 %v333
        %v421 = vunpack.c.l.b16 %v334
        %v422 = vunpack.c.l.b16 %v335
        %v423 = vunpack.c.h.b16 %v335
        %v424 = vunpack.c.l.b16 %v336
        %v425 = vunpack.c.l.b16 %v337
        %v426 = vunpack.c.h.b16 %v337
        %v427 = vunpack.c.l.b16 %v338
        %v428 = vunpack.c.l.b16 %v339
        %v429 = vunpack.c.h.b16 %v339
        %v430 = vunpack.c.l.b16 %v340
        %v431 = vunpack.c.l.b16 %v341
        %v432 = vunpack.c.h.b16 %v341
        %v433 = vunpack.c.l.b16 %v342
        %v434 = vunpack.c.l.b16 %v343
        %v435 = vunpack.c.h.b16 %v343
        %v436 = vunpack.c.l.b16 %v344
        %v437 = vunpack.c.l.b16 %v345
        %v438 = vunpack.c.h.b16 %v345
        %v439 = vunpack.c.l.b16 %v346
        %v440 = vunpack.c.l.b16 %v347
        %v441 = vunpack.c.h.b16 %v347
        %v442 = vunpack.c.l.b16 %v348
        %v443 = vunpack.c.l.b16 %v349
        %v444 = vunpack.c.h.b16 %v349
        %v445 = vunpack.c.l.b16 %v350
        %v446 = vunpack.c.l.b16 %v351
        %v447 = vunpack.c.h.b16 %v351
        %v448 = vunpack.c.l.b16 %v352
        %v449 = vunpack.c.l.b16 %v353
        %v450 = vunpack.c.h.b16 %v353
        %v451 = vunpack.c.l.b16 %v354
        %v452 = vpack.c.b16 %v407, %v404
        %v453 = vpack.c.b16 %v408, %v405
        %v454 = vpack.c.b16 %v409, %v406
        %v455 = vpack.c.b16 %v413, %v410
        %v456 = vpack.c.b16 %v414, %v411
        %v457 = vpack.c.b16 %v415, %v412
        %v458 = vpack.c.b16 %v419, %v416
        %v459 = vpack.c.b16 %v420, %v417
        %v460 = vpack.c.b16 %v421, %v418
        %v461 = vpack.c.b16 %v425, %v422
        %v462 = vpack.c.b16 %v426, %v423
        %v463 = vpack.c.b16 %v427, %v424
        %v464 = vpack.c.b16 %v431, %v428
        %v465 = vpack.c.b16 %v432, %v429
        %v466 = vpack.c.b16 %v433, %v430
        %v467 = vpack.c.b16 %v437, %v434
        %v468 = vpack.c.b16 %v438, %v435
        %v469 = vpack.c.b16 %v439, %v436
        %v470 = vpack.c.b16 %v443, %v440
        %v471 = vpack.c.b16 %v444, %v441
        %v472 = vpack.c.b16 %v445, %v442
        %v473 = vpack.c.b16 %v449, %v446
        %v474 = vpack.c.b16 %v450, %v447
        %v475 = vpack.c.b16 %v451, %v448
        %500 = vmatprep.subr.bf16.mxu0 %v453
        %501 = vmatpush1.bf16.msra.mxu0 %v452
        %502 = vmatprep.subr.bf16.mxu0 %v456
        %503 = vmatpush1.bf16.msra.mxu0 %v455
        %504 = vmatprep.subr.bf16.mxu0 %v459
        %505 = vmatpush1.bf16.msra.mxu0 %v458
        %506 = vmatprep.subr.bf16.mxu0 %v462
        %507 = vmatpush1.bf16.msra.mxu0 %v461
        %508 = vmatprep.subr.bf16.mxu0 %v465
        %509 = vmatpush1.bf16.msra.mxu0 %v464
        %510 = vmatprep.subr.bf16.mxu0 %v468
        %511 = vmatpush1.bf16.msra.mxu0 %v467
        %512 = vmatprep.subr.bf16.mxu0 %v471
        %513 = vmatpush1.bf16.msra.mxu0 %v470
        %514 = vmatprep.subr.bf16.mxu0 %v474
        %515 = vmatpush1.bf16.msra.mxu0 %v473
        %516 = vmatprep.subr.bf16.mxu0 0
        %517 = vmatpush1.bf16.msra.mxu0 0
        %518 = vmatprep.subr.bf16.mxu0 0
        %519 = vmatpush1.bf16.msra.mxu0 0
        %520 = vmatprep.subr.bf16.mxu0 0
        %521 = vmatpush1.bf16.msra.mxu0 0
        %522 = vmatprep.subr.bf16.mxu0 0
        %523 = vmatpush1.bf16.msra.mxu0 0
        %524 = vmatprep.subr.bf16.mxu0 0
        %525 = vmatpush1.bf16.msra.mxu0 0
        %526 = vmatprep.subr.bf16.mxu0 0
        %527 = vmatpush1.bf16.msra.mxu0 0
        %528 = vmatprep.subr.bf16.mxu0 0
        %529 = vmatpush1.bf16.msra.mxu0 0
        %530 = vmatprep.subr.bf16.mxu0 0
        %531 = vmatpush1.bf16.msra.mxu0 0
        %532 = vmatprep.mubr.bf16.mxu0 0
        %533 = vmatmul.mubr.bf16.gmra.mrb[0].mxu0 %v322
        %v534 = vpop.f32.mrb[0].mxu0
        %v535 = vadd.f32 %v360, %v534
        %v536 = vpop.f32.mrb[0].mxu0
        %v537 = vadd.f32 %v364, %v536
        %v538 = vpop.f32.mrb[0].mxu0
        %v539 = vpop.f32.mrb[0].mxu0
        %540 = vdwg.mxu0
        %541 = vmatprep.subr.bf16.mxu0 0
        %542 = vmatpush1.bf16.msra.mxu0 %v454
        %543 = vmatprep.subr.bf16.mxu0 0
        %544 = vmatpush1.bf16.msra.mxu0 %v457
        %545 = vmatprep.subr.bf16.mxu0 0
        %546 = vmatpush1.bf16.msra.mxu0 %v460
        %547 = vmatprep.subr.bf16.mxu0 0
        %548 = vmatpush1.bf16.msra.mxu0 %v463
        %549 = vmatprep.subr.bf16.mxu0 0
        %550 = vmatpush1.bf16.msra.mxu0 %v466
        %551 = vmatprep.subr.bf16.mxu0 0
        %552 = vmatpush1.bf16.msra.mxu0 %v469
        %553 = vmatprep.subr.bf16.mxu0 0
        %554 = vmatpush1.bf16.msra.mxu0 %v472
        %555 = vmatprep.subr.bf16.mxu0 0
        %556 = vmatpush1.bf16.msra.mxu0 %v475
        %557 = vmatprep.subr.bf16.mxu0 0
        %558 = vmatpush1.bf16.msra.mxu0 0
        %559 = vmatprep.subr.bf16.mxu0 0
        %560 = vmatpush1.bf16.msra.mxu0 0
        %561 = vmatprep.subr.bf16.mxu0 0
        %562 = vmatpush1.bf16.msra.mxu0 0
        %563 = vmatprep.subr.bf16.mxu0 0
        %564 = vmatpush1.bf16.msra.mxu0 0
        %565 = vmatprep.subr.bf16.mxu0 0
        %566 = vmatpush1.bf16.msra.mxu0 0
        %567 = vmatprep.subr.bf16.mxu0 0
        %568 = vmatpush1.bf16.msra.mxu0 0
        %569 = vmatprep.subr.bf16.mxu0 0
        %570 = vmatpush1.bf16.msra.mxu0 0
        %571 = vmatprep.subr.bf16.mxu0 0
        %572 = vmatpush1.bf16.msra.mxu0 0
        %573 = vmatprep.mubr.bf16.mxu0 0
        %574 = vmatmul.mubr.bf16.gmra.mrb[0].mxu0 %v322
        %v575 = vpop.f32.mrb[0].mxu0
        %v576 = vadd.f32 %v368, %v575
        %v577 = vpop.f32.mrb[0].mxu0
        %v578 = vpop.f32.mrb[0].mxu0
        %v579 = vpop.f32.mrb[0].mxu0
        %580 = vdwg.mxu0
        %v581 = vpack.c.bf16 %v535, %v535
        %v582 = vpack.c.bf16 %v537, %v537
        %v583 = vpack.c.bf16 %v576, %v576
        %vm584 = vcmask 261120
        %v586 = vsel %vm584, %v581, 0
        %v589 = vsel %vm584, %v582, 0
        %591 = vmatprep.subr.bf16.mxu0 0
        %592 = vmatpush1.bf16.xpose.msra.mxu0 %v589
        %593 = vmatprep.subr.bf16.mxu0 0
        %594 = vmatpush1.bf16.xpose.msra.mxu0 0
        %595 = vmatprep.subr.bf16.mxu0 0
        %596 = vmatpush1.bf16.xpose.msra.mxu0 0
        %597 = vmatprep.subr.bf16.mxu0 0
        %598 = vmatpush1.bf16.xpose.msra.mxu0 0
        %599 = vmatprep.subr.bf16.mxu0 0
        %600 = vmatpush1.bf16.xpose.msra.mxu0 0
        %601 = vmatprep.subr.bf16.mxu0 0
        %602 = vmatpush1.bf16.xpose.msra.mxu0 0
        %603 = vmatprep.subr.bf16.mxu0 0
        %604 = vmatpush1.bf16.xpose.msra.mxu0 0
        %605 = vmatprep.subr.bf16.mxu0 0
        %606 = vmatpush1.bf16.xpose.msra.mxu0 0
        %607 = vmatprep.subr.bf16.mxu0 0
        %608 = vmatpush1.bf16.xpose.msra.mxu0 0
        %609 = vmatprep.subr.bf16.mxu0 0
        %610 = vmatpush1.bf16.xpose.msra.mxu0 0
        %611 = vmatprep.subr.bf16.mxu0 0
        %612 = vmatpush1.bf16.xpose.msra.mxu0 0
        %613 = vmatprep.subr.bf16.mxu0 0
        %614 = vmatpush1.bf16.xpose.msra.mxu0 0
        %615 = vmatprep.subr.bf16.mxu0 0
        %616 = vmatpush1.bf16.xpose.msra.mxu0 0
        %617 = vmatprep.subr.bf16.mxu0 0
        %618 = vmatpush1.bf16.xpose.msra.mxu0 0
        %619 = vmatprep.subr.bf16.mxu0 0
        %620 = vmatpush1.bf16.xpose.msra.mxu0 0
        %621 = vmatprep.subr.bf16.mxu0 0
        %622 = vmatpush1.bf16.xpose.msra.mxu0 0
        %623 = vmatprep.mubr.bf16.mxu0 0
        %624 = vmatmul.mubr.bf16.gmra.mrb[0].mxu0 %v586
        %v625 = vpop.f32.mrb[0].mxu0
        %v626 = vadd.f32 0.0, %v625
        %v627 = vpop.f32.mrb[0].mxu0
        %v628 = vpop.f32.mrb[0].mxu0
        %v629 = vpop.f32.mrb[0].mxu0
        %630 = vdwg.mxu0
        %vm631 = vcmask 64512
        %v632 = vsel %vm631, %v626, -inf
        %633 = vmax.xlane.f32.xlu0 %v632
        %v634 = vpop.xlane.xlu0 %633
        %v635 = vsub.f32 %v626, %v634
        %v636 = vmul.f32 %v635, 1.442695
        %v637 = vpow.pop %v636
        %v638 = vsel %vm631, %v637, 0.0
        %639 = vadd.xlane.f32.xlu0 %v638
        %v640 = vpop.xlane.xlu0 %639
        %v641 = vrcp.pop %v640
        %v642 = vmul.f32 %v637, %v641
        %v643 = vpack.c.bf16 %v642, %v642
        %v645 = vsel %vm631, %v643, 0
        %vm647 = vcmask 1043456
        %v649 = vsel %vm647, %v583, 0
        %651 = vmatprep.subr.bf16.mxu0 0
        %652 = vmatpush1.bf16.msra.mxu0 %v649
        %653 = vmatprep.subr.bf16.mxu0 0
        %654 = vmatpush1.bf16.msra.mxu0 0
        %655 = vmatprep.subr.bf16.mxu0 0
        %656 = vmatpush1.bf16.msra.mxu0 0
        %657 = vmatprep.subr.bf16.mxu0 0
        %658 = vmatpush1.bf16.msra.mxu0 0
        %659 = vmatprep.subr.bf16.mxu0 0
        %660 = vmatpush1.bf16.msra.mxu0 0
        %661 = vmatprep.subr.bf16.mxu0 0
        %662 = vmatpush1.bf16.msra.mxu0 0
        %663 = vmatprep.subr.bf16.mxu0 0
        %664 = vmatpush1.bf16.msra.mxu0 0
        %665 = vmatprep.subr.bf16.mxu0 0
        %666 = vmatpush1.bf16.msra.mxu0 0
        %667 = vmatprep.subr.bf16.mxu0 0
        %668 = vmatpush1.bf16.msra.mxu0 0
        %669 = vmatprep.subr.bf16.mxu0 0
        %670 = vmatpush1.bf16.msra.mxu0 0
        %671 = vmatprep.subr.bf16.mxu0 0
        %672 = vmatpush1.bf16.msra.mxu0 0
        %673 = vmatprep.subr.bf16.mxu0 0
        %674 = vmatpush1.bf16.msra.mxu0 0
        %675 = vmatprep.subr.bf16.mxu0 0
        %676 = vmatpush1.bf16.msra.mxu0 0
        %677 = vmatprep.subr.bf16.mxu0 0
        %678 = vmatpush1.bf16.msra.mxu0 0
        %679 = vmatprep.subr.bf16.mxu0 0
        %680 = vmatpush1.bf16.msra.mxu0 0
        %681 = vmatprep.subr.bf16.mxu0 0
        %682 = vmatpush1.bf16.msra.mxu0 0
        %683 = vmatprep.mubr.bf16.mxu0 0
        %684 = vmatmul.mubr.bf16.gmra.mrb[0].mxu0 %v645
        %v685 = vpop.f32.mrb[0].mxu0
        %v686 = vadd.f32 0.0, %v685
        %v687 = vpop.f32.mrb[0].mxu0
        %v688 = vpop.f32.mrb[0].mxu0
        %v689 = vpop.f32.mrb[0].mxu0
        %690 = vdwg.mxu0
        %691 = vst.msk [vmem:[#allocation2] sm:$0xff] %vm584, %v686
        %693 = vrot.lane.b32.xlu0 %v581, 96
        %v694 = vpop.permute.xlu0 %693
        %696 = vrot.lane.b32.xlu0 %v582, 96
        %v697 = vpop.permute.xlu0 %696
        %v699 = vsel %vm584, %v694, 0
        %v702 = vsel %vm584, %v697, 0
        %704 = vmatprep.subr.bf16.mxu0 0
        %705 = vmatpush1.bf16.xpose.msra.mxu0 %v702
        %706 = vmatprep.subr.bf16.mxu0 0
        %707 = vmatpush1.bf16.xpose.msra.mxu0 0
        %708 = vmatprep.subr.bf16.mxu0 0
        %709 = vmatpush1.bf16.xpose.msra.mxu0 0
        %710 = vmatprep.subr.bf16.mxu0 0
        %711 = vmatpush1.bf16.xpose.msra.mxu0 0
        %712 = vmatprep.subr.bf16.mxu0 0
        %713 = vmatpush1.bf16.xpose.msra.mxu0 0
        %714 = vmatprep.subr.bf16.mxu0 0
        %715 = vmatpush1.bf16.xpose.msra.mxu0 0
        %716 = vmatprep.subr.bf16.mxu0 0
        %717 = vmatpush1.bf16.xpose.msra.mxu0 0
        %718 = vmatprep.subr.bf16.mxu0 0
        %719 = vmatpush1.bf16.xpose.msra.mxu0 0
        %720 = vmatprep.subr.bf16.mxu0 0
        %721 = vmatpush1.bf16.xpose.msra.mxu0 0
        %722 = vmatprep.subr.bf16.mxu0 0
        %723 = vmatpush1.bf16.xpose.msra.mxu0 0
        %724 = vmatprep.subr.bf16.mxu0 0
        %725 = vmatpush1.bf16.xpose.msra.mxu0 0
        %726 = vmatprep.subr.bf16.mxu0 0
        %727 = vmatpush1.bf16.xpose.msra.mxu0 0
        %728 = vmatprep.subr.bf16.mxu0 0
        %729 = vmatpush1.bf16.xpose.msra.mxu0 0
        %730 = vmatprep.subr.bf16.mxu0 0
        %731 = vmatpush1.bf16.xpose.msra.mxu0 0
        %732 = vmatprep.subr.bf16.mxu0 0
        %733 = vmatpush1.bf16.xpose.msra.mxu0 0
        %734 = vmatprep.subr.bf16.mxu0 0
        %735 = vmatpush1.bf16.xpose.msra.mxu0 0
        %736 = vmatprep.mubr.bf16.mxu0 0
        %737 = vmatmul.mubr.bf16.gmra.mrb[0].mxu0 %v699
        %v738 = vpop.f32.mrb[0].mxu0
        %v739 = vadd.f32 0.0, %v738
        %v740 = vpop.f32.mrb[0].mxu0
        %v741 = vpop.f32.mrb[0].mxu0
        %v742 = vpop.f32.mrb[0].mxu0
        %743 = vdwg.mxu0
        %v744 = vsel %vm631, %v739, -inf
        %745 = vmax.xlane.f32.xlu0 %v744
        %v746 = vpop.xlane.xlu0 %745
        %v747 = vsub.f32 %v739, %v746
        %v748 = vmul.f32 %v747, 1.442695
        %v749 = vpow.pop %v748
        %v750 = vsel %vm631, %v749, 0.0
        %751 = vadd.xlane.f32.xlu0 %v750
        %v752 = vpop.xlane.xlu0 %751
        %v753 = vrcp.pop %v752
        %v754 = vmul.f32 %v749, %v753
        %v755 = vpack.c.bf16 %v754, %v754
        %757 = vrot.lane.b32.xlu0 %v583, 96
        %v758 = vpop.permute.xlu0 %757
        %v760 = vsel %vm631, %v755, 0
        %v763 = vsel %vm647, %v758, 0
        %765 = vmatprep.subr.bf16.mxu0 0
        %766 = vmatpush1.bf16.msra.mxu0 %v763
        %767 = vmatprep.subr.bf16.mxu0 0
        %768 = vmatpush1.bf16.msra.mxu0 0
        %769 = vmatprep.subr.bf16.mxu0 0
        %770 = vmatpush1.bf16.msra.mxu0 0
        %771 = vmatprep.subr.bf16.mxu0 0
        %772 = vmatpush1.bf16.msra.mxu0 0
        %773 = vmatprep.subr.bf16.mxu0 0
        %774 = vmatpush1.bf16.msra.mxu0 0
        %775 = vmatprep.subr.bf16.mxu0 0
        %776 = vmatpush1.bf16.msra.mxu0 0
        %777 = vmatprep.subr.bf16.mxu0 0
        %778 = vmatpush1.bf16.msra.mxu0 0
        %779 = vmatprep.subr.bf16.mxu0 0
        %780 = vmatpush1.bf16.msra.mxu0 0
        %781 = vmatprep.subr.bf16.mxu0 0
        %782 = vmatpush1.bf16.msra.mxu0 0
        %783 = vmatprep.subr.bf16.mxu0 0
        %784 = vmatpush1.bf16.msra.mxu0 0
        %785 = vmatprep.subr.bf16.mxu0 0
        %786 = vmatpush1.bf16.msra.mxu0 0
        %787 = vmatprep.subr.bf16.mxu0 0
        %788 = vmatpush1.bf16.msra.mxu0 0
        %789 = vmatprep.subr.bf16.mxu0 0
        %790 = vmatpush1.bf16.msra.mxu0 0
        %791 = vmatprep.subr.bf16.mxu0 0
        %792 = vmatpush1.bf16.msra.mxu0 0
        %793 = vmatprep.subr.bf16.mxu0 0
        %794 = vmatpush1.bf16.msra.mxu0 0
        %795 = vmatprep.subr.bf16.mxu0 0
        %796 = vmatpush1.bf16.msra.mxu0 0
        %797 = vmatprep.mubr.bf16.mxu0 0
        %798 = vmatmul.mubr.bf16.gmra.mrb[0].mxu0 %v760
        %v799 = vpop.f32.mrb[0].mxu0
        %v800 = vadd.f32 0.0, %v799
        %v801 = vpop.f32.mrb[0].mxu0
        %v802 = vpop.f32.mrb[0].mxu0
        %v803 = vpop.f32.mrb[0].mxu0
        %804 = vdwg.mxu0
        %806 = vrot.lane.b32.xlu0 %v800, 32
        %v807 = vpop.permute.xlu0 %806
        %vm809 = vcmask 523520
        %810 = vst.msk [vmem:[#allocation2] sm:$0xff] %vm809, %v807
        %811 = vrot.lane.b32.xlu0 %v581, 64
        %v812 = vpop.permute.xlu0 %811
        %813 = vrot.lane.b32.xlu0 %v582, 64
        %v814 = vpop.permute.xlu0 %813
        %v816 = vsel %vm584, %v812, 0
        %v819 = vsel %vm584, %v814, 0
        %821 = vmatprep.subr.bf16.mxu0 0
        %822 = vmatpush1.bf16.xpose.msra.mxu0 %v819
        %823 = vmatprep.subr.bf16.mxu0 0
        %824 = vmatpush1.bf16.xpose.msra.mxu0 0
        %825 = vmatprep.subr.bf16.mxu0 0
        %826 = vmatpush1.bf16.xpose.msra.mxu0 0
        %827 = vmatprep.subr.bf16.mxu0 0
        %828 = vmatpush1.bf16.xpose.msra.mxu0 0
        %829 = vmatprep.subr.bf16.mxu0 0
        %830 = vmatpush1.bf16.xpose.msra.mxu0 0
        %831 = vmatprep.subr.bf16.mxu0 0
        %832 = vmatpush1.bf16.xpose.msra.mxu0 0
        %833 = vmatprep.subr.bf16.mxu0 0
        %834 = vmatpush1.bf16.xpose.msra.mxu0 0
        %835 = vmatprep.subr.bf16.mxu0 0
        %836 = vmatpush1.bf16.xpose.msra.mxu0 0
        %837 = vmatprep.subr.bf16.mxu0 0
        %838 = vmatpush1.bf16.xpose.msra.mxu0 0
        %839 = vmatprep.subr.bf16.mxu0 0
        %840 = vmatpush1.bf16.xpose.msra.mxu0 0
        %841 = vmatprep.subr.bf16.mxu0 0
        %842 = vmatpush1.bf16.xpose.msra.mxu0 0
        %843 = vmatprep.subr.bf16.mxu0 0
        %844 = vmatpush1.bf16.xpose.msra.mxu0 0
        %845 = vmatprep.subr.bf16.mxu0 0
        %846 = vmatpush1.bf16.xpose.msra.mxu0 0
        %847 = vmatprep.subr.bf16.mxu0 0
        %848 = vmatpush1.bf16.xpose.msra.mxu0 0
        %849 = vmatprep.subr.bf16.mxu0 0
        %850 = vmatpush1.bf16.xpose.msra.mxu0 0
        %851 = vmatprep.subr.bf16.mxu0 0
        %852 = vmatpush1.bf16.xpose.msra.mxu0 0
        %853 = vmatprep.mubr.bf16.mxu0 0
        %854 = vmatmul.mubr.bf16.gmra.mrb[0].mxu0 %v816
        %v855 = vpop.f32.mrb[0].mxu0
        %v856 = vadd.f32 0.0, %v855
        %v857 = vpop.f32.mrb[0].mxu0
        %v858 = vpop.f32.mrb[0].mxu0
        %v859 = vpop.f32.mrb[0].mxu0
        %860 = vdwg.mxu0
        %v861 = vsel %vm631, %v856, -inf
        %862 = vmax.xlane.f32.xlu0 %v861
        %v863 = vpop.xlane.xlu0 %862
        %v864 = vsub.f32 %v856, %v863
        %v865 = vmul.f32 %v864, 1.442695
        %v866 = vpow.pop %v865
        %v867 = vsel %vm631, %v866, 0.0
        %868 = vadd.xlane.f32.xlu0 %v867
        %v869 = vpop.xlane.xlu0 %868
        %v870 = vrcp.pop %v869
        %v871 = vmul.f32 %v866, %v870
        %v872 = vpack.c.bf16 %v871, %v871
        %873 = vrot.lane.b32.xlu0 %v583, 64
        %v874 = vpop.permute.xlu0 %873
        %v876 = vsel %vm631, %v872, 0
        %v879 = vsel %vm647, %v874, 0
        %881 = vmatprep.subr.bf16.mxu0 0
        %882 = vmatpush1.bf16.msra.mxu0 %v879
        %883 = vmatprep.subr.bf16.mxu0 0
        %884 = vmatpush1.bf16.msra.mxu0 0
        %885 = vmatprep.subr.bf16.mxu0 0
        %886 = vmatpush1.bf16.msra.mxu0 0
        %887 = vmatprep.subr.bf16.mxu0 0
        %888 = vmatpush1.bf16.msra.mxu0 0
        %889 = vmatprep.subr.bf16.mxu0 0
        %890 = vmatpush1.bf16.msra.mxu0 0
        %891 = vmatprep.subr.bf16.mxu0 0
        %892 = vmatpush1.bf16.msra.mxu0 0
        %893 = vmatprep.subr.bf16.mxu0 0
        %894 = vmatpush1.bf16.msra.mxu0 0
        %895 = vmatprep.subr.bf16.mxu0 0
        %896 = vmatpush1.bf16.msra.mxu0 0
        %897 = vmatprep.subr.bf16.mxu0 0
        %898 = vmatpush1.bf16.msra.mxu0 0
        %899 = vmatprep.subr.bf16.mxu0 0
        %900 = vmatpush1.bf16.msra.mxu0 0
        %901 = vmatprep.subr.bf16.mxu0 0
        %902 = vmatpush1.bf16.msra.mxu0 0
        %903 = vmatprep.subr.bf16.mxu0 0
        %904 = vmatpush1.bf16.msra.mxu0 0
        %905 = vmatprep.subr.bf16.mxu0 0
        %906 = vmatpush1.bf16.msra.mxu0 0
        %907 = vmatprep.subr.bf16.mxu0 0
        %908 = vmatpush1.bf16.msra.mxu0 0
        %909 = vmatprep.subr.bf16.mxu0 0
        %910 = vmatpush1.bf16.msra.mxu0 0
        %911 = vmatprep.subr.bf16.mxu0 0
        %912 = vmatpush1.bf16.msra.mxu0 0
        %913 = vmatprep.mubr.bf16.mxu0 0
        %914 = vmatmul.mubr.bf16.gmra.mrb[0].mxu0 %v876
        %v915 = vpop.f32.mrb[0].mxu0
        %v916 = vadd.f32 0.0, %v915
        %v917 = vpop.f32.mrb[0].mxu0
        %v918 = vpop.f32.mrb[0].mxu0
        %v919 = vpop.f32.mrb[0].mxu0
        %920 = vdwg.mxu0
        %922 = vrot.lane.b32.xlu0 %v916, 64
        %v923 = vpop.permute.xlu0 %922
        %vm925 = vcmask 785920
        %926 = vst.msk [vmem:[#allocation2] sm:$0xff] %vm925, %v923
        %927 = vrot.lane.b32.xlu0 %v581, 32
        %v928 = vpop.permute.xlu0 %927
        %929 = vrot.lane.b32.xlu0 %v582, 32
        %v930 = vpop.permute.xlu0 %929
        %v932 = vsel %vm584, %v928, 0
        %v935 = vsel %vm584, %v930, 0
        %937 = vmatprep.subr.bf16.mxu0 0
        %938 = vmatpush1.bf16.xpose.msra.mxu0 %v935
        %939 = vmatprep.subr.bf16.mxu0 0
        %940 = vmatpush1.bf16.xpose.msra.mxu0 0
        %941 = vmatprep.subr.bf16.mxu0 0
        %942 = vmatpush1.bf16.xpose.msra.mxu0 0
        %943 = vmatprep.subr.bf16.mxu0 0
        %944 = vmatpush1.bf16.xpose.msra.mxu0 0
        %945 = vmatprep.subr.bf16.mxu0 0
        %946 = vmatpush1.bf16.xpose.msra.mxu0 0
        %947 = vmatprep.subr.bf16.mxu0 0
        %948 = vmatpush1.bf16.xpose.msra.mxu0 0
        %949 = vmatprep.subr.bf16.mxu0 0
        %950 = vmatpush1.bf16.xpose.msra.mxu0 0
        %951 = vmatprep.subr.bf16.mxu0 0
        %952 = vmatpush1.bf16.xpose.msra.mxu0 0
        %953 = vmatprep.subr.bf16.mxu0 0
        %954 = vmatpush1.bf16.xpose.msra.mxu0 0
        %955 = vmatprep.subr.bf16.mxu0 0
        %956 = vmatpush1.bf16.xpose.msra.mxu0 0
        %957 = vmatprep.subr.bf16.mxu0 0
        %958 = vmatpush1.bf16.xpose.msra.mxu0 0
        %959 = vmatprep.subr.bf16.mxu0 0
        %960 = vmatpush1.bf16.xpose.msra.mxu0 0
        %961 = vmatprep.subr.bf16.mxu0 0
        %962 = vmatpush1.bf16.xpose.msra.mxu0 0
        %963 = vmatprep.subr.bf16.mxu0 0
        %964 = vmatpush1.bf16.xpose.msra.mxu0 0
        %965 = vmatprep.subr.bf16.mxu0 0
        %966 = vmatpush1.bf16.xpose.msra.mxu0 0
        %967 = vmatprep.subr.bf16.mxu0 0
        %968 = vmatpush1.bf16.xpose.msra.mxu0 0
        %969 = vmatprep.mubr.bf16.mxu0 0
        %970 = vmatmul.mubr.bf16.gmra.mrb[0].mxu0 %v932
        %v971 = vpop.f32.mrb[0].mxu0
        %v972 = vadd.f32 0.0, %v971
        %v973 = vpop.f32.mrb[0].mxu0
        %v974 = vpop.f32.mrb[0].mxu0
        %v975 = vpop.f32.mrb[0].mxu0
        %976 = vdwg.mxu0
        %v977 = vsel %vm631, %v972, -inf
        %978 = vmax.xlane.f32.xlu0 %v977
        %v979 = vpop.xlane.xlu0 %978
        %v980 = vsub.f32 %v972, %v979
        %v981 = vmul.f32 %v980, 1.442695
        %v982 = vpow.pop %v981
        %v983 = vsel %vm631, %v982, 0.0
        %984 = vadd.xlane.f32.xlu0 %v983
        %v985 = vpop.xlane.xlu0 %984
        %v986 = vrcp.pop %v985
        %v987 = vmul.f32 %v982, %v986
        %v988 = vpack.c.bf16 %v987, %v987
        %989 = vrot.lane.b32.xlu0 %v583, 32
        %v990 = vpop.permute.xlu0 %989
        %v992 = vsel %vm631, %v988, 0
        %v995 = vsel %vm647, %v990, 0
        %997 = vmatprep.subr.bf16.mxu0 0
        %998 = vmatpush1.bf16.msra.mxu0 %v995
        %999 = vmatprep.subr.bf16.mxu0 0
        %1000 = vmatpush1.bf16.msra.mxu0 0
        %1001 = vmatprep.subr.bf16.mxu0 0
        %1002 = vmatpush1.bf16.msra.mxu0 0
        %1003 = vmatprep.subr.bf16.mxu0 0
        %1004 = vmatpush1.bf16.msra.mxu0 0
        %1005 = vmatprep.subr.bf16.mxu0 0
        %1006 = vmatpush1.bf16.msra.mxu0 0
        %1007 = vmatprep.subr.bf16.mxu0 0
        %1008 = vmatpush1.bf16.msra.mxu0 0
        %1009 = vmatprep.subr.bf16.mxu0 0
        %1010 = vmatpush1.bf16.msra.mxu0 0
        %1011 = vmatprep.subr.bf16.mxu0 0
        %1012 = vmatpush1.bf16.msra.mxu0 0
        %1013 = vmatprep.subr.bf16.mxu0 0
        %1014 = vmatpush1.bf16.msra.mxu0 0
        %1015 = vmatprep.subr.bf16.mxu0 0
        %1016 = vmatpush1.bf16.msra.mxu0 0
        %1017 = vmatprep.subr.bf16.mxu0 0
        %1018 = vmatpush1.bf16.msra.mxu0 0
        %1019 = vmatprep.subr.bf16.mxu0 0
        %1020 = vmatpush1.bf16.msra.mxu0 0
        %1021 = vmatprep.subr.bf16.mxu0 0
        %1022 = vmatpush1.bf16.msra.mxu0 0
        %1023 = vmatprep.subr.bf16.mxu0 0
        %1024 = vmatpush1.bf16.msra.mxu0 0
        %1025 = vmatprep.subr.bf16.mxu0 0
        %1026 = vmatpush1.bf16.msra.mxu0 0
        %1027 = vmatprep.subr.bf16.mxu0 0
        %1028 = vmatpush1.bf16.msra.mxu0 0
        %1029 = vmatprep.mubr.bf16.mxu0 0
        %1030 = vmatmul.mubr.bf16.gmra.mrb[0].mxu0 %v992
        %v1031 = vpop.f32.mrb[0].mxu0
        %v1032 = vadd.f32 0.0, %v1031
        %v1033 = vpop.f32.mrb[0].mxu0
        %v1034 = vpop.f32.mrb[0].mxu0
        %v1035 = vpop.f32.mrb[0].mxu0
        %1036 = vdwg.mxu0
        %1038 = vrot.lane.b32.xlu0 %v1032, 96
        %v1039 = vpop.permute.xlu0 %1038
        %vm1041 = vcmask 1048320
        %1042 = vst.msk [vmem:[#allocation2] sm:$0xff] %vm1041, %v1039
        %v1043 = vld [vmem:[#allocation2] sm:$0xff]
        %v1044 = vpack.c.bf16 %v1043, %v1043
        %v1045 = vld [vmem:[%s4] sm:$0xf]
        %v1046 = vld [vmem:[%s4 + $0x4] sm:$0xf]
        %v1047 = vld [vmem:[%s4 + $0x8] sm:$0xf]
        %v1048 = vld [vmem:[%s4 + $0xc] sm:$0xf]
        %v1049 = vld [vmem:[%s4 + $0x10] sm:$0xf]
        %v1050 = vld [vmem:[%s4 + $0x14] sm:$0xf]
        %v1051 = vld [vmem:[%s4 + $0x18] sm:$0xf]
        %v1052 = vld [vmem:[%s4 + $0x1c] sm:$0xf]
        %v1053 = vld [vmem:[%s4 + $0x20] sm:$0xf]
        %v1054 = vld [vmem:[%s4 + $0x24] sm:$0xf]
        %v1055 = vld [vmem:[%s4 + $0x28] sm:$0xf]
        %v1056 = vld [vmem:[%s4 + $0x2c] sm:$0xf]
        %v1057 = vld [vmem:[%s4 + $0x30] sm:$0xf]
        %v1058 = vld [vmem:[%s4 + $0x34] sm:$0xf]
        %v1059 = vld [vmem:[%s4 + $0x38] sm:$0xf]
        %v1060 = vld [vmem:[%s4 + $0x3c] sm:$0xf]
        %v1061 = vld [vmem:[%s5] sm:$0x1]
        %v1063 = vlaneseq
        %v1064 = vshrl.u32 %v1063, 7
        %v1065 = vsub.s32 0, %v1064
        %v1066 = vrot.slane %v1061, %v1065
        %v1084 = vunpack.c.l.b16 %v1045
        %v1085 = vunpack.c.l.b16 %v1046
        %v1086 = vunpack.c.l.b16 %v1047
        %v1087 = vunpack.c.l.b16 %v1048
        %v1088 = vunpack.c.l.b16 %v1049
        %v1089 = vunpack.c.l.b16 %v1050
        %v1090 = vunpack.c.l.b16 %v1051
        %v1091 = vunpack.c.l.b16 %v1052
        %v1092 = vunpack.c.l.b16 %v1053
        %v1093 = vunpack.c.l.b16 %v1054
        %v1094 = vunpack.c.l.b16 %v1055
        %v1095 = vunpack.c.l.b16 %v1056
        %v1096 = vunpack.c.l.b16 %v1057
        %v1097 = vunpack.c.l.b16 %v1058
        %v1098 = vunpack.c.l.b16 %v1059
        %v1099 = vunpack.c.l.b16 %v1060
        %v1100 = vpack.c.b16 %v1085, %v1084
        %v1101 = vpack.c.b16 %v1087, %v1086
        %v1102 = vpack.c.b16 %v1089, %v1088
        %v1103 = vpack.c.b16 %v1091, %v1090
        %v1104 = vpack.c.b16 %v1093, %v1092
        %v1105 = vpack.c.b16 %v1095, %v1094
        %v1106 = vpack.c.b16 %v1097, %v1096
        %v1107 = vpack.c.b16 %v1099, %v1098
        %1116 = vmatprep.subr.bf16.mxu0 0
        %1117 = vmatpush1.bf16.msra.mxu0 %v1100
        %1118 = vmatprep.subr.bf16.mxu0 0
        %1119 = vmatpush1.bf16.msra.mxu0 %v1101
        %1120 = vmatprep.subr.bf16.mxu0 0
        %1121 = vmatpush1.bf16.msra.mxu0 %v1102
        %1122 = vmatprep.subr.bf16.mxu0 0
        %1123 = vmatpush1.bf16.msra.mxu0 %v1103
        %1124 = vmatprep.subr.bf16.mxu0 0
        %1125 = vmatpush1.bf16.msra.mxu0 %v1104
        %1126 = vmatprep.subr.bf16.mxu0 0
        %1127 = vmatpush1.bf16.msra.mxu0 %v1105
        %1128 = vmatprep.subr.bf16.mxu0 0
        %1129 = vmatpush1.bf16.msra.mxu0 %v1106
        %1130 = vmatprep.subr.bf16.mxu0 0
        %1131 = vmatpush1.bf16.msra.mxu0 %v1107
        %1132 = vmatprep.subr.bf16.mxu0 0
        %1133 = vmatpush1.bf16.msra.mxu0 0
        %1134 = vmatprep.subr.bf16.mxu0 0
        %1135 = vmatpush1.bf16.msra.mxu0 0
        %1136 = vmatprep.subr.bf16.mxu0 0
        %1137 = vmatpush1.bf16.msra.mxu0 0
        %1138 = vmatprep.subr.bf16.mxu0 0
        %1139 = vmatpush1.bf16.msra.mxu0 0
        %1140 = vmatprep.subr.bf16.mxu0 0
        %1141 = vmatpush1.bf16.msra.mxu0 0
        %1142 = vmatprep.subr.bf16.mxu0 0
        %1143 = vmatpush1.bf16.msra.mxu0 0
        %1144 = vmatprep.subr.bf16.mxu0 0
        %1145 = vmatpush1.bf16.msra.mxu0 0
        %1146 = vmatprep.subr.bf16.mxu0 0
        %1147 = vmatpush1.bf16.msra.mxu0 0
        %1148 = vmatprep.mubr.bf16.mxu0 0
        %1149 = vmatmul.mubr.bf16.gmra.mrb[0].mxu0 %v1044
        %v1150 = vpop.f32.mrb[0].mxu0
        %v1151 = vadd.f32 %v1066, %v1150
        %v1152 = vpop.f32.mrb[0].mxu0
        %v1153 = vpop.f32.mrb[0].mxu0
        %v1154 = vpop.f32.mrb[0].mxu0
        %1155 = vdwg.mxu0
        %v1156 = vadd.f32 %v1151, %v321
        %1157 = vadd.xlane.f32.xlu0 %v1156
        %v1158 = vpop.xlane.xlu0 %1157
        %v1159 = vmul.f32 %v1158, 0.03125
        %v1160 = vmul.f32 %v1156, %v1156
        %1161 = vadd.xlane.f32.xlu0 %v1160
        %v1162 = vpop.xlane.xlu0 %1161
        %v1163 = vmul.f32 %v1162, 0.03125
        %v1164 = vmul.f32 %v1159, %v1159
        %v1165 = vsub.f32 %v1163, %v1164
        %v1166 = vmax.f32 %v1165, 0.0
        %v1167 = vsub.f32 %v1156, %v1159
        %v1168 = vadd.f32 %v1166, 1e-05
        %v1169 = vrsqrt.pop %v1168
        %v1170 = vmul.f32 %v1167, %v1169
        %v1171 = vld [vmem:[%s6] sm:$0x1]
        %v1173 = vlaneseq
        %v1174 = vshrl.u32 %v1173, 7
        %v1175 = vsub.s32 0, %v1174
        %v1176 = vrot.slane %v1171, %v1175
        %v1178 = vmul.f32 %v1170, %v1176
        %v1179 = vld [vmem:[%s7] sm:$0x1]
        %v1181 = vlaneseq
        %v1182 = vshrl.u32 %v1181, 7
        %v1183 = vsub.s32 0, %v1182
        %v1184 = vrot.slane %v1179, %v1183
        %v1186 = vadd.f32 %v1178, %v1184
        %v1187 = vpack.c.bf16 %v1186, %v1186
        %1188 = vst [vmem:[%s315] sm:$0xf] %v1187
        %p1189 = scmp.lt.s32.totalorder %s20, 1
        %s1190 = scalar_select %p1189, %s20, 1
        %s1191 = smul.addr %s1190, 4
        %s1192 = scalar_lea.vmem %s8, %s1191
        // Predicated region
        $region57: #{transformer_forward.5} parent=51 // pred_check
          %p1193 = pneg %p211
        $region58: #{transformer_forward.5} parent=51 // pred_check_branch
          %1195 = sbr.rel (%p1193) target = $region60
        $region59: #{transformer_forward.5} parent=51 // pred_region
          _
        $region60: #{transformer_forward.5} parent=51 // pred_fallthru
          _
      $region52: #{transformer_forward.5} parent=5 // pred_fallthru
        _
      %p1196 = scmp.le.s32.totalorder 2, %s15
      // Predicated region
      $region61: #{transformer_forward.5} parent=5 // pred_check
        %p1197 = pneg %p1196
      $region62: #{transformer_forward.5} parent=5 // pred_check_branch
        %1199 = sbr.rel (%p1197) target = $region64
      $region63: #{transformer_forward.5} parent=5 // pred_region
        %s1200 = ssub.s32 %s15, 2
        // Predicated region
        $region65: #{transformer_forward.5} parent=63 // pred_check
          %p1201 = pneg %p217
        $region66: #{transformer_forward.5} parent=63 // pred_check_branch
          %1203 = sbr.rel (%p1201) target = $region68
        $region67: #{transformer_forward.5} parent=63 // pred_region
          %p1204 = scmp.lt.s32.totalorder %s21, 1
          %s1205 = scalar_select %p1204, %s21, 1
          %s1206 = smul.addr %s1205, 4
          %s1207 = scalar_lea.vmem %s8, %s1206
        $region68: #{transformer_forward.5} parent=63 // pred_fallthru
          _
      $region64: #{transformer_forward.5} parent=5 // pred_fallthru
        _
    $region6: #{transformer_forward.5} parent=1 // loop_footer
      %s19 = sadd.s32 1, %s15
    $region7: #{transformer_forward.5} parent=1 // loop_footer_branch
      %14 = sbr.rel target = $region3
    $region8: #{transformer_forward.5} parent=1 // loop_exit
      _
    %1208 = vsyncpa [#allocation4], 1
    %s1209 = scalar_lea.sflag [#allocation4], 1
    %1210 = vsyncpa %s1209, 1

</llo_original>
